<compile_context>
chip_gen: v7x
topology: tpu7x:2x2x1
jax: 0.10.0
libtpu: 0.0.40
codegen_flags: <defaults>
</compile_context>

<pallas_src>
import math
import functools

import jax
import jax.numpy as jnp
from jax import lax
from jax.experimental import pallas as pl
from jax.experimental.pallas import tpu as pltpu


# ----------------------------------------------------------------------------
# In-kernel helpers (VMEM/vreg-resident f32 math)
# ----------------------------------------------------------------------------

def _layernorm(x, w):
    # F.layer_norm(..., eps=1e-5), weight only (bias=False in the module)
    mu = jnp.mean(x, axis=-1, keepdims=True)
    xc = x - mu
    var = jnp.mean(xc * xc, axis=-1, keepdims=True)
    return (xc * lax.rsqrt(var + 1e-5)) * w


def _gelu(y):
    # exact erf GELU, matching nn.GELU() default
    return 0.5 * y * (1.0 + lax.erf(y * (1.0 / math.sqrt(2.0))))


def _mha(q, k, v, wo, n_head, bias):
    """Multi-head attention + folded output projection, all in VMEM.

    q: (Sq, D) f32, k/v: (Sk, D) f32, wo: (D, D) (bf16 weight), bias: None or (Sq, Sk)
    additive f32 mask. concat_h(o_h) @ Wo == sum_h o_h @ Wo[h*dh:(h+1)*dh].
    """
    Sq, D = q.shape
    assert D % n_head == 0
    dh = D // n_head
    scale = 1.0 / math.sqrt(dh)

    qb = q.astype(jnp.bfloat16)
    kb = k.astype(jnp.bfloat16)
    vb = v.astype(jnp.bfloat16)
    wo_f = wo.astype(jnp.float32)

    acc = jnp.zeros((Sq, D), jnp.float32)
    for h in range(n_head):                      # static unroll over heads
        sl = slice(h * dh, (h + 1) * dh)
        s = lax.dot_general(qb[:, sl], kb[:, sl], (((1,), (1,)), ((), ())),
                            preferred_element_type=jnp.float32) * scale
        if bias is not None:
            s = s + bias                         # precomputed additive causal mask
        m = jnp.max(s, axis=-1, keepdims=True)
        p = jnp.exp(s - m)
        p = p * pl.reciprocal(jnp.sum(p, axis=-1, keepdims=True), approx=True)
        oh = jnp.dot(p.astype(jnp.bfloat16), vb[:, sl],
                     preferred_element_type=jnp.float32)            # (Sq, dh)
        acc = acc + jnp.dot(oh, wo_f[sl, :], preferred_element_type=jnp.float32)
    return acc


# ----------------------------------------------------------------------------
# Fused encoder-stack kernel: embed + n_layer encoder layers + ln_f
# grid = (batch, layer); the output block (same index for every layer) is the
# VMEM-resident residual-stream carry.
# ----------------------------------------------------------------------------

def _encoder_stack_kernel(x_in_ref, wte_w_ref, wte_b_ref, pe_ref,
                          ln1_ref, wqkv_ref, wo_ref, ln2_ref, wfc_ref, wproj_ref,
                          lnf_ref, mem_ref, *, n_head, n_layer):
    l = pl.program_id(1)

    @pl.when(l == 0)
    def _():
        # token-embedding Linear (with bias) + positional encoding, fused
        xin = x_in_ref[...].astype(jnp.float32)                      # (S, n_in)
        emb = jnp.dot(xin, wte_w_ref[...], preferred_element_type=jnp.float32)
        mem_ref[...] = emb + wte_b_ref[...] + pe_ref[...]

    x = mem_ref[...]                                                 # (S, D) f32 carry
    D = x.shape[-1]

    # --- pre-LN self-attention (non-causal) ---
    h = _layernorm(x, ln1_ref[...])
    qkv = jnp.dot(h.astype(jnp.bfloat16), wqkv_ref[...],
                  preferred_element_type=jnp.float32)                # (S, 3D)
    x = x + _mha(qkv[:, :D], qkv[:, D:2 * D], qkv[:, 2 * D:],
                 wo_ref[...], n_head, None)

    # --- pre-LN MLP (fc -> GELU -> proj); the 4D hidden never leaves VMEM ---
    h = _layernorm(x, ln2_ref[...])
    hfc = _gelu(jnp.dot(h.astype(jnp.bfloat16), wfc_ref[...],
                        preferred_element_type=jnp.float32))
    x = x + jnp.dot(hfc.astype(jnp.bfloat16), wproj_ref[...],
                    preferred_element_type=jnp.float32)

    @pl.when(l == n_layer - 1)
    def _():
        mem_ref[...] = _layernorm(x, lnf_ref[...])                   # encoder ln_f

    @pl.when(l < n_layer - 1)
    def _():
        mem_ref[...] = x


# ----------------------------------------------------------------------------
# Fused decoder-stack kernel: embed + n_layer decoder layers + ln_f + lm_head
# grid = (batch, layer); the residual stream is carried in a VMEM scratch, the
# lane-dense padded logits are written only at the last layer.
# ----------------------------------------------------------------------------

def _decoder_stack_kernel(u_ref, wte_w_ref, wte_b_ref, pe_ref, mem_ref, cbias_ref,
                          ln1_ref, wqkv_s_ref, wo_s_ref,
                          ln2_ref, wq_c_ref, wkv_c_ref, wo_c_ref,
                          ln3_ref, wfc_ref, wproj_ref,
                          lnf_ref, head_w_ref, head_b_ref,
                          out_ref, x_scr, *, n_head, n_layer):
    l = pl.program_id(1)

    @pl.when(l == 0)
    def _():
        uin = u_ref[...].astype(jnp.float32)                         # (S_new, n_u)
        emb = jnp.dot(uin, wte_w_ref[...], preferred_element_type=jnp.float32)
        x_scr[...] = emb + wte_b_ref[...] + pe_ref[...]

    x = x_scr[...]                                                   # (S_new, D) f32
    mem = mem_ref[...]                                               # (S_ctx, D) f32
    D = x.shape[-1]

    # --- causal self-attention ---
    h = _layernorm(x, ln1_ref[...])
    qkv = jnp.dot(h.astype(jnp.bfloat16), wqkv_s_ref[...],
                  preferred_element_type=jnp.float32)
    x = x + _mha(qkv[:, :D], qkv[:, D:2 * D], qkv[:, 2 * D:],
                 wo_s_ref[...], n_head, cbias_ref[...])

    # --- cross-attention over encoder memory (non-causal) ---
    h = _layernorm(x, ln2_ref[...])
    q = jnp.dot(h.astype(jnp.bfloat16), wq_c_ref[...],
                preferred_element_type=jnp.float32)                  # (S_new, D)
    kv = jnp.dot(mem.astype(jnp.bfloat16), wkv_c_ref[...],
                 preferred_element_type=jnp.float32)                 # (S_ctx, 2D)
    x = x + _mha(q, kv[:, :D], kv[:, D:], wo_c_ref[...], n_head, None)

    # --- MLP ---
    h = _layernorm(x, ln3_ref[...])
    hfc = _gelu(jnp.dot(h.astype(jnp.bfloat16), wfc_ref[...],
                        preferred_element_type=jnp.float32))
    x = x + jnp.dot(hfc.astype(jnp.bfloat16), wproj_ref[...],
                    preferred_element_type=jnp.float32)

    x_scr[...] = x

    @pl.when(l == n_layer - 1)
    def _():
        # decoder ln_f + lm_head (bias=True), fused; lane-dense (padded) output
        hf = _layernorm(x, lnf_ref[...])
        out_ref[...] = (jnp.dot(hf, head_w_ref[...],
                                preferred_element_type=jnp.float32)
                        + head_b_ref[...]).astype(out_ref.dtype)


# ----------------------------------------------------------------------------
# pallas_call wrappers
# ----------------------------------------------------------------------------

_SEM = pltpu.CompilerParams(dimension_semantics=("parallel", "arbitrary"))


def _nbytes(*arrs):
    return int(sum(int(a.size) * a.dtype.itemsize for a in arrs))


def encoder_stack(x_in, wte_w, wte_b, pe, stk, lnf_w, *, n_head):
    B, S, n_in = x_in.shape
    L = stk["ln1"].shape[0]
    D = stk["ln1"].shape[-1]
    kern = functools.partial(_encoder_stack_kernel, n_head=n_head, n_layer=L)

    w_bytes = _nbytes(stk["ln1"], stk["wqkv"], stk["wo"], stk["ln2"],
                      stk["w_fc"], stk["w_proj"])
    cost = pl.CostEstimate(
        flops=int(2 * B * L * S * D * 12 * D + 4 * B * L * S * S * D),
        transcendentals=int(B * L * S * (n_head * S + 4 * D)),
        bytes_accessed=int(_nbytes(x_in, wte_w, wte_b, pe, lnf_w)
                           + B * w_bytes + B * S * D * 4),
    )

    return pl.pallas_call(
        kern,
        out_shape=jax.ShapeDtypeStruct((B, S, D), jnp.float32),
        grid=(B, L),
        in_specs=[
            pl.BlockSpec((None, S, n_in), lambda b, l: (b, 0, 0)),
            pl.BlockSpec((n_in, D), lambda b, l: (0, 0)),
            pl.BlockSpec((1, D), lambda b, l: (0, 0)),
            pl.BlockSpec((S, D), lambda b, l: (0, 0)),
            pl.BlockSpec((None, 1, D), lambda b, l: (l, 0, 0)),
            pl.BlockSpec((None, D, 3 * D), lambda b, l: (l, 0, 0)),
            pl.BlockSpec((None, D, D), lambda b, l: (l, 0, 0)),
            pl.BlockSpec((None, 1, D), lambda b, l: (l, 0, 0)),
            pl.BlockSpec((None, D, 4 * D), lambda b, l: (l, 0, 0)),
            pl.BlockSpec((None, 4 * D, D), lambda b, l: (l, 0, 0)),
            pl.BlockSpec((1, D), lambda b, l: (0, 0)),
        ],
        out_specs=pl.BlockSpec((None, S, D), lambda b, l: (b, 0, 0)),
        compiler_params=_SEM,
        cost_estimate=cost,
    )(x_in, wte_w, wte_b, pe, stk["ln1"], stk["wqkv"], stk["wo"],
      stk["ln2"], stk["w_fc"], stk["w_proj"], lnf_w)


def decoder_stack(u_new, wte_w, wte_b, pe, mem, cbias, stk, lnf_w,
                  head_w, head_b, *, n_head):
    B, S, n_u = u_new.shape
    S_ctx = mem.shape[1]
    L = stk["ln1"].shape[0]
    D = stk["ln1"].shape[-1]
    P = head_w.shape[1]                                   # padded (lane-dense) n_y
    kern = functools.partial(_decoder_stack_kernel, n_head=n_head, n_layer=L)

    w_bytes = _nbytes(stk["ln1"], stk["wqkv_self"], stk["wo_self"], stk["ln2"],
                      stk["wq_cross"], stk["wkv_cross"], stk["wo_cross"],
                      stk["ln3"], stk["w_fc"], stk["w_proj"])
    cost = pl.CostEstimate(
        flops=int(2 * B * L * D * (S * 14 * D + S_ctx * 2 * D)
                  + 4 * B * L * D * S * (S + S_ctx) + 2 * B * S * D * P),
        transcendentals=int(B * L * S * (n_head * (S + S_ctx) + 4 * D)),
        bytes_accessed=int(_nbytes(u_new, wte_w, wte_b, pe, mem, cbias,
                                   lnf_w, head_w, head_b)
                           + B * w_bytes + B * S * P * 4),
    )

    return pl.pallas_call(
        kern,
        out_shape=jax.ShapeDtypeStruct((B, S, P), jnp.float32),
        grid=(B, L),
        in_specs=[
            pl.BlockSpec((None, S, n_u), lambda b, l: (b, 0, 0)),
            pl.BlockSpec((n_u, D), lambda b, l: (0, 0)),
            pl.BlockSpec((1, D), lambda b, l: (0, 0)),
            pl.BlockSpec((S, D), lambda b, l: (0, 0)),
            pl.BlockSpec((None, S_ctx, D), lambda b, l: (b, 0, 0)),
            pl.BlockSpec((S, S), lambda b, l: (0, 0)),
            pl.BlockSpec((None, 1, D), lambda b, l: (l, 0, 0)),
            pl.BlockSpec((None, D, 3 * D), lambda b, l: (l, 0, 0)),
            pl.BlockSpec((None, D, D), lambda b, l: (l, 0, 0)),
            pl.BlockSpec((None, 1, D), lambda b, l: (l, 0, 0)),
            pl.BlockSpec((None, D, D), lambda b, l: (l, 0, 0)),
            pl.BlockSpec((None, D, 2 * D), lambda b, l: (l, 0, 0)),
            pl.BlockSpec((None, D, D), lambda b, l: (l, 0, 0)),
            pl.BlockSpec((None, 1, D), lambda b, l: (l, 0, 0)),
            pl.BlockSpec((None, D, 4 * D), lambda b, l: (l, 0, 0)),
            pl.BlockSpec((None, 4 * D, D), lambda b, l: (l, 0, 0)),
            pl.BlockSpec((1, D), lambda b, l: (0, 0)),
            pl.BlockSpec((D, P), lambda b, l: (0, 0)),
            pl.BlockSpec((1, P), lambda b, l: (0, 0)),
        ],
        out_specs=pl.BlockSpec((None, S, P), lambda b, l: (b, 0, 0)),
        scratch_shapes=[pltpu.VMEM((S, D), jnp.float32)],
        compiler_params=_SEM,
        cost_estimate=cost,
    )(u_new, wte_w, wte_b, pe, mem, cbias,
      stk["ln1"], stk["wqkv_self"], stk["wo_self"],
      stk["ln2"], stk["wq_cross"], stk["wkv_cross"], stk["wo_cross"],
      stk["ln3"], stk["w_fc"], stk["w_proj"],
      lnf_w, head_w, head_b)


# ----------------------------------------------------------------------------
# Forward pass (plain-JAX glue: input concat + causal-bias build + final slice)
# ----------------------------------------------------------------------------

def ts_transformer_forward(params, y, u, u_new, *, n_head, n_y):
    S_ctx = y.shape[1]
    S_new = u_new.shape[1]
    pe = params["pe"]

    yu = jnp.concatenate((y, u), axis=-1)
    mem = encoder_stack(yu, params["encoder_wte"]["w"], params["encoder_wte"]["b"],
                        pe[:S_ctx], params["encoder"]["stacked"],
                        params["encoder"]["ln_f"], n_head=n_head)

    causal_bias = jnp.where(jnp.tril(jnp.ones((S_new, S_new), dtype=bool)),
                            jnp.float32(0.0), jnp.float32(-1e30))

    logits_padded = decoder_stack(u_new, params["decoder_wte"]["w"],
                                  params["decoder_wte"]["b"], pe[:S_new],
                                  mem, causal_bias,
                                  params["decoder"]["stacked"],
                                  params["decoder"]["ln_f"],
                                  params["lm_head"]["w"], params["lm_head"]["b"],
                                  n_head=n_head)
    return logits_padded[..., :n_y]


# ----------------------------------------------------------------------------
# Deterministic parameter init (synthetic weights; weights stored as (in, out)
# == W.T of PyTorch, per-layer weights stacked along a leading layer axis,
# big matmul weights in bf16, lm_head padded to a lane-dense output width)
# ----------------------------------------------------------------------------

def make_pe(max_len, d_model):
    position = jnp.arange(max_len, dtype=jnp.float32)[:, None]
    div_term = jnp.exp(
        jnp.arange(0, d_model, 2, dtype=jnp.float32) * (-math.log(10000.0) / d_model))
    pe = jnp.zeros((max_len, d_model), jnp.float32)
    pe = pe.at[:, 0::2].set(jnp.sin(position * div_term))
    pe = pe.at[:, 1::2].set(jnp.cos(position * div_term))
    return pe


def init_params(key, n_u, n_y, n_embd, n_layer, n_head, max_len=5000):
    assert n_embd % n_head == 0
    D = n_embd
    bf = jnp.bfloat16
    keys = iter(jax.random.split(key, 1024))

    def w(shape, scale=0.02, dtype=jnp.float32):
        return (scale * jax.random.normal(next(keys), shape, jnp.float32)).astype(dtype)

    def enc_layer():
        return dict(ln1=jnp.ones((1, D), jnp.float32),
                    wqkv=w((D, 3 * D), dtype=bf), wo=w((D, D), dtype=bf),
                    ln2=jnp.ones((1, D), jnp.float32),
                    w_fc=w((D, 4 * D), dtype=bf), w_proj=w((4 * D, D), dtype=bf))

    def dec_layer():
        return dict(ln1=jnp.ones((1, D), jnp.float32),
                    wqkv_self=w((D, 3 * D), dtype=bf), wo_self=w((D, D), dtype=bf),
                    ln2=jnp.ones((1, D), jnp.float32),
                    wq_cross=w((D, D), dtype=bf), wkv_cross=w((D, 2 * D), dtype=bf),
                    wo_cross=w((D, D), dtype=bf),
                    ln3=jnp.ones((1, D), jnp.float32),
                    w_fc=w((D, 4 * D), dtype=bf), w_proj=w((4 * D, D), dtype=bf))

    def stack(layer_fn):
        layers = [layer_fn() for _ in range(n_layer)]
        return jax.tree_util.tree_map(lambda *xs: jnp.stack(xs, axis=0), *layers)

    # lm_head padded to a lane-dense width (multiple of 128); extra columns are zero
    P = ((n_y + 127) // 128) * 128
    head_w = jnp.zeros((D, P), jnp.float32).at[:, :n_y].set(w((D, n_y)))
    head_b = jnp.zeros((1, P), jnp.float32).at[0, :n_y].set(w((n_y,)))

    return dict(
        encoder=dict(stacked=stack(enc_layer), ln_f=jnp.ones((1, D), jnp.float32)),
        decoder=dict(stacked=stack(dec_layer), ln_f=jnp.ones((1, D), jnp.float32)),
        encoder_wte=dict(w=w((n_u + n_y, D)), b=w((D,)).reshape(1, D)),
        decoder_wte=dict(w=w((n_u, D)), b=w((D,)).reshape(1, D)),
        lm_head=dict(w=head_w, b=head_b),
        pe=make_pe(max_len, D),
    )


# ----------------------------------------------------------------------------
# Main
# ----------------------------------------------------------------------------

if __name__ == "__main__":
    # config: n_embd=32, n_head=4, n_layer=2, dropout=0.0, bias=False, n_u=2, n_y=3
    B, S_ctx, S_new = 2, 8, 8
    n_u, n_y, n_embd, n_head, n_layer = 2, 3, 32, 4, 2

    params = init_params(jax.random.PRNGKey(0), n_u, n_y, n_embd, n_layer, n_head)

    ky, ku, kun = jax.random.split(jax.random.PRNGKey(0), 3)
    y = jax.random.normal(ky, (B, S_ctx, n_y), jnp.float32)
    u = jax.random.normal(ku, (B, S_ctx, n_u), jnp.float32)
    u_new = jax.random.normal(kun, (B, S_new, n_u), jnp.float32)

    forward = jax.jit(functools.partial(ts_transformer_forward, n_head=n_head, n_y=n_y))
    out = forward(params, y, u, u_new)
    out = jax.block_until_ready(out)

    assert out.shape == (B, S_new, n_y)
    assert bool(jnp.all(jnp.isfinite(out)))
    print("KERNEL_OK")
</pallas_src>

<mosaic_0001>
module attributes {stable_mosaic.version = 11 : i64} {
  func.func @_encoder_stack_kernel(%arg0: i32, %arg1: i32, %arg2: memref<1x8x5xf32, #tpu.memory_space<vmem>>, %arg3: memref<5x32xf32, #tpu.memory_space<vmem>>, %arg4: memref<1x32xf32, #tpu.memory_space<vmem>>, %arg5: memref<8x32xf32, #tpu.memory_space<vmem>>, %arg6: memref<1x1x32xf32, #tpu.memory_space<vmem>>, %arg7: memref<1x32x96xbf16, #tpu.memory_space<vmem>>, %arg8: memref<1x32x32xbf16, #tpu.memory_space<vmem>>, %arg9: memref<1x1x32xf32, #tpu.memory_space<vmem>>, %arg10: memref<1x32x128xbf16, #tpu.memory_space<vmem>>, %arg11: memref<1x128x32xbf16, #tpu.memory_space<vmem>>, %arg12: memref<1x32xf32, #tpu.memory_space<vmem>>, %arg13: memref<1x8x32xf32, #tpu.memory_space<vmem>>) attributes {dimension_semantics = [#tpu.dimension_semantics<parallel>, #tpu.dimension_semantics<arbitrary>], iteration_bounds = array<i64: 2, 2>, scalar_prefetch = 0 : i64, scratch_operands = 0 : i64, tpu.core_type = #tpu.core_type<tc>, window_params = [{transform_indices = @transform_0, window_bounds = array<i64: 1, 8, 5>}, {pipeline_mode = #tpu.pipeline_mode<synchronous>, transform_indices = @transform_1, window_bounds = array<i64: 5, 32>}, {pipeline_mode = #tpu.pipeline_mode<synchronous>, transform_indices = @transform_2, window_bounds = array<i64: 1, 32>}, {pipeline_mode = #tpu.pipeline_mode<synchronous>, transform_indices = @transform_3, window_bounds = array<i64: 8, 32>}, {transform_indices = @transform_4, window_bounds = array<i64: 1, 1, 32>}, {transform_indices = @transform_5, window_bounds = array<i64: 1, 32, 96>}, {transform_indices = @transform_6, window_bounds = array<i64: 1, 32, 32>}, {transform_indices = @transform_7, window_bounds = array<i64: 1, 1, 32>}, {transform_indices = @transform_8, window_bounds = array<i64: 1, 32, 128>}, {transform_indices = @transform_9, window_bounds = array<i64: 1, 128, 32>}, {pipeline_mode = #tpu.pipeline_mode<synchronous>, transform_indices = @transform_10, window_bounds = array<i64: 1, 32>}, {transform_indices = @transform_11, window_bounds = array<i64: 1, 8, 32>}]} {
    %c0_i32 = arith.constant 0 : i32
    %0 = arith.cmpi eq, %arg1, %c0_i32 : i32
    %1 = arith.extui %0 : i1 to i32
    %c0_i32_0 = arith.constant 0 : i32
    %2 = arith.cmpi ne, %1, %c0_i32_0 : i32
    scf.if %2 {
      %c0_64 = arith.constant 0 : index
      %c0_65 = arith.constant 0 : index
      %c0_66 = arith.constant 0 : index
      %167 = vector.load %arg2[%c0_64, %c0_65, %c0_66] : memref<1x8x5xf32, #tpu.memory_space<vmem>>, vector<1x8x5xf32>
      %168 = vector.shape_cast %167 : vector<1x8x5xf32> to vector<8x5xf32>
      %c0_67 = arith.constant 0 : index
      %c0_68 = arith.constant 0 : index
      %169 = vector.load %arg3[%c0_67, %c0_68] : memref<5x32xf32, #tpu.memory_space<vmem>>, vector<5x32xf32>
      %cst_69 = arith.constant dense<0.000000e+00> : vector<8x32xf32>
      %170 = tpu.matmul %168, %169, %cst_69 {dimension_numbers = #tpu.dot_dimension_numbers<[1], [0], [0], [1], [0, 0, 1, 1], [], []>} : vector<8x5xf32>, vector<5x32xf32>, vector<8x32xf32> -> vector<8x32xf32>
      %c0_70 = arith.constant 0 : index
      %c0_71 = arith.constant 0 : index
      %171 = vector.load %arg4[%c0_70, %c0_71] : memref<1x32xf32, #tpu.memory_space<vmem>>, vector<1x32xf32>
      %172 = vector.broadcast %171 : vector<1x32xf32> to vector<8x32xf32>
      %173 = arith.addf %170, %172 : vector<8x32xf32>
      %c0_72 = arith.constant 0 : index
      %c0_73 = arith.constant 0 : index
      %174 = vector.load %arg5[%c0_72, %c0_73] : memref<8x32xf32, #tpu.memory_space<vmem>>, vector<8x32xf32>
      %175 = arith.addf %173, %174 : vector<8x32xf32>
      %c0_74 = arith.constant 0 : index
      %c0_75 = arith.constant 0 : index
      %c0_76 = arith.constant 0 : index
      %176 = vector.load %arg13[%c0_74, %c0_75, %c0_76] : memref<1x8x32xf32, #tpu.memory_space<vmem>>, vector<1x8x32xf32>
      %177 = vector.shape_cast %176 : vector<1x8x32xf32> to vector<8x32xf32>
      %178 = vector.shape_cast %175 : vector<8x32xf32> to vector<1x8x32xf32>
      tpu.vector_store %arg13[%c0_74, %c0_75, %c0_76], %178 {strides = array<i32>} : memref<1x8x32xf32, #tpu.memory_space<vmem>>, vector<1x8x32xf32>,
    } else {
    }
    %c0 = arith.constant 0 : index
    %c0_1 = arith.constant 0 : index
    %c0_2 = arith.constant 0 : index
    %3 = vector.load %arg13[%c0, %c0_1, %c0_2] : memref<1x8x32xf32, #tpu.memory_space<vmem>>, vector<1x8x32xf32>
    %4 = vector.shape_cast %3 : vector<1x8x32xf32> to vector<8x32xf32>
    %c0_3 = arith.constant 0 : index
    %c0_4 = arith.constant 0 : index
    %c0_5 = arith.constant 0 : index
    %5 = vector.load %arg6[%c0_3, %c0_4, %c0_5] : memref<1x1x32xf32, #tpu.memory_space<vmem>>, vector<1x1x32xf32>
    %6 = vector.shape_cast %5 : vector<1x1x32xf32> to vector<1x32xf32>
    %cst = arith.constant dense<0.000000e+00> : vector<8xf32>
    %7 = vector.multi_reduction <add>, %4, %cst [1] : vector<8x32xf32> to vector<8xf32>
    %8 = vector.shape_cast %7 : vector<8xf32> to vector<8x1xf32>
    %cst_6 = arith.constant 3.200000e+01 : f32
    %9 = vector.broadcast %cst_6 : f32 to vector<8x1xf32>
    %10 = arith.divf %8, %9 : vector<8x1xf32>
    %11 = vector.broadcast %10 : vector<8x1xf32> to vector<8x32xf32>
    %12 = arith.subf %4, %11 : vector<8x32xf32>
    %13 = arith.mulf %12, %12 : vector<8x32xf32>
    %cst_7 = arith.constant dense<0.000000e+00> : vector<8xf32>
    %14 = vector.multi_reduction <add>, %13, %cst_7 [1] : vector<8x32xf32> to vector<8xf32>
    %15 = vector.shape_cast %14 : vector<8xf32> to vector<8x1xf32>
    %cst_8 = arith.constant 3.200000e+01 : f32
    %16 = vector.broadcast %cst_8 : f32 to vector<8x1xf32>
    %17 = arith.divf %15, %16 : vector<8x1xf32>
    %cst_9 = arith.constant 9.99999974E-6 : f32
    %18 = vector.broadcast %cst_9 : f32 to vector<8x1xf32>
    %19 = arith.addf %17, %18 : vector<8x1xf32>
    %20 = math.rsqrt %19 : vector<8x1xf32>
    %21 = vector.broadcast %20 : vector<8x1xf32> to vector<8x32xf32>
    %22 = arith.mulf %12, %21 : vector<8x32xf32>
    %23 = vector.broadcast %6 : vector<1x32xf32> to vector<8x32xf32>
    %24 = arith.mulf %22, %23 : vector<8x32xf32>
    %25 = arith.truncf %24 : vector<8x32xf32> to vector<8x32xbf16>
    %c0_10 = arith.constant 0 : index
    %c0_11 = arith.constant 0 : index
    %c0_12 = arith.constant 0 : index
    %26 = vector.load %arg7[%c0_10, %c0_11, %c0_12] : memref<1x32x96xbf16, #tpu.memory_space<vmem>>, vector<1x32x96xbf16>
    %27 = vector.shape_cast %26 : vector<1x32x96xbf16> to vector<32x96xbf16>
    %cst_13 = arith.constant dense<0.000000e+00> : vector<8x96xf32>
    %28 = tpu.matmul %25, %27, %cst_13 {dimension_numbers = #tpu.dot_dimension_numbers<[1], [0], [0], [1], [0, 0, 1, 1], [], []>} : vector<8x32xbf16>, vector<32x96xbf16>, vector<8x96xf32> -> vector<8x96xf32>
    %29 = vector.extract_strided_slice %28 {offsets = [0, 0], sizes = [8, 32], strides = [1, 1]} : vector<8x96xf32> to vector<8x32xf32>
    %30 = vector.extract_strided_slice %28 {offsets = [0, 32], sizes = [8, 32], strides = [1, 1]} : vector<8x96xf32> to vector<8x32xf32>
    %31 = vector.extract_strided_slice %28 {offsets = [0, 64], sizes = [8, 32], strides = [1, 1]} : vector<8x96xf32> to vector<8x32xf32>
    %c0_14 = arith.constant 0 : index
    %c0_15 = arith.constant 0 : index
    %c0_16 = arith.constant 0 : index
    %32 = vector.load %arg8[%c0_14, %c0_15, %c0_16] : memref<1x32x32xbf16, #tpu.memory_space<vmem>>, vector<1x32x32xbf16>
    %33 = vector.shape_cast %32 : vector<1x32x32xbf16> to vector<32x32xbf16>
    %34 = arith.truncf %29 : vector<8x32xf32> to vector<8x32xbf16>
    %35 = arith.truncf %30 : vector<8x32xf32> to vector<8x32xbf16>
    %36 = arith.truncf %31 : vector<8x32xf32> to vector<8x32xbf16>
    %37 = arith.extf %33 : vector<32x32xbf16> to vector<32x32xf32>
    %cst_17 = arith.constant 0.000000e+00 : f32
    %38 = vector.broadcast %cst_17 : f32 to vector<8x32xf32>
    %39 = vector.extract_strided_slice %34 {offsets = [0, 0], sizes = [8, 8], strides = [1, 1]} : vector<8x32xbf16> to vector<8x8xbf16>
    %40 = vector.extract_strided_slice %35 {offsets = [0, 0], sizes = [8, 8], strides = [1, 1]} : vector<8x32xbf16> to vector<8x8xbf16>
    %cst_18 = arith.constant dense<0.000000e+00> : vector<8x8xf32>
    %41 = tpu.matmul %39, %40, %cst_18 {dimension_numbers = #tpu.dot_dimension_numbers<[1], [1], [0], [0], [0, 0, 1, 0], [], []>} : vector<8x8xbf16>, vector<8x8xbf16>, vector<8x8xf32> -> vector<8x8xf32>
    %cst_19 = arith.constant 0.353553385 : f32
    %42 = vector.broadcast %cst_19 : f32 to vector<8x8xf32>
    %43 = arith.mulf %41, %42 : vector<8x8xf32>
    %cst_20 = arith.constant dense<0xFF800000> : vector<8xf32>
    %44 = vector.multi_reduction <maximumf>, %43, %cst_20 [1] : vector<8x8xf32> to vector<8xf32>
    %45 = vector.shape_cast %44 : vector<8xf32> to vector<8x1xf32>
    %46 = vector.broadcast %45 : vector<8x1xf32> to vector<8x8xf32>
    %47 = arith.subf %43, %46 : vector<8x8xf32>
    %48 = math.exp %47 : vector<8x8xf32>
    %cst_21 = arith.constant dense<0.000000e+00> : vector<8xf32>
    %49 = vector.multi_reduction <add>, %48, %cst_21 [1] : vector<8x8xf32> to vector<8xf32>
    %50 = vector.shape_cast %49 : vector<8xf32> to vector<8x1xf32>
    %51 = tpu.reciprocal %50 {approx = true} : vector<8x1xf32> -> vector<8x1xf32>
    %52 = vector.broadcast %51 : vector<8x1xf32> to vector<8x8xf32>
    %53 = arith.mulf %48, %52 : vector<8x8xf32>
    %54 = arith.truncf %53 : vector<8x8xf32> to vector<8x8xbf16>
    %55 = vector.extract_strided_slice %36 {offsets = [0, 0], sizes = [8, 8], strides = [1, 1]} : vector<8x32xbf16> to vector<8x8xbf16>
    %cst_22 = arith.constant dense<0.000000e+00> : vector<8x8xf32>
    %56 = tpu.matmul %54, %55, %cst_22 {dimension_numbers = #tpu.dot_dimension_numbers<[1], [0], [0], [1], [0, 0, 1, 1], [], []>} : vector<8x8xbf16>, vector<8x8xbf16>, vector<8x8xf32> -> vector<8x8xf32>
    %57 = vector.extract_strided_slice %37 {offsets = [0, 0], sizes = [8, 32], strides = [1, 1]} : vector<32x32xf32> to vector<8x32xf32>
    %cst_23 = arith.constant dense<0.000000e+00> : vector<8x32xf32>
    %58 = tpu.matmul %56, %57, %cst_23 {dimension_numbers = #tpu.dot_dimension_numbers<[1], [0], [0], [1], [0, 0, 1, 1], [], []>} : vector<8x8xf32>, vector<8x32xf32>, vector<8x32xf32> -> vector<8x32xf32>
    %59 = arith.addf %38, %58 : vector<8x32xf32>
    %60 = vector.extract_strided_slice %34 {offsets = [0, 8], sizes = [8, 8], strides = [1, 1]} : vector<8x32xbf16> to vector<8x8xbf16>
    %61 = vector.extract_strided_slice %35 {offsets = [0, 8], sizes = [8, 8], strides = [1, 1]} : vector<8x32xbf16> to vector<8x8xbf16>
    %cst_24 = arith.constant dense<0.000000e+00> : vector<8x8xf32>
    %62 = tpu.matmul %60, %61, %cst_24 {dimension_numbers = #tpu.dot_dimension_numbers<[1], [1], [0], [0], [0, 0, 1, 0], [], []>} : vector<8x8xbf16>, vector<8x8xbf16>, vector<8x8xf32> -> vector<8x8xf32>
    %cst_25 = arith.constant 0.353553385 : f32
    %63 = vector.broadcast %cst_25 : f32 to vector<8x8xf32>
    %64 = arith.mulf %62, %63 : vector<8x8xf32>
    %cst_26 = arith.constant dense<0xFF800000> : vector<8xf32>
    %65 = vector.multi_reduction <maximumf>, %64, %cst_26 [1] : vector<8x8xf32> to vector<8xf32>
    %66 = vector.shape_cast %65 : vector<8xf32> to vector<8x1xf32>
    %67 = vector.broadcast %66 : vector<8x1xf32> to vector<8x8xf32>
    %68 = arith.subf %64, %67 : vector<8x8xf32>
    %69 = math.exp %68 : vector<8x8xf32>
    %cst_27 = arith.constant dense<0.000000e+00> : vector<8xf32>
    %70 = vector.multi_reduction <add>, %69, %cst_27 [1] : vector<8x8xf32> to vector<8xf32>
    %71 = vector.shape_cast %70 : vector<8xf32> to vector<8x1xf32>
    %72 = tpu.reciprocal %71 {approx = true} : vector<8x1xf32> -> vector<8x1xf32>
    %73 = vector.broadcast %72 : vector<8x1xf32> to vector<8x8xf32>
    %74 = arith.mulf %69, %73 : vector<8x8xf32>
    %75 = arith.truncf %74 : vector<8x8xf32> to vector<8x8xbf16>
    %76 = vector.extract_strided_slice %36 {offsets = [0, 8], sizes = [8, 8], strides = [1, 1]} : vector<8x32xbf16> to vector<8x8xbf16>
    %cst_28 = arith.constant dense<0.000000e+00> : vector<8x8xf32>
    %77 = tpu.matmul %75, %76, %cst_28 {dimension_numbers = #tpu.dot_dimension_numbers<[1], [0], [0], [1], [0, 0, 1, 1], [], []>} : vector<8x8xbf16>, vector<8x8xbf16>, vector<8x8xf32> -> vector<8x8xf32>
    %78 = vector.extract_strided_slice %37 {offsets = [8, 0], sizes = [8, 32], strides = [1, 1]} : vector<32x32xf32> to vector<8x32xf32>
    %cst_29 = arith.constant dense<0.000000e+00> : vector<8x32xf32>
    %79 = tpu.matmul %77, %78, %cst_29 {dimension_numbers = #tpu.dot_dimension_numbers<[1], [0], [0], [1], [0, 0, 1, 1], [], []>} : vector<8x8xf32>, vector<8x32xf32>, vector<8x32xf32> -> vector<8x32xf32>
    %80 = arith.addf %59, %79 : vector<8x32xf32>
    %81 = vector.extract_strided_slice %34 {offsets = [0, 16], sizes = [8, 8], strides = [1, 1]} : vector<8x32xbf16> to vector<8x8xbf16>
    %82 = vector.extract_strided_slice %35 {offsets = [0, 16], sizes = [8, 8], strides = [1, 1]} : vector<8x32xbf16> to vector<8x8xbf16>
    %cst_30 = arith.constant dense<0.000000e+00> : vector<8x8xf32>
    %83 = tpu.matmul %81, %82, %cst_30 {dimension_numbers = #tpu.dot_dimension_numbers<[1], [1], [0], [0], [0, 0, 1, 0], [], []>} : vector<8x8xbf16>, vector<8x8xbf16>, vector<8x8xf32> -> vector<8x8xf32>
    %cst_31 = arith.constant 0.353553385 : f32
    %84 = vector.broadcast %cst_31 : f32 to vector<8x8xf32>
    %85 = arith.mulf %83, %84 : vector<8x8xf32>
    %cst_32 = arith.constant dense<0xFF800000> : vector<8xf32>
    %86 = vector.multi_reduction <maximumf>, %85, %cst_32 [1] : vector<8x8xf32> to vector<8xf32>
    %87 = vector.shape_cast %86 : vector<8xf32> to vector<8x1xf32>
    %88 = vector.broadcast %87 : vector<8x1xf32> to vector<8x8xf32>
    %89 = arith.subf %85, %88 : vector<8x8xf32>
    %90 = math.exp %89 : vector<8x8xf32>
    %cst_33 = arith.constant dense<0.000000e+00> : vector<8xf32>
    %91 = vector.multi_reduction <add>, %90, %cst_33 [1] : vector<8x8xf32> to vector<8xf32>
    %92 = vector.shape_cast %91 : vector<8xf32> to vector<8x1xf32>
    %93 = tpu.reciprocal %92 {approx = true} : vector<8x1xf32> -> vector<8x1xf32>
    %94 = vector.broadcast %93 : vector<8x1xf32> to vector<8x8xf32>
    %95 = arith.mulf %90, %94 : vector<8x8xf32>
    %96 = arith.truncf %95 : vector<8x8xf32> to vector<8x8xbf16>
    %97 = vector.extract_strided_slice %36 {offsets = [0, 16], sizes = [8, 8], strides = [1, 1]} : vector<8x32xbf16> to vector<8x8xbf16>
    %cst_34 = arith.constant dense<0.000000e+00> : vector<8x8xf32>
    %98 = tpu.matmul %96, %97, %cst_34 {dimension_numbers = #tpu.dot_dimension_numbers<[1], [0], [0], [1], [0, 0, 1, 1], [], []>} : vector<8x8xbf16>, vector<8x8xbf16>, vector<8x8xf32> -> vector<8x8xf32>
    %99 = vector.extract_strided_slice %37 {offsets = [16, 0], sizes = [8, 32], strides = [1, 1]} : vector<32x32xf32> to vector<8x32xf32>
    %cst_35 = arith.constant dense<0.000000e+00> : vector<8x32xf32>
    %100 = tpu.matmul %98, %99, %cst_35 {dimension_numbers = #tpu.dot_dimension_numbers<[1], [0], [0], [1], [0, 0, 1, 1], [], []>} : vector<8x8xf32>, vector<8x32xf32>, vector<8x32xf32> -> vector<8x32xf32>
    %101 = arith.addf %80, %100 : vector<8x32xf32>
    %102 = vector.extract_strided_slice %34 {offsets = [0, 24], sizes = [8, 8], strides = [1, 1]} : vector<8x32xbf16> to vector<8x8xbf16>
    %103 = vector.extract_strided_slice %35 {offsets = [0, 24], sizes = [8, 8], strides = [1, 1]} : vector<8x32xbf16> to vector<8x8xbf16>
    %cst_36 = arith.constant dense<0.000000e+00> : vector<8x8xf32>
    %104 = tpu.matmul %102, %103, %cst_36 {dimension_numbers = #tpu.dot_dimension_numbers<[1], [1], [0], [0], [0, 0, 1, 0], [], []>} : vector<8x8xbf16>, vector<8x8xbf16>, vector<8x8xf32> -> vector<8x8xf32>
    %cst_37 = arith.constant 0.353553385 : f32
    %105 = vector.broadcast %cst_37 : f32 to vector<8x8xf32>
    %106 = arith.mulf %104, %105 : vector<8x8xf32>
    %cst_38 = arith.constant dense<0xFF800000> : vector<8xf32>
    %107 = vector.multi_reduction <maximumf>, %106, %cst_38 [1] : vector<8x8xf32> to vector<8xf32>
    %108 = vector.shape_cast %107 : vector<8xf32> to vector<8x1xf32>
    %109 = vector.broadcast %108 : vector<8x1xf32> to vector<8x8xf32>
    %110 = arith.subf %106, %109 : vector<8x8xf32>
    %111 = math.exp %110 : vector<8x8xf32>
    %cst_39 = arith.constant dense<0.000000e+00> : vector<8xf32>
    %112 = vector.multi_reduction <add>, %111, %cst_39 [1] : vector<8x8xf32> to vector<8xf32>
    %113 = vector.shape_cast %112 : vector<8xf32> to vector<8x1xf32>
    %114 = tpu.reciprocal %113 {approx = true} : vector<8x1xf32> -> vector<8x1xf32>
    %115 = vector.broadcast %114 : vector<8x1xf32> to vector<8x8xf32>
    %116 = arith.mulf %111, %115 : vector<8x8xf32>
    %117 = arith.truncf %116 : vector<8x8xf32> to vector<8x8xbf16>
    %118 = vector.extract_strided_slice %36 {offsets = [0, 24], sizes = [8, 8], strides = [1, 1]} : vector<8x32xbf16> to vector<8x8xbf16>
    %cst_40 = arith.constant dense<0.000000e+00> : vector<8x8xf32>
    %119 = tpu.matmul %117, %118, %cst_40 {dimension_numbers = #tpu.dot_dimension_numbers<[1], [0], [0], [1], [0, 0, 1, 1], [], []>} : vector<8x8xbf16>, vector<8x8xbf16>, vector<8x8xf32> -> vector<8x8xf32>
    %120 = vector.extract_strided_slice %37 {offsets = [24, 0], sizes = [8, 32], strides = [1, 1]} : vector<32x32xf32> to vector<8x32xf32>
    %cst_41 = arith.constant dense<0.000000e+00> : vector<8x32xf32>
    %121 = tpu.matmul %119, %120, %cst_41 {dimension_numbers = #tpu.dot_dimension_numbers<[1], [0], [0], [1], [0, 0, 1, 1], [], []>} : vector<8x8xf32>, vector<8x32xf32>, vector<8x32xf32> -> vector<8x32xf32>
    %122 = arith.addf %101, %121 : vector<8x32xf32>
    %123 = arith.addf %4, %122 : vector<8x32xf32>
    %c0_42 = arith.constant 0 : index
    %c0_43 = arith.constant 0 : index
    %c0_44 = arith.constant 0 : index
    %124 = vector.load %arg9[%c0_42, %c0_43, %c0_44] : memref<1x1x32xf32, #tpu.memory_space<vmem>>, vector<1x1x32xf32>
    %125 = vector.shape_cast %124 : vector<1x1x32xf32> to vector<1x32xf32>
    %cst_45 = arith.constant dense<0.000000e+00> : vector<8xf32>
    %126 = vector.multi_reduction <add>, %123, %cst_45 [1] : vector<8x32xf32> to vector<8xf32>
    %127 = vector.shape_cast %126 : vector<8xf32> to vector<8x1xf32>
    %cst_46 = arith.constant 3.200000e+01 : f32
    %128 = vector.broadcast %cst_46 : f32 to vector<8x1xf32>
    %129 = arith.divf %127, %128 : vector<8x1xf32>
    %130 = vector.broadcast %129 : vector<8x1xf32> to vector<8x32xf32>
    %131 = arith.subf %123, %130 : vector<8x32xf32>
    %132 = arith.mulf %131, %131 : vector<8x32xf32>
    %cst_47 = arith.constant dense<0.000000e+00> : vector<8xf32>
    %133 = vector.multi_reduction <add>, %132, %cst_47 [1] : vector<8x32xf32> to vector<8xf32>
    %134 = vector.shape_cast %133 : vector<8xf32> to vector<8x1xf32>
    %cst_48 = arith.constant 3.200000e+01 : f32
    %135 = vector.broadcast %cst_48 : f32 to vector<8x1xf32>
    %136 = arith.divf %134, %135 : vector<8x1xf32>
    %cst_49 = arith.constant 9.99999974E-6 : f32
    %137 = vector.broadcast %cst_49 : f32 to vector<8x1xf32>
    %138 = arith.addf %136, %137 : vector<8x1xf32>
    %139 = math.rsqrt %138 : vector<8x1xf32>
    %140 = vector.broadcast %139 : vector<8x1xf32> to vector<8x32xf32>
    %141 = arith.mulf %131, %140 : vector<8x32xf32>
    %142 = vector.broadcast %125 : vector<1x32xf32> to vector<8x32xf32>
    %143 = arith.mulf %141, %142 : vector<8x32xf32>
    %144 = arith.truncf %143 : vector<8x32xf32> to vector<8x32xbf16>
    %c0_50 = arith.constant 0 : index
    %c0_51 = arith.constant 0 : index
    %c0_52 = arith.constant 0 : index
    %145 = vector.load %arg10[%c0_50, %c0_51, %c0_52] : memref<1x32x128xbf16, #tpu.memory_space<vmem>>, vector<1x32x128xbf16>
    %146 = vector.shape_cast %145 : vector<1x32x128xbf16> to vector<32x128xbf16>
    %cst_53 = arith.constant dense<0.000000e+00> : vector<8x128xf32>
    %147 = tpu.matmul %144, %146, %cst_53 {dimension_numbers = #tpu.dot_dimension_numbers<[1], [0], [0], [1], [0, 0, 1, 1], [], []>} : vector<8x32xbf16>, vector<32x128xbf16>, vector<8x128xf32> -> vector<8x128xf32>
    %cst_54 = arith.constant 5.000000e-01 : f32
    %148 = vector.broadcast %cst_54 : f32 to vector<8x128xf32>
    %149 = arith.mulf %148, %147 : vector<8x128xf32>
    %cst_55 = arith.constant 0.707106769 : f32
    %150 = vector.broadcast %cst_55 : f32 to vector<8x128xf32>
    %151 = arith.mulf %147, %150 : vector<8x128xf32>
    %152 = math.erf %151 : vector<8x128xf32>
    %cst_56 = arith.constant 1.000000e+00 : f32
    %153 = vector.broadcast %cst_56 : f32 to vector<8x128xf32>
    %154 = arith.addf %153, %152 : vector<8x128xf32>
    %155 = arith.mulf %149, %154 : vector<8x128xf32>
    %156 = arith.truncf %155 : vector<8x128xf32> to vector<8x128xbf16>
    %c0_57 = arith.constant 0 : index
    %c0_58 = arith.constant 0 : index
    %c0_59 = arith.constant 0 : index
    %157 = vector.load %arg11[%c0_57, %c0_58, %c0_59] : memref<1x128x32xbf16, #tpu.memory_space<vmem>>, vector<1x128x32xbf16>
    %158 = vector.shape_cast %157 : vector<1x128x32xbf16> to vector<128x32xbf16>
    %cst_60 = arith.constant dense<0.000000e+00> : vector<8x32xf32>
    %159 = tpu.matmul %156, %158, %cst_60 {dimension_numbers = #tpu.dot_dimension_numbers<[1], [0], [0], [1], [0, 0, 1, 1], [], []>} : vector<8x128xbf16>, vector<128x32xbf16>, vector<8x32xf32> -> vector<8x32xf32>
    %160 = arith.addf %123, %159 : vector<8x32xf32>
    %c1_i32 = arith.constant 1 : i32
    %161 = arith.cmpi eq, %arg1, %c1_i32 : i32
    %162 = arith.extui %161 : i1 to i32
    %c0_i32_61 = arith.constant 0 : i32
    %163 = arith.cmpi ne, %162, %c0_i32_61 : i32
    scf.if %163 {
      %c0_64 = arith.constant 0 : index
      %c0_65 = arith.constant 0 : index
      %167 = vector.load %arg12[%c0_64, %c0_65] : memref<1x32xf32, #tpu.memory_space<vmem>>, vector<1x32xf32>
      %cst_66 = arith.constant dense<0.000000e+00> : vector<8xf32>
      %168 = vector.multi_reduction <add>, %160, %cst_66 [1] : vector<8x32xf32> to vector<8xf32>
      %169 = vector.shape_cast %168 : vector<8xf32> to vector<8x1xf32>
      %cst_67 = arith.constant 3.200000e+01 : f32
      %170 = vector.broadcast %cst_67 : f32 to vector<8x1xf32>
      %171 = arith.divf %169, %170 : vector<8x1xf32>
      %172 = vector.broadcast %171 : vector<8x1xf32> to vector<8x32xf32>
      %173 = arith.subf %160, %172 : vector<8x32xf32>
      %174 = arith.mulf %173, %173 : vector<8x32xf32>
      %cst_68 = arith.constant dense<0.000000e+00> : vector<8xf32>
      %175 = vector.multi_reduction <add>, %174, %cst_68 [1] : vector<8x32xf32> to vector<8xf32>
      %176 = vector.shape_cast %175 : vector<8xf32> to vector<8x1xf32>
      %cst_69 = arith.constant 3.200000e+01 : f32
      %177 = vector.broadcast %cst_69 : f32 to vector<8x1xf32>
      %178 = arith.divf %176, %177 : vector<8x1xf32>
      %cst_70 = arith.constant 9.99999974E-6 : f32
      %179 = vector.broadcast %cst_70 : f32 to vector<8x1xf32>
      %180 = arith.addf %178, %179 : vector<8x1xf32>
      %181 = math.rsqrt %180 : vector<8x1xf32>
      %182 = vector.broadcast %181 : vector<8x1xf32> to vector<8x32xf32>
      %183 = arith.mulf %173, %182 : vector<8x32xf32>
      %184 = vector.broadcast %167 : vector<1x32xf32> to vector<8x32xf32>
      %185 = arith.mulf %183, %184 : vector<8x32xf32>
      %c0_71 = arith.constant 0 : index
      %c0_72 = arith.constant 0 : index
      %c0_73 = arith.constant 0 : index
      %186 = vector.load %arg13[%c0_71, %c0_72, %c0_73] : memref<1x8x32xf32, #tpu.memory_space<vmem>>, vector<1x8x32xf32>
      %187 = vector.shape_cast %186 : vector<1x8x32xf32> to vector<8x32xf32>
      %188 = vector.shape_cast %185 : vector<8x32xf32> to vector<1x8x32xf32>
      tpu.vector_store %arg13[%c0_71, %c0_72, %c0_73], %188 {strides = array<i32>} : memref<1x8x32xf32, #tpu.memory_space<vmem>>, vector<1x8x32xf32>,
    } else {
    }
    %c1_i32_62 = arith.constant 1 : i32
    %164 = arith.cmpi slt, %arg1, %c1_i32_62 : i32
    %165 = arith.extui %164 : i1 to i32
    %c0_i32_63 = arith.constant 0 : i32
    %166 = arith.cmpi ne, %165, %c0_i32_63 : i32
    scf.if %166 {
      %c0_64 = arith.constant 0 : index
      %c0_65 = arith.constant 0 : index
      %c0_66 = arith.constant 0 : index
      %167 = vector.load %arg13[%c0_64, %c0_65, %c0_66] : memref<1x8x32xf32, #tpu.memory_space<vmem>>, vector<1x8x32xf32>
      %168 = vector.shape_cast %167 : vector<1x8x32xf32> to vector<8x32xf32>
      %169 = vector.shape_cast %160 : vector<8x32xf32> to vector<1x8x32xf32>
      tpu.vector_store %arg13[%c0_64, %c0_65, %c0_66], %169 {strides = array<i32>} : memref<1x8x32xf32, #tpu.memory_space<vmem>>, vector<1x8x32xf32>,
    } else {
    }
    return
  }
  func.func @transform_0(%arg0: i32, %arg1: i32) -> (i32, i32, i32) {
    %c0_i32 = arith.constant 0 : i32
    %c0_i32_0 = arith.constant 0 : i32
    %c0_i32_1 = arith.constant 0 : i32
    return %arg0, %c0_i32, %c0_i32_0 : i32, i32, i32
  }
  func.func @transform_1(%arg0: i32, %arg1: i32) -> (i32, i32) {
    %c0_i32 = arith.constant 0 : i32
    %c0_i32_0 = arith.constant 0 : i32
    %c0_i32_1 = arith.constant 0 : i32
    return %c0_i32, %c0_i32_0 : i32, i32
  }
  func.func @transform_2(%arg0: i32, %arg1: i32) -> (i32, i32) {
    %c0_i32 = arith.constant 0 : i32
    %c0_i32_0 = arith.constant 0 : i32
    %c0_i32_1 = arith.constant 0 : i32
    return %c0_i32, %c0_i32_0 : i32, i32
  }
  func.func @transform_3(%arg0: i32, %arg1: i32) -> (i32, i32) {
    %c0_i32 = arith.constant 0 : i32
    %c0_i32_0 = arith.constant 0 : i32
    %c0_i32_1 = arith.constant 0 : i32
    return %c0_i32, %c0_i32_0 : i32, i32
  }
  func.func @transform_4(%arg0: i32, %arg1: i32) -> (i32, i32, i32) {
    %c0_i32 = arith.constant 0 : i32
    %c0_i32_0 = arith.constant 0 : i32
    %c0_i32_1 = arith.constant 0 : i32
    return %arg1, %c0_i32, %c0_i32_0 : i32, i32, i32
  }
  func.func @transform_5(%arg0: i32, %arg1: i32) -> (i32, i32, i32) {
    %c0_i32 = arith.constant 0 : i32
    %c0_i32_0 = arith.constant 0 : i32
    %c0_i32_1 = arith.constant 0 : i32
    return %arg1, %c0_i32, %c0_i32_0 : i32, i32, i32
  }
  func.func @transform_6(%arg0: i32, %arg1: i32) -> (i32, i32, i32) {
    %c0_i32 = arith.constant 0 : i32
    %c0_i32_0 = arith.constant 0 : i32
    %c0_i32_1 = arith.constant 0 : i32
    return %arg1, %c0_i32, %c0_i32_0 : i32, i32, i32
  }
  func.func @transform_7(%arg0: i32, %arg1: i32) -> (i32, i32, i32) {
    %c0_i32 = arith.constant 0 : i32
    %c0_i32_0 = arith.constant 0 : i32
    %c0_i32_1 = arith.constant 0 : i32
    return %arg1, %c0_i32, %c0_i32_0 : i32, i32, i32
  }
  func.func @transform_8(%arg0: i32, %arg1: i32) -> (i32, i32, i32) {
    %c0_i32 = arith.constant 0 : i32
    %c0_i32_0 = arith.constant 0 : i32
    %c0_i32_1 = arith.constant 0 : i32
    return %arg1, %c0_i32, %c0_i32_0 : i32, i32, i32
  }
  func.func @transform_9(%arg0: i32, %arg1: i32) -> (i32, i32, i32) {
    %c0_i32 = arith.constant 0 : i32
    %c0_i32_0 = arith.constant 0 : i32
    %c0_i32_1 = arith.constant 0 : i32
    return %arg1, %c0_i32, %c0_i32_0 : i32, i32, i32
  }
  func.func @transform_10(%arg0: i32, %arg1: i32) -> (i32, i32) {
    %c0_i32 = arith.constant 0 : i32
    %c0_i32_0 = arith.constant 0 : i32
    %c0_i32_1 = arith.constant 0 : i32
    return %c0_i32, %c0_i32_0 : i32, i32
  }
  func.func @transform_11(%arg0: i32, %arg1: i32) -> (i32, i32, i32) {
    %c0_i32 = arith.constant 0 : i32
    %c0_i32_0 = arith.constant 0 : i32
    %c0_i32_1 = arith.constant 0 : i32
    return %arg0, %c0_i32, %c0_i32_0 : i32, i32, i32
  }
}

module attributes {stable_mosaic.version = 11 : i64} {
  func.func @_decoder_stack_kernel(%arg0: i32, %arg1: i32, %arg2: memref<1x8x2xf32, #tpu.memory_space<vmem>>, %arg3: memref<2x32xf32, #tpu.memory_space<vmem>>, %arg4: memref<1x32xf32, #tpu.memory_space<vmem>>, %arg5: memref<8x32xf32, #tpu.memory_space<vmem>>, %arg6: memref<1x8x32xf32, #tpu.memory_space<vmem>>, %arg7: memref<8x8xf32, #tpu.memory_space<vmem>>, %arg8: memref<1x1x32xf32, #tpu.memory_space<vmem>>, %arg9: memref<1x32x96xbf16, #tpu.memory_space<vmem>>, %arg10: memref<1x32x32xbf16, #tpu.memory_space<vmem>>, %arg11: memref<1x1x32xf32, #tpu.memory_space<vmem>>, %arg12: memref<1x32x32xbf16, #tpu.memory_space<vmem>>, %arg13: memref<1x32x64xbf16, #tpu.memory_space<vmem>>, %arg14: memref<1x32x32xbf16, #tpu.memory_space<vmem>>, %arg15: memref<1x1x32xf32, #tpu.memory_space<vmem>>, %arg16: memref<1x32x128xbf16, #tpu.memory_space<vmem>>, %arg17: memref<1x128x32xbf16, #tpu.memory_space<vmem>>, %arg18: memref<1x32xf32, #tpu.memory_space<vmem>>, %arg19: memref<32x128xf32, #tpu.memory_space<vmem>>, %arg20: memref<1x128xf32, #tpu.memory_space<vmem>>, %arg21: memref<1x8x128xf32, #tpu.memory_space<vmem>>, %arg22: memref<8x32xf32, #tpu.memory_space<vmem>>) attributes {dimension_semantics = [#tpu.dimension_semantics<parallel>, #tpu.dimension_semantics<arbitrary>], iteration_bounds = array<i64: 2, 2>, scalar_prefetch = 0 : i64, scratch_operands = 1 : i64, tpu.core_type = #tpu.core_type<tc>, window_params = [{transform_indices = @transform_0, window_bounds = array<i64: 1, 8, 2>}, {pipeline_mode = #tpu.pipeline_mode<synchronous>, transform_indices = @transform_1, window_bounds = array<i64: 2, 32>}, {pipeline_mode = #tpu.pipeline_mode<synchronous>, transform_indices = @transform_2, window_bounds = array<i64: 1, 32>}, {pipeline_mode = #tpu.pipeline_mode<synchronous>, transform_indices = @transform_3, window_bounds = array<i64: 8, 32>}, {transform_indices = @transform_4, window_bounds = array<i64: 1, 8, 32>}, {pipeline_mode = #tpu.pipeline_mode<synchronous>, transform_indices = @transform_5, window_bounds = array<i64: 8, 8>}, {transform_indices = @transform_6, window_bounds = array<i64: 1, 1, 32>}, {transform_indices = @transform_7, window_bounds = array<i64: 1, 32, 96>}, {transform_indices = @transform_8, window_bounds = array<i64: 1, 32, 32>}, {transform_indices = @transform_9, window_bounds = array<i64: 1, 1, 32>}, {transform_indices = @transform_10, window_bounds = array<i64: 1, 32, 32>}, {transform_indices = @transform_11, window_bounds = array<i64: 1, 32, 64>}, {transform_indices = @transform_12, window_bounds = array<i64: 1, 32, 32>}, {transform_indices = @transform_13, window_bounds = array<i64: 1, 1, 32>}, {transform_indices = @transform_14, window_bounds = array<i64: 1, 32, 128>}, {transform_indices = @transform_15, window_bounds = array<i64: 1, 128, 32>}, {pipeline_mode = #tpu.pipeline_mode<synchronous>, transform_indices = @transform_16, window_bounds = array<i64: 1, 32>}, {pipeline_mode = #tpu.pipeline_mode<synchronous>, transform_indices = @transform_17, window_bounds = array<i64: 32, 128>}, {pipeline_mode = #tpu.pipeline_mode<synchronous>, transform_indices = @transform_18, window_bounds = array<i64: 1, 128>}, {transform_indices = @transform_19, window_bounds = array<i64: 1, 8, 128>}]} {
    %c0_i32 = arith.constant 0 : i32
    %0 = arith.cmpi eq, %arg1, %c0_i32 : i32
    %1 = arith.extui %0 : i1 to i32
    %c0_i32_0 = arith.constant 0 : i32
    %2 = arith.cmpi ne, %1, %c0_i32_0 : i32
    scf.if %2 {
      %c0_112 = arith.constant 0 : index
      %c0_113 = arith.constant 0 : index
      %c0_114 = arith.constant 0 : index
      %293 = vector.load %arg2[%c0_112, %c0_113, %c0_114] : memref<1x8x2xf32, #tpu.memory_space<vmem>>, vector<1x8x2xf32>
      %294 = vector.shape_cast %293 : vector<1x8x2xf32> to vector<8x2xf32>
      %c0_115 = arith.constant 0 : index
      %c0_116 = arith.constant 0 : index
      %295 = vector.load %arg3[%c0_115, %c0_116] : memref<2x32xf32, #tpu.memory_space<vmem>>, vector<2x32xf32>
      %cst_117 = arith.constant dense<0.000000e+00> : vector<8x32xf32>
      %296 = tpu.matmul %294, %295, %cst_117 {dimension_numbers = #tpu.dot_dimension_numbers<[1], [0], [0], [1], [0, 0, 1, 1], [], []>} : vector<8x2xf32>, vector<2x32xf32>, vector<8x32xf32> -> vector<8x32xf32>
      %c0_118 = arith.constant 0 : index
      %c0_119 = arith.constant 0 : index
      %297 = vector.load %arg4[%c0_118, %c0_119] : memref<1x32xf32, #tpu.memory_space<vmem>>, vector<1x32xf32>
      %298 = vector.broadcast %297 : vector<1x32xf32> to vector<8x32xf32>
      %299 = arith.addf %296, %298 : vector<8x32xf32>
      %c0_120 = arith.constant 0 : index
      %c0_121 = arith.constant 0 : index
      %300 = vector.load %arg5[%c0_120, %c0_121] : memref<8x32xf32, #tpu.memory_space<vmem>>, vector<8x32xf32>
      %301 = arith.addf %299, %300 : vector<8x32xf32>
      %c0_122 = arith.constant 0 : index
      %c0_123 = arith.constant 0 : index
      %302 = vector.load %arg22[%c0_122, %c0_123] : memref<8x32xf32, #tpu.memory_space<vmem>>, vector<8x32xf32>
      tpu.vector_store %arg22[%c0_122, %c0_123], %301 {strides = array<i32>} : memref<8x32xf32, #tpu.memory_space<vmem>>, vector<8x32xf32>,
    } else {
    }
    %c0 = arith.constant 0 : index
    %c0_1 = arith.constant 0 : index
    %3 = vector.load %arg22[%c0, %c0_1] : memref<8x32xf32, #tpu.memory_space<vmem>>, vector<8x32xf32>
    %c0_2 = arith.constant 0 : index
    %c0_3 = arith.constant 0 : index
    %c0_4 = arith.constant 0 : index
    %4 = vector.load %arg6[%c0_2, %c0_3, %c0_4] : memref<1x8x32xf32, #tpu.memory_space<vmem>>, vector<1x8x32xf32>
    %5 = vector.shape_cast %4 : vector<1x8x32xf32> to vector<8x32xf32>
    %c0_5 = arith.constant 0 : index
    %c0_6 = arith.constant 0 : index
    %c0_7 = arith.constant 0 : index
    %6 = vector.load %arg8[%c0_5, %c0_6, %c0_7] : memref<1x1x32xf32, #tpu.memory_space<vmem>>, vector<1x1x32xf32>
    %7 = vector.shape_cast %6 : vector<1x1x32xf32> to vector<1x32xf32>
    %cst = arith.constant dense<0.000000e+00> : vector<8xf32>
    %8 = vector.multi_reduction <add>, %3, %cst [1] : vector<8x32xf32> to vector<8xf32>
    %9 = vector.shape_cast %8 : vector<8xf32> to vector<8x1xf32>
    %cst_8 = arith.constant 3.200000e+01 : f32
    %10 = vector.broadcast %cst_8 : f32 to vector<8x1xf32>
    %11 = arith.divf %9, %10 : vector<8x1xf32>
    %12 = vector.broadcast %11 : vector<8x1xf32> to vector<8x32xf32>
    %13 = arith.subf %3, %12 : vector<8x32xf32>
    %14 = arith.mulf %13, %13 : vector<8x32xf32>
    %cst_9 = arith.constant dense<0.000000e+00> : vector<8xf32>
    %15 = vector.multi_reduction <add>, %14, %cst_9 [1] : vector<8x32xf32> to vector<8xf32>
    %16 = vector.shape_cast %15 : vector<8xf32> to vector<8x1xf32>
    %cst_10 = arith.constant 3.200000e+01 : f32
    %17 = vector.broadcast %cst_10 : f32 to vector<8x1xf32>
    %18 = arith.divf %16, %17 : vector<8x1xf32>
    %cst_11 = arith.constant 9.99999974E-6 : f32
    %19 = vector.broadcast %cst_11 : f32 to vector<8x1xf32>
    %20 = arith.addf %18, %19 : vector<8x1xf32>
    %21 = math.rsqrt %20 : vector<8x1xf32>
    %22 = vector.broadcast %21 : vector<8x1xf32> to vector<8x32xf32>
    %23 = arith.mulf %13, %22 : vector<8x32xf32>
    %24 = vector.broadcast %7 : vector<1x32xf32> to vector<8x32xf32>
    %25 = arith.mulf %23, %24 : vector<8x32xf32>
    %26 = arith.truncf %25 : vector<8x32xf32> to vector<8x32xbf16>
    %c0_12 = arith.constant 0 : index
    %c0_13 = arith.constant 0 : index
    %c0_14 = arith.constant 0 : index
    %27 = vector.load %arg9[%c0_12, %c0_13, %c0_14] : memref<1x32x96xbf16, #tpu.memory_space<vmem>>, vector<1x32x96xbf16>
    %28 = vector.shape_cast %27 : vector<1x32x96xbf16> to vector<32x96xbf16>
    %cst_15 = arith.constant dense<0.000000e+00> : vector<8x96xf32>
    %29 = tpu.matmul %26, %28, %cst_15 {dimension_numbers = #tpu.dot_dimension_numbers<[1], [0], [0], [1], [0, 0, 1, 1], [], []>} : vector<8x32xbf16>, vector<32x96xbf16>, vector<8x96xf32> -> vector<8x96xf32>
    %30 = vector.extract_strided_slice %29 {offsets = [0, 0], sizes = [8, 32], strides = [1, 1]} : vector<8x96xf32> to vector<8x32xf32>
    %31 = vector.extract_strided_slice %29 {offsets = [0, 32], sizes = [8, 32], strides = [1, 1]} : vector<8x96xf32> to vector<8x32xf32>
    %32 = vector.extract_strided_slice %29 {offsets = [0, 64], sizes = [8, 32], strides = [1, 1]} : vector<8x96xf32> to vector<8x32xf32>
    %c0_16 = arith.constant 0 : index
    %c0_17 = arith.constant 0 : index
    %c0_18 = arith.constant 0 : index
    %33 = vector.load %arg10[%c0_16, %c0_17, %c0_18] : memref<1x32x32xbf16, #tpu.memory_space<vmem>>, vector<1x32x32xbf16>
    %34 = vector.shape_cast %33 : vector<1x32x32xbf16> to vector<32x32xbf16>
    %c0_19 = arith.constant 0 : index
    %c0_20 = arith.constant 0 : index
    %35 = vector.load %arg7[%c0_19, %c0_20] : memref<8x8xf32, #tpu.memory_space<vmem>>, vector<8x8xf32>
    %36 = arith.truncf %30 : vector<8x32xf32> to vector<8x32xbf16>
    %37 = arith.truncf %31 : vector<8x32xf32> to vector<8x32xbf16>
    %38 = arith.truncf %32 : vector<8x32xf32> to vector<8x32xbf16>
    %39 = arith.extf %34 : vector<32x32xbf16> to vector<32x32xf32>
    %cst_21 = arith.constant 0.000000e+00 : f32
    %40 = vector.broadcast %cst_21 : f32 to vector<8x32xf32>
    %41 = vector.extract_strided_slice %36 {offsets = [0, 0], sizes = [8, 8], strides = [1, 1]} : vector<8x32xbf16> to vector<8x8xbf16>
    %42 = vector.extract_strided_slice %37 {offsets = [0, 0], sizes = [8, 8], strides = [1, 1]} : vector<8x32xbf16> to vector<8x8xbf16>
    %cst_22 = arith.constant dense<0.000000e+00> : vector<8x8xf32>
    %43 = tpu.matmul %41, %42, %cst_22 {dimension_numbers = #tpu.dot_dimension_numbers<[1], [1], [0], [0], [0, 0, 1, 0], [], []>} : vector<8x8xbf16>, vector<8x8xbf16>, vector<8x8xf32> -> vector<8x8xf32>
    %cst_23 = arith.constant 0.353553385 : f32
    %44 = vector.broadcast %cst_23 : f32 to vector<8x8xf32>
    %45 = arith.mulf %43, %44 : vector<8x8xf32>
    %46 = arith.addf %45, %35 : vector<8x8xf32>
    %cst_24 = arith.constant dense<0xFF800000> : vector<8xf32>
    %47 = vector.multi_reduction <maximumf>, %46, %cst_24 [1] : vector<8x8xf32> to vector<8xf32>
    %48 = vector.shape_cast %47 : vector<8xf32> to vector<8x1xf32>
    %49 = vector.broadcast %48 : vector<8x1xf32> to vector<8x8xf32>
    %50 = arith.subf %46, %49 : vector<8x8xf32>
    %51 = math.exp %50 : vector<8x8xf32>
    %cst_25 = arith.constant dense<0.000000e+00> : vector<8xf32>
    %52 = vector.multi_reduction <add>, %51, %cst_25 [1] : vector<8x8xf32> to vector<8xf32>
    %53 = vector.shape_cast %52 : vector<8xf32> to vector<8x1xf32>
    %54 = tpu.reciprocal %53 {approx = true} : vector<8x1xf32> -> vector<8x1xf32>
    %55 = vector.broadcast %54 : vector<8x1xf32> to vector<8x8xf32>
    %56 = arith.mulf %51, %55 : vector<8x8xf32>
    %57 = arith.truncf %56 : vector<8x8xf32> to vector<8x8xbf16>
    %58 = vector.extract_strided_slice %38 {offsets = [0, 0], sizes = [8, 8], strides = [1, 1]} : vector<8x32xbf16> to vector<8x8xbf16>
    %cst_26 = arith.constant dense<0.000000e+00> : vector<8x8xf32>
    %59 = tpu.matmul %57, %58, %cst_26 {dimension_numbers = #tpu.dot_dimension_numbers<[1], [0], [0], [1], [0, 0, 1, 1], [], []>} : vector<8x8xbf16>, vector<8x8xbf16>, vector<8x8xf32> -> vector<8x8xf32>
    %60 = vector.extract_strided_slice %39 {offsets = [0, 0], sizes = [8, 32], strides = [1, 1]} : vector<32x32xf32> to vector<8x32xf32>
    %cst_27 = arith.constant dense<0.000000e+00> : vector<8x32xf32>
    %61 = tpu.matmul %59, %60, %cst_27 {dimension_numbers = #tpu.dot_dimension_numbers<[1], [0], [0], [1], [0, 0, 1, 1], [], []>} : vector<8x8xf32>, vector<8x32xf32>, vector<8x32xf32> -> vector<8x32xf32>
    %62 = arith.addf %40, %61 : vector<8x32xf32>
    %63 = vector.extract_strided_slice %36 {offsets = [0, 8], sizes = [8, 8], strides = [1, 1]} : vector<8x32xbf16> to vector<8x8xbf16>
    %64 = vector.extract_strided_slice %37 {offsets = [0, 8], sizes = [8, 8], strides = [1, 1]} : vector<8x32xbf16> to vector<8x8xbf16>
    %cst_28 = arith.constant dense<0.000000e+00> : vector<8x8xf32>
    %65 = tpu.matmul %63, %64, %cst_28 {dimension_numbers = #tpu.dot_dimension_numbers<[1], [1], [0], [0], [0, 0, 1, 0], [], []>} : vector<8x8xbf16>, vector<8x8xbf16>, vector<8x8xf32> -> vector<8x8xf32>
    %cst_29 = arith.constant 0.353553385 : f32
    %66 = vector.broadcast %cst_29 : f32 to vector<8x8xf32>
    %67 = arith.mulf %65, %66 : vector<8x8xf32>
    %68 = arith.addf %67, %35 : vector<8x8xf32>
    %cst_30 = arith.constant dense<0xFF800000> : vector<8xf32>
    %69 = vector.multi_reduction <maximumf>, %68, %cst_30 [1] : vector<8x8xf32> to vector<8xf32>
    %70 = vector.shape_cast %69 : vector<8xf32> to vector<8x1xf32>
    %71 = vector.broadcast %70 : vector<8x1xf32> to vector<8x8xf32>
    %72 = arith.subf %68, %71 : vector<8x8xf32>
    %73 = math.exp %72 : vector<8x8xf32>
    %cst_31 = arith.constant dense<0.000000e+00> : vector<8xf32>
    %74 = vector.multi_reduction <add>, %73, %cst_31 [1] : vector<8x8xf32> to vector<8xf32>
    %75 = vector.shape_cast %74 : vector<8xf32> to vector<8x1xf32>
    %76 = tpu.reciprocal %75 {approx = true} : vector<8x1xf32> -> vector<8x1xf32>
    %77 = vector.broadcast %76 : vector<8x1xf32> to vector<8x8xf32>
    %78 = arith.mulf %73, %77 : vector<8x8xf32>
    %79 = arith.truncf %78 : vector<8x8xf32> to vector<8x8xbf16>
    %80 = vector.extract_strided_slice %38 {offsets = [0, 8], sizes = [8, 8], strides = [1, 1]} : vector<8x32xbf16> to vector<8x8xbf16>
    %cst_32 = arith.constant dense<0.000000e+00> : vector<8x8xf32>
    %81 = tpu.matmul %79, %80, %cst_32 {dimension_numbers = #tpu.dot_dimension_numbers<[1], [0], [0], [1], [0, 0, 1, 1], [], []>} : vector<8x8xbf16>, vector<8x8xbf16>, vector<8x8xf32> -> vector<8x8xf32>
    %82 = vector.extract_strided_slice %39 {offsets = [8, 0], sizes = [8, 32], strides = [1, 1]} : vector<32x32xf32> to vector<8x32xf32>
    %cst_33 = arith.constant dense<0.000000e+00> : vector<8x32xf32>
    %83 = tpu.matmul %81, %82, %cst_33 {dimension_numbers = #tpu.dot_dimension_numbers<[1], [0], [0], [1], [0, 0, 1, 1], [], []>} : vector<8x8xf32>, vector<8x32xf32>, vector<8x32xf32> -> vector<8x32xf32>
    %84 = arith.addf %62, %83 : vector<8x32xf32>
    %85 = vector.extract_strided_slice %36 {offsets = [0, 16], sizes = [8, 8], strides = [1, 1]} : vector<8x32xbf16> to vector<8x8xbf16>
    %86 = vector.extract_strided_slice %37 {offsets = [0, 16], sizes = [8, 8], strides = [1, 1]} : vector<8x32xbf16> to vector<8x8xbf16>
    %cst_34 = arith.constant dense<0.000000e+00> : vector<8x8xf32>
    %87 = tpu.matmul %85, %86, %cst_34 {dimension_numbers = #tpu.dot_dimension_numbers<[1], [1], [0], [0], [0, 0, 1, 0], [], []>} : vector<8x8xbf16>, vector<8x8xbf16>, vector<8x8xf32> -> vector<8x8xf32>
    %cst_35 = arith.constant 0.353553385 : f32
    %88 = vector.broadcast %cst_35 : f32 to vector<8x8xf32>
    %89 = arith.mulf %87, %88 : vector<8x8xf32>
    %90 = arith.addf %89, %35 : vector<8x8xf32>
    %cst_36 = arith.constant dense<0xFF800000> : vector<8xf32>
    %91 = vector.multi_reduction <maximumf>, %90, %cst_36 [1] : vector<8x8xf32> to vector<8xf32>
    %92 = vector.shape_cast %91 : vector<8xf32> to vector<8x1xf32>
    %93 = vector.broadcast %92 : vector<8x1xf32> to vector<8x8xf32>
    %94 = arith.subf %90, %93 : vector<8x8xf32>
    %95 = math.exp %94 : vector<8x8xf32>
    %cst_37 = arith.constant dense<0.000000e+00> : vector<8xf32>
    %96 = vector.multi_reduction <add>, %95, %cst_37 [1] : vector<8x8xf32> to vector<8xf32>
    %97 = vector.shape_cast %96 : vector<8xf32> to vector<8x1xf32>
    %98 = tpu.reciprocal %97 {approx = true} : vector<8x1xf32> -> vector<8x1xf32>
    %99 = vector.broadcast %98 : vector<8x1xf32> to vector<8x8xf32>
    %100 = arith.mulf %95, %99 : vector<8x8xf32>
    %101 = arith.truncf %100 : vector<8x8xf32> to vector<8x8xbf16>
    %102 = vector.extract_strided_slice %38 {offsets = [0, 16], sizes = [8, 8], strides = [1, 1]} : vector<8x32xbf16> to vector<8x8xbf16>
    %cst_38 = arith.constant dense<0.000000e+00> : vector<8x8xf32>
    %103 = tpu.matmul %101, %102, %cst_38 {dimension_numbers = #tpu.dot_dimension_numbers<[1], [0], [0], [1], [0, 0, 1, 1], [], []>} : vector<8x8xbf16>, vector<8x8xbf16>, vector<8x8xf32> -> vector<8x8xf32>
    %104 = vector.extract_strided_slice %39 {offsets = [16, 0], sizes = [8, 32], strides = [1, 1]} : vector<32x32xf32> to vector<8x32xf32>
    %cst_39 = arith.constant dense<0.000000e+00> : vector<8x32xf32>
    %105 = tpu.matmul %103, %104, %cst_39 {dimension_numbers = #tpu.dot_dimension_numbers<[1], [0], [0], [1], [0, 0, 1, 1], [], []>} : vector<8x8xf32>, vector<8x32xf32>, vector<8x32xf32> -> vector<8x32xf32>
    %106 = arith.addf %84, %105 : vector<8x32xf32>
    %107 = vector.extract_strided_slice %36 {offsets = [0, 24], sizes = [8, 8], strides = [1, 1]} : vector<8x32xbf16> to vector<8x8xbf16>
    %108 = vector.extract_strided_slice %37 {offsets = [0, 24], sizes = [8, 8], strides = [1, 1]} : vector<8x32xbf16> to vector<8x8xbf16>
    %cst_40 = arith.constant dense<0.000000e+00> : vector<8x8xf32>
    %109 = tpu.matmul %107, %108, %cst_40 {dimension_numbers = #tpu.dot_dimension_numbers<[1], [1], [0], [0], [0, 0, 1, 0], [], []>} : vector<8x8xbf16>, vector<8x8xbf16>, vector<8x8xf32> -> vector<8x8xf32>
    %cst_41 = arith.constant 0.353553385 : f32
    %110 = vector.broadcast %cst_41 : f32 to vector<8x8xf32>
    %111 = arith.mulf %109, %110 : vector<8x8xf32>
    %112 = arith.addf %111, %35 : vector<8x8xf32>
    %cst_42 = arith.constant dense<0xFF800000> : vector<8xf32>
    %113 = vector.multi_reduction <maximumf>, %112, %cst_42 [1] : vector<8x8xf32> to vector<8xf32>
    %114 = vector.shape_cast %113 : vector<8xf32> to vector<8x1xf32>
    %115 = vector.broadcast %114 : vector<8x1xf32> to vector<8x8xf32>
    %116 = arith.subf %112, %115 : vector<8x8xf32>
    %117 = math.exp %116 : vector<8x8xf32>
    %cst_43 = arith.constant dense<0.000000e+00> : vector<8xf32>
    %118 = vector.multi_reduction <add>, %117, %cst_43 [1] : vector<8x8xf32> to vector<8xf32>
    %119 = vector.shape_cast %118 : vector<8xf32> to vector<8x1xf32>
    %120 = tpu.reciprocal %119 {approx = true} : vector<8x1xf32> -> vector<8x1xf32>
    %121 = vector.broadcast %120 : vector<8x1xf32> to vector<8x8xf32>
    %122 = arith.mulf %117, %121 : vector<8x8xf32>
    %123 = arith.truncf %122 : vector<8x8xf32> to vector<8x8xbf16>
    %124 = vector.extract_strided_slice %38 {offsets = [0, 24], sizes = [8, 8], strides = [1, 1]} : vector<8x32xbf16> to vector<8x8xbf16>
    %cst_44 = arith.constant dense<0.000000e+00> : vector<8x8xf32>
    %125 = tpu.matmul %123, %124, %cst_44 {dimension_numbers = #tpu.dot_dimension_numbers<[1], [0], [0], [1], [0, 0, 1, 1], [], []>} : vector<8x8xbf16>, vector<8x8xbf16>, vector<8x8xf32> -> vector<8x8xf32>
    %126 = vector.extract_strided_slice %39 {offsets = [24, 0], sizes = [8, 32], strides = [1, 1]} : vector<32x32xf32> to vector<8x32xf32>
    %cst_45 = arith.constant dense<0.000000e+00> : vector<8x32xf32>
    %127 = tpu.matmul %125, %126, %cst_45 {dimension_numbers = #tpu.dot_dimension_numbers<[1], [0], [0], [1], [0, 0, 1, 1], [], []>} : vector<8x8xf32>, vector<8x32xf32>, vector<8x32xf32> -> vector<8x32xf32>
    %128 = arith.addf %106, %127 : vector<8x32xf32>
    %129 = arith.addf %3, %128 : vector<8x32xf32>
    %c0_46 = arith.constant 0 : index
    %c0_47 = arith.constant 0 : index
    %c0_48 = arith.constant 0 : index
    %130 = vector.load %arg11[%c0_46, %c0_47, %c0_48] : memref<1x1x32xf32, #tpu.memory_space<vmem>>, vector<1x1x32xf32>
    %131 = vector.shape_cast %130 : vector<1x1x32xf32> to vector<1x32xf32>
    %cst_49 = arith.constant dense<0.000000e+00> : vector<8xf32>
    %132 = vector.multi_reduction <add>, %129, %cst_49 [1] : vector<8x32xf32> to vector<8xf32>
    %133 = vector.shape_cast %132 : vector<8xf32> to vector<8x1xf32>
    %cst_50 = arith.constant 3.200000e+01 : f32
    %134 = vector.broadcast %cst_50 : f32 to vector<8x1xf32>
    %135 = arith.divf %133, %134 : vector<8x1xf32>
    %136 = vector.broadcast %135 : vector<8x1xf32> to vector<8x32xf32>
    %137 = arith.subf %129, %136 : vector<8x32xf32>
    %138 = arith.mulf %137, %137 : vector<8x32xf32>
    %cst_51 = arith.constant dense<0.000000e+00> : vector<8xf32>
    %139 = vector.multi_reduction <add>, %138, %cst_51 [1] : vector<8x32xf32> to vector<8xf32>
    %140 = vector.shape_cast %139 : vector<8xf32> to vector<8x1xf32>
    %cst_52 = arith.constant 3.200000e+01 : f32
    %141 = vector.broadcast %cst_52 : f32 to vector<8x1xf32>
    %142 = arith.divf %140, %141 : vector<8x1xf32>
    %cst_53 = arith.constant 9.99999974E-6 : f32
    %143 = vector.broadcast %cst_53 : f32 to vector<8x1xf32>
    %144 = arith.addf %142, %143 : vector<8x1xf32>
    %145 = math.rsqrt %144 : vector<8x1xf32>
    %146 = vector.broadcast %145 : vector<8x1xf32> to vector<8x32xf32>
    %147 = arith.mulf %137, %146 : vector<8x32xf32>
    %148 = vector.broadcast %131 : vector<1x32xf32> to vector<8x32xf32>
    %149 = arith.mulf %147, %148 : vector<8x32xf32>
    %150 = arith.truncf %149 : vector<8x32xf32> to vector<8x32xbf16>
    %c0_54 = arith.constant 0 : index
    %c0_55 = arith.constant 0 : index
    %c0_56 = arith.constant 0 : index
    %151 = vector.load %arg12[%c0_54, %c0_55, %c0_56] : memref<1x32x32xbf16, #tpu.memory_space<vmem>>, vector<1x32x32xbf16>
    %152 = vector.shape_cast %151 : vector<1x32x32xbf16> to vector<32x32xbf16>
    %cst_57 = arith.constant dense<0.000000e+00> : vector<8x32xf32>
    %153 = tpu.matmul %150, %152, %cst_57 {dimension_numbers = #tpu.dot_dimension_numbers<[1], [0], [0], [1], [0, 0, 1, 1], [], []>} : vector<8x32xbf16>, vector<32x32xbf16>, vector<8x32xf32> -> vector<8x32xf32>
    %154 = arith.truncf %5 : vector<8x32xf32> to vector<8x32xbf16>
    %c0_58 = arith.constant 0 : index
    %c0_59 = arith.constant 0 : index
    %c0_60 = arith.constant 0 : index
    %155 = vector.load %arg13[%c0_58, %c0_59, %c0_60] : memref<1x32x64xbf16, #tpu.memory_space<vmem>>, vector<1x32x64xbf16>
    %156 = vector.shape_cast %155 : vector<1x32x64xbf16> to vector<32x64xbf16>
    %cst_61 = arith.constant dense<0.000000e+00> : vector<8x64xf32>
    %157 = tpu.matmul %154, %156, %cst_61 {dimension_numbers = #tpu.dot_dimension_numbers<[1], [0], [0], [1], [0, 0, 1, 1], [], []>} : vector<8x32xbf16>, vector<32x64xbf16>, vector<8x64xf32> -> vector<8x64xf32>
    %158 = vector.extract_strided_slice %157 {offsets = [0, 0], sizes = [8, 32], strides = [1, 1]} : vector<8x64xf32> to vector<8x32xf32>
    %159 = vector.extract_strided_slice %157 {offsets = [0, 32], sizes = [8, 32], strides = [1, 1]} : vector<8x64xf32> to vector<8x32xf32>
    %c0_62 = arith.constant 0 : index
    %c0_63 = arith.constant 0 : index
    %c0_64 = arith.constant 0 : index
    %160 = vector.load %arg14[%c0_62, %c0_63, %c0_64] : memref<1x32x32xbf16, #tpu.memory_space<vmem>>, vector<1x32x32xbf16>
    %161 = vector.shape_cast %160 : vector<1x32x32xbf16> to vector<32x32xbf16>
    %162 = arith.truncf %153 : vector<8x32xf32> to vector<8x32xbf16>
    %163 = arith.truncf %158 : vector<8x32xf32> to vector<8x32xbf16>
    %164 = arith.truncf %159 : vector<8x32xf32> to vector<8x32xbf16>
    %165 = arith.extf %161 : vector<32x32xbf16> to vector<32x32xf32>
    %cst_65 = arith.constant 0.000000e+00 : f32
    %166 = vector.broadcast %cst_65 : f32 to vector<8x32xf32>
    %167 = vector.extract_strided_slice %162 {offsets = [0, 0], sizes = [8, 8], strides = [1, 1]} : vector<8x32xbf16> to vector<8x8xbf16>
    %168 = vector.extract_strided_slice %163 {offsets = [0, 0], sizes = [8, 8], strides = [1, 1]} : vector<8x32xbf16> to vector<8x8xbf16>
    %cst_66 = arith.constant dense<0.000000e+00> : vector<8x8xf32>
    %169 = tpu.matmul %167, %168, %cst_66 {dimension_numbers = #tpu.dot_dimension_numbers<[1], [1], [0], [0], [0, 0, 1, 0], [], []>} : vector<8x8xbf16>, vector<8x8xbf16>, vector<8x8xf32> -> vector<8x8xf32>
    %cst_67 = arith.constant 0.353553385 : f32
    %170 = vector.broadcast %cst_67 : f32 to vector<8x8xf32>
    %171 = arith.mulf %169, %170 : vector<8x8xf32>
    %cst_68 = arith.constant dense<0xFF800000> : vector<8xf32>
    %172 = vector.multi_reduction <maximumf>, %171, %cst_68 [1] : vector<8x8xf32> to vector<8xf32>
    %173 = vector.shape_cast %172 : vector<8xf32> to vector<8x1xf32>
    %174 = vector.broadcast %173 : vector<8x1xf32> to vector<8x8xf32>
    %175 = arith.subf %171, %174 : vector<8x8xf32>
    %176 = math.exp %175 : vector<8x8xf32>
    %cst_69 = arith.constant dense<0.000000e+00> : vector<8xf32>
    %177 = vector.multi_reduction <add>, %176, %cst_69 [1] : vector<8x8xf32> to vector<8xf32>
    %178 = vector.shape_cast %177 : vector<8xf32> to vector<8x1xf32>
    %179 = tpu.reciprocal %178 {approx = true} : vector<8x1xf32> -> vector<8x1xf32>
    %180 = vector.broadcast %179 : vector<8x1xf32> to vector<8x8xf32>
    %181 = arith.mulf %176, %180 : vector<8x8xf32>
    %182 = arith.truncf %181 : vector<8x8xf32> to vector<8x8xbf16>
    %183 = vector.extract_strided_slice %164 {offsets = [0, 0], sizes = [8, 8], strides = [1, 1]} : vector<8x32xbf16> to vector<8x8xbf16>
    %cst_70 = arith.constant dense<0.000000e+00> : vector<8x8xf32>
    %184 = tpu.matmul %182, %183, %cst_70 {dimension_numbers = #tpu.dot_dimension_numbers<[1], [0], [0], [1], [0, 0, 1, 1], [], []>} : vector<8x8xbf16>, vector<8x8xbf16>, vector<8x8xf32> -> vector<8x8xf32>
    %185 = vector.extract_strided_slice %165 {offsets = [0, 0], sizes = [8, 32], strides = [1, 1]} : vector<32x32xf32> to vector<8x32xf32>
    %cst_71 = arith.constant dense<0.000000e+00> : vector<8x32xf32>
    %186 = tpu.matmul %184, %185, %cst_71 {dimension_numbers = #tpu.dot_dimension_numbers<[1], [0], [0], [1], [0, 0, 1, 1], [], []>} : vector<8x8xf32>, vector<8x32xf32>, vector<8x32xf32> -> vector<8x32xf32>
    %187 = arith.addf %166, %186 : vector<8x32xf32>
    %188 = vector.extract_strided_slice %162 {offsets = [0, 8], sizes = [8, 8], strides = [1, 1]} : vector<8x32xbf16> to vector<8x8xbf16>
    %189 = vector.extract_strided_slice %163 {offsets = [0, 8], sizes = [8, 8], strides = [1, 1]} : vector<8x32xbf16> to vector<8x8xbf16>
    %cst_72 = arith.constant dense<0.000000e+00> : vector<8x8xf32>
    %190 = tpu.matmul %188, %189, %cst_72 {dimension_numbers = #tpu.dot_dimension_numbers<[1], [1], [0], [0], [0, 0, 1, 0], [], []>} : vector<8x8xbf16>, vector<8x8xbf16>, vector<8x8xf32> -> vector<8x8xf32>
    %cst_73 = arith.constant 0.353553385 : f32
    %191 = vector.broadcast %cst_73 : f32 to vector<8x8xf32>
    %192 = arith.mulf %190, %191 : vector<8x8xf32>
    %cst_74 = arith.constant dense<0xFF800000> : vector<8xf32>
    %193 = vector.multi_reduction <maximumf>, %192, %cst_74 [1] : vector<8x8xf32> to vector<8xf32>
    %194 = vector.shape_cast %193 : vector<8xf32> to vector<8x1xf32>
    %195 = vector.broadcast %194 : vector<8x1xf32> to vector<8x8xf32>
    %196 = arith.subf %192, %195 : vector<8x8xf32>
    %197 = math.exp %196 : vector<8x8xf32>
    %cst_75 = arith.constant dense<0.000000e+00> : vector<8xf32>
    %198 = vector.multi_reduction <add>, %197, %cst_75 [1] : vector<8x8xf32> to vector<8xf32>
    %199 = vector.shape_cast %198 : vector<8xf32> to vector<8x1xf32>
    %200 = tpu.reciprocal %199 {approx = true} : vector<8x1xf32> -> vector<8x1xf32>
    %201 = vector.broadcast %200 : vector<8x1xf32> to vector<8x8xf32>
    %202 = arith.mulf %197, %201 : vector<8x8xf32>
    %203 = arith.truncf %202 : vector<8x8xf32> to vector<8x8xbf16>
    %204 = vector.extract_strided_slice %164 {offsets = [0, 8], sizes = [8, 8], strides = [1, 1]} : vector<8x32xbf16> to vector<8x8xbf16>
    %cst_76 = arith.constant dense<0.000000e+00> : vector<8x8xf32>
    %205 = tpu.matmul %203, %204, %cst_76 {dimension_numbers = #tpu.dot_dimension_numbers<[1], [0], [0], [1], [0, 0, 1, 1], [], []>} : vector<8x8xbf16>, vector<8x8xbf16>, vector<8x8xf32> -> vector<8x8xf32>
    %206 = vector.extract_strided_slice %165 {offsets = [8, 0], sizes = [8, 32], strides = [1, 1]} : vector<32x32xf32> to vector<8x32xf32>
    %cst_77 = arith.constant dense<0.000000e+00> : vector<8x32xf32>
    %207 = tpu.matmul %205, %206, %cst_77 {dimension_numbers = #tpu.dot_dimension_numbers<[1], [0], [0], [1], [0, 0, 1, 1], [], []>} : vector<8x8xf32>, vector<8x32xf32>, vector<8x32xf32> -> vector<8x32xf32>
    %208 = arith.addf %187, %207 : vector<8x32xf32>
    %209 = vector.extract_strided_slice %162 {offsets = [0, 16], sizes = [8, 8], strides = [1, 1]} : vector<8x32xbf16> to vector<8x8xbf16>
    %210 = vector.extract_strided_slice %163 {offsets = [0, 16], sizes = [8, 8], strides = [1, 1]} : vector<8x32xbf16> to vector<8x8xbf16>
    %cst_78 = arith.constant dense<0.000000e+00> : vector<8x8xf32>
    %211 = tpu.matmul %209, %210, %cst_78 {dimension_numbers = #tpu.dot_dimension_numbers<[1], [1], [0], [0], [0, 0, 1, 0], [], []>} : vector<8x8xbf16>, vector<8x8xbf16>, vector<8x8xf32> -> vector<8x8xf32>
    %cst_79 = arith.constant 0.353553385 : f32
    %212 = vector.broadcast %cst_79 : f32 to vector<8x8xf32>
    %213 = arith.mulf %211, %212 : vector<8x8xf32>
    %cst_80 = arith.constant dense<0xFF800000> : vector<8xf32>
    %214 = vector.multi_reduction <maximumf>, %213, %cst_80 [1] : vector<8x8xf32> to vector<8xf32>
    %215 = vector.shape_cast %214 : vector<8xf32> to vector<8x1xf32>
    %216 = vector.broadcast %215 : vector<8x1xf32> to vector<8x8xf32>
    %217 = arith.subf %213, %216 : vector<8x8xf32>
    %218 = math.exp %217 : vector<8x8xf32>
    %cst_81 = arith.constant dense<0.000000e+00> : vector<8xf32>
    %219 = vector.multi_reduction <add>, %218, %cst_81 [1] : vector<8x8xf32> to vector<8xf32>
    %220 = vector.shape_cast %219 : vector<8xf32> to vector<8x1xf32>
    %221 = tpu.reciprocal %220 {approx = true} : vector<8x1xf32> -> vector<8x1xf32>
    %222 = vector.broadcast %221 : vector<8x1xf32> to vector<8x8xf32>
    %223 = arith.mulf %218, %222 : vector<8x8xf32>
    %224 = arith.truncf %223 : vector<8x8xf32> to vector<8x8xbf16>
    %225 = vector.extract_strided_slice %164 {offsets = [0, 16], sizes = [8, 8], strides = [1, 1]} : vector<8x32xbf16> to vector<8x8xbf16>
    %cst_82 = arith.constant dense<0.000000e+00> : vector<8x8xf32>
    %226 = tpu.matmul %224, %225, %cst_82 {dimension_numbers = #tpu.dot_dimension_numbers<[1], [0], [0], [1], [0, 0, 1, 1], [], []>} : vector<8x8xbf16>, vector<8x8xbf16>, vector<8x8xf32> -> vector<8x8xf32>
    %227 = vector.extract_strided_slice %165 {offsets = [16, 0], sizes = [8, 32], strides = [1, 1]} : vector<32x32xf32> to vector<8x32xf32>
    %cst_83 = arith.constant dense<0.000000e+00> : vector<8x32xf32>
    %228 = tpu.matmul %226, %227, %cst_83 {dimension_numbers = #tpu.dot_dimension_numbers<[1], [0], [0], [1], [0, 0, 1, 1], [], []>} : vector<8x8xf32>, vector<8x32xf32>, vector<8x32xf32> -> vector<8x32xf32>
    %229 = arith.addf %208, %228 : vector<8x32xf32>
    %230 = vector.extract_strided_slice %162 {offsets = [0, 24], sizes = [8, 8], strides = [1, 1]} : vector<8x32xbf16> to vector<8x8xbf16>
    %231 = vector.extract_strided_slice %163 {offsets = [0, 24], sizes = [8, 8], strides = [1, 1]} : vector<8x32xbf16> to vector<8x8xbf16>
    %cst_84 = arith.constant dense<0.000000e+00> : vector<8x8xf32>
    %232 = tpu.matmul %230, %231, %cst_84 {dimension_numbers = #tpu.dot_dimension_numbers<[1], [1], [0], [0], [0, 0, 1, 0], [], []>} : vector<8x8xbf16>, vector<8x8xbf16>, vector<8x8xf32> -> vector<8x8xf32>
    %cst_85 = arith.constant 0.353553385 : f32
    %233 = vector.broadcast %cst_85 : f32 to vector<8x8xf32>
    %234 = arith.mulf %232, %233 : vector<8x8xf32>
    %cst_86 = arith.constant dense<0xFF800000> : vector<8xf32>
    %235 = vector.multi_reduction <maximumf>, %234, %cst_86 [1] : vector<8x8xf32> to vector<8xf32>
    %236 = vector.shape_cast %235 : vector<8xf32> to vector<8x1xf32>
    %237 = vector.broadcast %236 : vector<8x1xf32> to vector<8x8xf32>
    %238 = arith.subf %234, %237 : vector<8x8xf32>
    %239 = math.exp %238 : vector<8x8xf32>
    %cst_87 = arith.constant dense<0.000000e+00> : vector<8xf32>
    %240 = vector.multi_reduction <add>, %239, %cst_87 [1] : vector<8x8xf32> to vector<8xf32>
    %241 = vector.shape_cast %240 : vector<8xf32> to vector<8x1xf32>
    %242 = tpu.reciprocal %241 {approx = true} : vector<8x1xf32> -> vector<8x1xf32>
    %243 = vector.broadcast %242 : vector<8x1xf32> to vector<8x8xf32>
    %244 = arith.mulf %239, %243 : vector<8x8xf32>
    %245 = arith.truncf %244 : vector<8x8xf32> to vector<8x8xbf16>
    %246 = vector.extract_strided_slice %164 {offsets = [0, 24], sizes = [8, 8], strides = [1, 1]} : vector<8x32xbf16> to vector<8x8xbf16>
    %cst_88 = arith.constant dense<0.000000e+00> : vector<8x8xf32>
    %247 = tpu.matmul %245, %246, %cst_88 {dimension_numbers = #tpu.dot_dimension_numbers<[1], [0], [0], [1], [0, 0, 1, 1], [], []>} : vector<8x8xbf16>, vector<8x8xbf16>, vector<8x8xf32> -> vector<8x8xf32>
    %248 = vector.extract_strided_slice %165 {offsets = [24, 0], sizes = [8, 32], strides = [1, 1]} : vector<32x32xf32> to vector<8x32xf32>
    %cst_89 = arith.constant dense<0.000000e+00> : vector<8x32xf32>
    %249 = tpu.matmul %247, %248, %cst_89 {dimension_numbers = #tpu.dot_dimension_numbers<[1], [0], [0], [1], [0, 0, 1, 1], [], []>} : vector<8x8xf32>, vector<8x32xf32>, vector<8x32xf32> -> vector<8x32xf32>
    %250 = arith.addf %229, %249 : vector<8x32xf32>
    %251 = arith.addf %129, %250 : vector<8x32xf32>
    %c0_90 = arith.constant 0 : index
    %c0_91 = arith.constant 0 : index
    %c0_92 = arith.constant 0 : index
    %252 = vector.load %arg15[%c0_90, %c0_91, %c0_92] : memref<1x1x32xf32, #tpu.memory_space<vmem>>, vector<1x1x32xf32>
    %253 = vector.shape_cast %252 : vector<1x1x32xf32> to vector<1x32xf32>
    %cst_93 = arith.constant dense<0.000000e+00> : vector<8xf32>
    %254 = vector.multi_reduction <add>, %251, %cst_93 [1] : vector<8x32xf32> to vector<8xf32>
    %255 = vector.shape_cast %254 : vector<8xf32> to vector<8x1xf32>
    %cst_94 = arith.constant 3.200000e+01 : f32
    %256 = vector.broadcast %cst_94 : f32 to vector<8x1xf32>
    %257 = arith.divf %255, %256 : vector<8x1xf32>
    %258 = vector.broadcast %257 : vector<8x1xf32> to vector<8x32xf32>
    %259 = arith.subf %251, %258 : vector<8x32xf32>
    %260 = arith.mulf %259, %259 : vector<8x32xf32>
    %cst_95 = arith.constant dense<0.000000e+00> : vector<8xf32>
    %261 = vector.multi_reduction <add>, %260, %cst_95 [1] : vector<8x32xf32> to vector<8xf32>
    %262 = vector.shape_cast %261 : vector<8xf32> to vector<8x1xf32>
    %cst_96 = arith.constant 3.200000e+01 : f32
    %263 = vector.broadcast %cst_96 : f32 to vector<8x1xf32>
    %264 = arith.divf %262, %263 : vector<8x1xf32>
    %cst_97 = arith.constant 9.99999974E-6 : f32
    %265 = vector.broadcast %cst_97 : f32 to vector<8x1xf32>
    %266 = arith.addf %264, %265 : vector<8x1xf32>
    %267 = math.rsqrt %266 : vector<8x1xf32>
    %268 = vector.broadcast %267 : vector<8x1xf32> to vector<8x32xf32>
    %269 = arith.mulf %259, %268 : vector<8x32xf32>
    %270 = vector.broadcast %253 : vector<1x32xf32> to vector<8x32xf32>
    %271 = arith.mulf %269, %270 : vector<8x32xf32>
    %272 = arith.truncf %271 : vector<8x32xf32> to vector<8x32xbf16>
    %c0_98 = arith.constant 0 : index
    %c0_99 = arith.constant 0 : index
    %c0_100 = arith.constant 0 : index
    %273 = vector.load %arg16[%c0_98, %c0_99, %c0_100] : memref<1x32x128xbf16, #tpu.memory_space<vmem>>, vector<1x32x128xbf16>
    %274 = vector.shape_cast %273 : vector<1x32x128xbf16> to vector<32x128xbf16>
    %cst_101 = arith.constant dense<0.000000e+00> : vector<8x128xf32>
    %275 = tpu.matmul %272, %274, %cst_101 {dimension_numbers = #tpu.dot_dimension_numbers<[1], [0], [0], [1], [0, 0, 1, 1], [], []>} : vector<8x32xbf16>, vector<32x128xbf16>, vector<8x128xf32> -> vector<8x128xf32>
    %cst_102 = arith.constant 5.000000e-01 : f32
    %276 = vector.broadcast %cst_102 : f32 to vector<8x128xf32>
    %277 = arith.mulf %276, %275 : vector<8x128xf32>
    %cst_103 = arith.constant 0.707106769 : f32
    %278 = vector.broadcast %cst_103 : f32 to vector<8x128xf32>
    %279 = arith.mulf %275, %278 : vector<8x128xf32>
    %280 = math.erf %279 : vector<8x128xf32>
    %cst_104 = arith.constant 1.000000e+00 : f32
    %281 = vector.broadcast %cst_104 : f32 to vector<8x128xf32>
    %282 = arith.addf %281, %280 : vector<8x128xf32>
    %283 = arith.mulf %277, %282 : vector<8x128xf32>
    %284 = arith.truncf %283 : vector<8x128xf32> to vector<8x128xbf16>
    %c0_105 = arith.constant 0 : index
    %c0_106 = arith.constant 0 : index
    %c0_107 = arith.constant 0 : index
    %285 = vector.load %arg17[%c0_105, %c0_106, %c0_107] : memref<1x128x32xbf16, #tpu.memory_space<vmem>>, vector<1x128x32xbf16>
    %286 = vector.shape_cast %285 : vector<1x128x32xbf16> to vector<128x32xbf16>
    %cst_108 = arith.constant dense<0.000000e+00> : vector<8x32xf32>
    %287 = tpu.matmul %284, %286, %cst_108 {dimension_numbers = #tpu.dot_dimension_numbers<[1], [0], [0], [1], [0, 0, 1, 1], [], []>} : vector<8x128xbf16>, vector<128x32xbf16>, vector<8x32xf32> -> vector<8x32xf32>
    %288 = arith.addf %251, %287 : vector<8x32xf32>
    %c0_109 = arith.constant 0 : index
    %c0_110 = arith.constant 0 : index
    %289 = vector.load %arg22[%c0_109, %c0_110] : memref<8x32xf32, #tpu.memory_space<vmem>>, vector<8x32xf32>
    tpu.vector_store %arg22[%c0_109, %c0_110], %288 {strides = array<i32>} : memref<8x32xf32, #tpu.memory_space<vmem>>, vector<8x32xf32>,
    %c1_i32 = arith.constant 1 : i32
    %290 = arith.cmpi eq, %arg1, %c1_i32 : i32
    %291 = arith.extui %290 : i1 to i32
    %c0_i32_111 = arith.constant 0 : i32
    %292 = arith.cmpi ne, %291, %c0_i32_111 : i32
    scf.if %292 {
      %c0_112 = arith.constant 0 : index
      %c0_113 = arith.constant 0 : index
      %293 = vector.load %arg18[%c0_112, %c0_113] : memref<1x32xf32, #tpu.memory_space<vmem>>, vector<1x32xf32>
      %cst_114 = arith.constant dense<0.000000e+00> : vector<8xf32>
      %294 = vector.multi_reduction <add>, %288, %cst_114 [1] : vector<8x32xf32> to vector<8xf32>
      %295 = vector.shape_cast %294 : vector<8xf32> to vector<8x1xf32>
      %cst_115 = arith.constant 3.200000e+01 : f32
      %296 = vector.broadcast %cst_115 : f32 to vector<8x1xf32>
      %297 = arith.divf %295, %296 : vector<8x1xf32>
      %298 = vector.broadcast %297 : vector<8x1xf32> to vector<8x32xf32>
      %299 = arith.subf %288, %298 : vector<8x32xf32>
      %300 = arith.mulf %299, %299 : vector<8x32xf32>
      %cst_116 = arith.constant dense<0.000000e+00> : vector<8xf32>
      %301 = vector.multi_reduction <add>, %300, %cst_116 [1] : vector<8x32xf32> to vector<8xf32>
      %302 = vector.shape_cast %301 : vector<8xf32> to vector<8x1xf32>
      %cst_117 = arith.constant 3.200000e+01 : f32
      %303 = vector.broadcast %cst_117 : f32 to vector<8x1xf32>
      %304 = arith.divf %302, %303 : vector<8x1xf32>
      %cst_118 = arith.constant 9.99999974E-6 : f32
      %305 = vector.broadcast %cst_118 : f32 to vector<8x1xf32>
      %306 = arith.addf %304, %305 : vector<8x1xf32>
      %307 = math.rsqrt %306 : vector<8x1xf32>
      %308 = vector.broadcast %307 : vector<8x1xf32> to vector<8x32xf32>
      %309 = arith.mulf %299, %308 : vector<8x32xf32>
      %310 = vector.broadcast %293 : vector<1x32xf32> to vector<8x32xf32>
      %311 = arith.mulf %309, %310 : vector<8x32xf32>
      %c0_119 = arith.constant 0 : index
      %c0_120 = arith.constant 0 : index
      %312 = vector.load %arg19[%c0_119, %c0_120] : memref<32x128xf32, #tpu.memory_space<vmem>>, vector<32x128xf32>
      %cst_121 = arith.constant dense<0.000000e+00> : vector<8x128xf32>
      %313 = tpu.matmul %311, %312, %cst_121 {dimension_numbers = #tpu.dot_dimension_numbers<[1], [0], [0], [1], [0, 0, 1, 1], [], []>} : vector<8x32xf32>, vector<32x128xf32>, vector<8x128xf32> -> vector<8x128xf32>
      %c0_122 = arith.constant 0 : index
      %c0_123 = arith.constant 0 : index
      %314 = vector.load %arg20[%c0_122, %c0_123] : memref<1x128xf32, #tpu.memory_space<vmem>>, vector<1x128xf32>
      %315 = vector.broadcast %314 : vector<1x128xf32> to vector<8x128xf32>
      %316 = arith.addf %313, %315 : vector<8x128xf32>
      %c0_124 = arith.constant 0 : index
      %c0_125 = arith.constant 0 : index
      %c0_126 = arith.constant 0 : index
      %317 = vector.load %arg21[%c0_124, %c0_125, %c0_126] : memref<1x8x128xf32, #tpu.memory_space<vmem>>, vector<1x8x128xf32>
      %318 = vector.shape_cast %317 : vector<1x8x128xf32> to vector<8x128xf32>
      %319 = vector.shape_cast %316 : vector<8x128xf32> to vector<1x8x128xf32>
      tpu.vector_store %arg21[%c0_124, %c0_125, %c0_126], %319 {strides = array<i32>} : memref<1x8x128xf32, #tpu.memory_space<vmem>>, vector<1x8x128xf32>,
    } else {
    }
    return
  }
  func.func @transform_0(%arg0: i32, %arg1: i32) -> (i32, i32, i32) {
    %c0_i32 = arith.constant 0 : i32
    %c0_i32_0 = arith.constant 0 : i32
    %c0_i32_1 = arith.constant 0 : i32
    return %arg0, %c0_i32, %c0_i32_0 : i32, i32, i32
  }
  func.func @transform_1(%arg0: i32, %arg1: i32) -> (i32, i32) {
    %c0_i32 = arith.constant 0 : i32
    %c0_i32_0 = arith.constant 0 : i32
    %c0_i32_1 = arith.constant 0 : i32
    return %c0_i32, %c0_i32_0 : i32, i32
  }
  func.func @transform_2(%arg0: i32, %arg1: i32) -> (i32, i32) {
    %c0_i32 = arith.constant 0 : i32
    %c0_i32_0 = arith.constant 0 : i32
    %c0_i32_1 = arith.constant 0 : i32
    return %c0_i32, %c0_i32_0 : i32, i32
  }
  func.func @transform_3(%arg0: i32, %arg1: i32) -> (i32, i32) {
    %c0_i32 = arith.constant 0 : i32
    %c0_i32_0 = arith.constant 0 : i32
    %c0_i32_1 = arith.constant 0 : i32
    return %c0_i32, %c0_i32_0 : i32, i32
  }
  func.func @transform_4(%arg0: i32, %arg1: i32) -> (i32, i32, i32) {
    %c0_i32 = arith.constant 0 : i32
    %c0_i32_0 = arith.constant 0 : i32
    %c0_i32_1 = arith.constant 0 : i32
    return %arg0, %c0_i32, %c0_i32_0 : i32, i32, i32
  }
  func.func @transform_5(%arg0: i32, %arg1: i32) -> (i32, i32) {
    %c0_i32 = arith.constant 0 : i32
    %c0_i32_0 = arith.constant 0 : i32
    %c0_i32_1 = arith.constant 0 : i32
    return %c0_i32, %c0_i32_0 : i32, i32
  }
  func.func @transform_6(%arg0: i32, %arg1: i32) -> (i32, i32, i32) {
    %c0_i32 = arith.constant 0 : i32
    %c0_i32_0 = arith.constant 0 : i32
    %c0_i32_1 = arith.constant 0 : i32
    return %arg1, %c0_i32, %c0_i32_0 : i32, i32, i32
  }
  func.func @transform_7(%arg0: i32, %arg1: i32) -> (i32, i32, i32) {
    %c0_i32 = arith.constant 0 : i32
    %c0_i32_0 = arith.constant 0 : i32
    %c0_i32_1 = arith.constant 0 : i32
    return %arg1, %c0_i32, %c0_i32_0 : i32, i32, i32
  }
  func.func @transform_8(%arg0: i32, %arg1: i32) -> (i32, i32, i32) {
    %c0_i32 = arith.constant 0 : i32
    %c0_i32_0 = arith.constant 0 : i32
    %c0_i32_1 = arith.constant 0 : i32
    return %arg1, %c0_i32, %c0_i32_0 : i32, i32, i32
  }
  func.func @transform_9(%arg0: i32, %arg1: i32) -> (i32, i32, i32) {
    %c0_i32 = arith.constant 0 : i32
    %c0_i32_0 = arith.constant 0 : i32
    %c0_i32_1 = arith.constant 0 : i32
    return %arg1, %c0_i32, %c0_i32_0 : i32, i32, i32
  }
  func.func @transform_10(%arg0: i32, %arg1: i32) -> (i32, i32, i32) {
    %c0_i32 = arith.constant 0 : i32
    %c0_i32_0 = arith.constant 0 : i32
    %c0_i32_1 = arith.constant 0 : i32
    return %arg1, %c0_i32, %c0_i32_0 : i32, i32, i32
  }
  func.func @transform_11(%arg0: i32, %arg1: i32) -> (i32, i32, i32) {
    %c0_i32 = arith.constant 0 : i32
    %c0_i32_0 = arith.constant 0 : i32
    %c0_i32_1 = arith.constant 0 : i32
    return %arg1, %c0_i32, %c0_i32_0 : i32, i32, i32
  }
  func.func @transform_12(%arg0: i32, %arg1: i32) -> (i32, i32, i32) {
    %c0_i32 = arith.constant 0 : i32
    %c0_i32_0 = arith.constant 0 : i32
    %c0_i32_1 = arith.constant 0 : i32
    return %arg1, %c0_i32, %c0_i32_0 : i32, i32, i32
  }
  func.func @transform_13(%arg0: i32, %arg1: i32) -> (i32, i32, i32) {
    %c0_i32 = arith.constant 0 : i32
    %c0_i32_0 = arith.constant 0 : i32
    %c0_i32_1 = arith.constant 0 : i32
    return %arg1, %c0_i32, %c0_i32_0 : i32, i32, i32
  }
  func.func @transform_14(%arg0: i32, %arg1: i32) -> (i32, i32, i32) {
    %c0_i32 = arith.constant 0 : i32
    %c0_i32_0 = arith.constant 0 : i32
    %c0_i32_1 = arith.constant 0 : i32
    return %arg1, %c0_i32, %c0_i32_0 : i32, i32, i32
  }
  func.func @transform_15(%arg0: i32, %arg1: i32) -> (i32, i32, i32) {
    %c0_i32 = arith.constant 0 : i32
    %c0_i32_0 = arith.constant 0 : i32
    %c0_i32_1 = arith.constant 0 : i32
    return %arg1, %c0_i32, %c0_i32_0 : i32, i32, i32
  }
  func.func @transform_16(%arg0: i32, %arg1: i32) -> (i32, i32) {
    %c0_i32 = arith.constant 0 : i32
    %c0_i32_0 = arith.constant 0 : i32
    %c0_i32_1 = arith.constant 0 : i32
    return %c0_i32, %c0_i32_0 : i32, i32
  }
  func.func @transform_17(%arg0: i32, %arg1: i32) -> (i32, i32) {
    %c0_i32 = arith.constant 0 : i32
    %c0_i32_0 = arith.constant 0 : i32
    %c0_i32_1 = arith.constant 0 : i32
    return %c0_i32, %c0_i32_0 : i32, i32
  }
  func.func @transform_18(%arg0: i32, %arg1: i32) -> (i32, i32) {
    %c0_i32 = arith.constant 0 : i32
    %c0_i32_0 = arith.constant 0 : i32
    %c0_i32_1 = arith.constant 0 : i32
    return %c0_i32, %c0_i32_0 : i32, i32
  }
  func.func @transform_19(%arg0: i32, %arg1: i32) -> (i32, i32, i32) {
    %c0_i32 = arith.constant 0 : i32
    %c0_i32_0 = arith.constant 0 : i32
    %c0_i32_1 = arith.constant 0 : i32
    return %arg0, %c0_i32, %c0_i32_0 : i32, i32, i32
  }
}

</mosaic_0001>

<llo_original>
// kernel: ts_transformer_forward.2
$region0: #{ts_transformer_forward.2}
  #allocation0 [shape = 'u32[]', space=smem, size = 0x4, offset = 0x4, fixed_abs, tag = 'smem constant byte address 0x4 - core index']
  #allocation1 [shape = 'u32[144,128]{1,0:T(1,128)}', space=vmem, size = 0x12000, scoped, tag = 'internal scratch']
  %s0 = inlined_call_operand.vmem [shape: f32[2,8,5], index: 0, kind: input, shape index: {}]
  %s1 = inlined_call_operand.vmem [shape: f32[5,32], index: 1, kind: input, shape index: {}]
  %s2 = inlined_call_operand.vmem [shape: f32[1,32], index: 2, kind: input, shape index: {}]
  %s3 = inlined_call_operand.vmem [shape: f32[8,32], index: 3, kind: input, shape index: {}]
  %s4 = inlined_call_operand.vmem [shape: f32[2,1,32], index: 4, kind: input, shape index: {}]
  %s5 = inlined_call_operand.vmem [shape: bf16[2,32,96], index: 5, kind: input, shape index: {}]
  %s6 = inlined_call_operand.vmem [shape: bf16[2,32,32], index: 6, kind: input, shape index: {}]
  %s7 = inlined_call_operand.vmem [shape: f32[2,1,32], index: 7, kind: input, shape index: {}]
  %s8 = inlined_call_operand.vmem [shape: bf16[2,32,128], index: 8, kind: input, shape index: {}]
  %s9 = inlined_call_operand.vmem [shape: bf16[2,128,32], index: 9, kind: input, shape index: {}]
  %s10 = inlined_call_operand.vmem [shape: f32[1,32], index: 10, kind: input, shape index: {}]
  %s11 = inlined_call_operand.vmem [shape: f32[2,8,32], index: 11, kind: output, shape index: {}]
  %s12 = sld [smem:[#allocation0]]
  $region89: #{ts_transformer_forward.2} parent=0
    _
  %s14 = ssub.s32 1, %s12
  %s15 = scalar_select 0, %s14, %s12
  loop: start=0, step=1, limit=6
  $region2: #{ts_transformer_forward.2} parent=0 // loop_pre_header
    _
  $region3: #{ts_transformer_forward.2} parent=0 // loop_header
    %s17 = sphi 0, %s21
    %p18 = scmp.ge.s32.totalorder %s17, 6
    %s24 = sphi 0, %s36
    %s25 = sphi 0, %s32
    %s26 = sphi 0, %s24
    %s27 = sphi 0, %s25
    %s28 = sphi 0, %s26
    %s29 = sphi 0, %s27
    %s39 = sphi 0, %s41
    %s42 = sphi 0, %s39
    %s43 = sphi 0, %s42
    %s59 = sphi 0, %s43
    %s63 = sphi 0, %s63
    %s65 = sphi 0, %s63
    %s66 = sphi 0, %s65
    %s80 = sphi 0, %s66
    %s84 = sphi 0, %s84
    %s86 = sphi 0, %s84
    %s87 = sphi 0, %s86
    %s101 = sphi 0, %s87
    %s105 = sphi 0, %s105
    %s107 = sphi 0, %s105
    %s108 = sphi 0, %s107
    %s122 = sphi 0, %s108
    %s128 = sphi 0, %s130
    %s131 = sphi 0, %s128
    %s132 = sphi 0, %s131
    %s148 = sphi 0, %s132
    %s154 = sphi 0, %s156
    %s157 = sphi 0, %s154
    %s158 = sphi 0, %s157
    %s174 = sphi 0, %s158
    %s180 = sphi 0, %s182
    %s183 = sphi 0, %s180
    %s184 = sphi 0, %s183
    %s200 = sphi 0, %s184
    %s206 = sphi 0, %s208
    %s209 = sphi 0, %s206
    %s210 = sphi 0, %s209
    %s226 = sphi 0, %s210
    %s232 = sphi 0, %s234
    %s235 = sphi 0, %s232
    %s236 = sphi 0, %s235
    %s252 = sphi 0, %s236
    %s258 = sphi 0, %s260
    %s261 = sphi 0, %s258
    %s262 = sphi 0, %s261
    %s278 = sphi 0, %s262
    %s282 = sphi 0, %s282
    %s284 = sphi 0, %s282
    %s285 = sphi 0, %s284
    %s299 = sphi 0, %s285
    %s305 = sphi 0, %s307
    %s308 = sphi 0, %s305
    %s309 = sphi 0, %s308
    %s325 = sphi 0, %s309
  $region4: #{ts_transformer_forward.2} parent=0 // loop_header_branch
    %20 = sbr.rel (%p18) target = $region8
  $region5: #{ts_transformer_forward.2} parent=0 // loop_body
    %s22 = ssub.s32 %s17, 1
    %s23 = ssub.s32 %s17, 2
    %s30 = sadd.s32 1, %s25
    %p31 = scmp.ge.s32.totalorder %s30, 2
    %s32 = scalar_select %p31, 0, %s30
    %s33 = sadd.s32 1, %s24
    %s34 = scalar_select %p31, %s33, %s24
    %p35 = scmp.ge.s32.totalorder %s34, 2
    %s36 = scalar_select %p35, 0, %s34
    %s37 = ssub.s32 %s24, %s36
    %p38 = scmp.eq.s32.totalorder %s37, 0
    %s40 = sadd.s32 %s39, 1
    %s41 = scalar_select %p38, %s39, %s40
    %p44 = pneg %p38
    %p45 = scmp.eq.s32.totalorder %s17, 3
    %p46 = por %p44, %p45
    %p47 = scmp.ne.s32.totalorder %s39, %s42
    %p48 = scmp.eq.s32.totalorder %s17, 0
    %p49 = por %p47, %p48
    %p50 = scmp.ne.s32.totalorder %s39, %s42
    %p51 = scmp.eq.s32.totalorder %s22, 3
    %p52 = por %p50, %p51
    %p53 = scmp.ne.s32.totalorder %s42, %s43
    %p54 = scmp.eq.s32.totalorder %s22, 0
    %p55 = por %p53, %p54
    %p56 = scmp.ne.s32.totalorder %s42, %s43
    %p57 = scmp.eq.s32.totalorder %s23, 3
    %p58 = por %p56, %p57
    %p60 = scmp.ne.s32.totalorder %s43, %s59
    %p61 = scmp.eq.s32.totalorder %s23, 0
    %p62 = por %p60, %p61
    %s64 = sadd.s32 %s63, 1
    %p67 = scmp.eq.s32.totalorder %s17, 3
    %p68 = scmp.ne.s32.totalorder %s63, %s65
    %p69 = scmp.eq.s32.totalorder %s17, 0
    %p70 = por %p68, %p69
    %p71 = scmp.ne.s32.totalorder %s63, %s65
    %p72 = scmp.eq.s32.totalorder %s22, 3
    %p73 = por %p71, %p72
    %p74 = scmp.ne.s32.totalorder %s65, %s66
    %p75 = scmp.eq.s32.totalorder %s22, 0
    %p76 = por %p74, %p75
    %p77 = scmp.ne.s32.totalorder %s65, %s66
    %p78 = scmp.eq.s32.totalorder %s23, 3
    %p79 = por %p77, %p78
    %p81 = scmp.ne.s32.totalorder %s66, %s80
    %p82 = scmp.eq.s32.totalorder %s23, 0
    %p83 = por %p81, %p82
    %s85 = sadd.s32 %s84, 1
    %p88 = scmp.eq.s32.totalorder %s17, 3
    %p89 = scmp.ne.s32.totalorder %s84, %s86
    %p90 = scmp.eq.s32.totalorder %s17, 0
    %p91 = por %p89, %p90
    %p92 = scmp.ne.s32.totalorder %s84, %s86
    %p93 = scmp.eq.s32.totalorder %s22, 3
    %p94 = por %p92, %p93
    %p95 = scmp.ne.s32.totalorder %s86, %s87
    %p96 = scmp.eq.s32.totalorder %s22, 0
    %p97 = por %p95, %p96
    %p98 = scmp.ne.s32.totalorder %s86, %s87
    %p99 = scmp.eq.s32.totalorder %s23, 3
    %p100 = por %p98, %p99
    %p102 = scmp.ne.s32.totalorder %s87, %s101
    %p103 = scmp.eq.s32.totalorder %s23, 0
    %p104 = por %p102, %p103
    %s106 = sadd.s32 %s105, 1
    %p109 = scmp.eq.s32.totalorder %s17, 3
    %p110 = scmp.ne.s32.totalorder %s105, %s107
    %p111 = scmp.eq.s32.totalorder %s17, 0
    %p112 = por %p110, %p111
    %p113 = scmp.ne.s32.totalorder %s105, %s107
    %p114 = scmp.eq.s32.totalorder %s22, 3
    %p115 = por %p113, %p114
    %p116 = scmp.ne.s32.totalorder %s107, %s108
    %p117 = scmp.eq.s32.totalorder %s22, 0
    %p118 = por %p116, %p117
    %p119 = scmp.ne.s32.totalorder %s107, %s108
    %p120 = scmp.eq.s32.totalorder %s23, 3
    %p121 = por %p119, %p120
    %p123 = scmp.ne.s32.totalorder %s108, %s122
    %p124 = scmp.eq.s32.totalorder %s23, 0
    %p125 = por %p123, %p124
    %s126 = ssub.s32 %s25, %s32
    %p127 = scmp.eq.s32.totalorder %s126, 0
    %s129 = sadd.s32 %s128, 1
    %s130 = scalar_select %p127, %s128, %s129
    %p133 = pneg %p127
    %p134 = scmp.eq.s32.totalorder %s17, 3
    %p135 = por %p133, %p134
    %p136 = scmp.ne.s32.totalorder %s128, %s131
    %p137 = scmp.eq.s32.totalorder %s17, 0
    %p138 = por %p136, %p137
    %p139 = scmp.ne.s32.totalorder %s128, %s131
    %p140 = scmp.eq.s32.totalorder %s22, 3
    %p141 = por %p139, %p140
    %p142 = scmp.ne.s32.totalorder %s131, %s132
    %p143 = scmp.eq.s32.totalorder %s22, 0
    %p144 = por %p142, %p143
    %p145 = scmp.ne.s32.totalorder %s131, %s132
    %p146 = scmp.eq.s32.totalorder %s23, 3
    %p147 = por %p145, %p146
    %p149 = scmp.ne.s32.totalorder %s132, %s148
    %p150 = scmp.eq.s32.totalorder %s23, 0
    %p151 = por %p149, %p150
    %s152 = ssub.s32 %s25, %s32
    %p153 = scmp.eq.s32.totalorder %s152, 0
    %s155 = sadd.s32 %s154, 1
    %s156 = scalar_select %p153, %s154, %s155
    %p159 = pneg %p153
    %p160 = scmp.eq.s32.totalorder %s17, 3
    %p161 = por %p159, %p160
    %p162 = scmp.ne.s32.totalorder %s154, %s157
    %p163 = scmp.eq.s32.totalorder %s17, 0
    %p164 = por %p162, %p163
    %p165 = scmp.ne.s32.totalorder %s154, %s157
    %p166 = scmp.eq.s32.totalorder %s22, 3
    %p167 = por %p165, %p166
    %p168 = scmp.ne.s32.totalorder %s157, %s158
    %p169 = scmp.eq.s32.totalorder %s22, 0
    %p170 = por %p168, %p169
    %p171 = scmp.ne.s32.totalorder %s157, %s158
    %p172 = scmp.eq.s32.totalorder %s23, 3
    %p173 = por %p171, %p172
    %p175 = scmp.ne.s32.totalorder %s158, %s174
    %p176 = scmp.eq.s32.totalorder %s23, 0
    %p177 = por %p175, %p176
    %s178 = ssub.s32 %s25, %s32
    %p179 = scmp.eq.s32.totalorder %s178, 0
    %s181 = sadd.s32 %s180, 1
    %s182 = scalar_select %p179, %s180, %s181
    %p185 = pneg %p179
    %p186 = scmp.eq.s32.totalorder %s17, 3
    %p187 = por %p185, %p186
    %p188 = scmp.ne.s32.totalorder %s180, %s183
    %p189 = scmp.eq.s32.totalorder %s17, 0
    %p190 = por %p188, %p189
    %p191 = scmp.ne.s32.totalorder %s180, %s183
    %p192 = scmp.eq.s32.totalorder %s22, 3
    %p193 = por %p191, %p192
    %p194 = scmp.ne.s32.totalorder %s183, %s184
    %p195 = scmp.eq.s32.totalorder %s22, 0
    %p196 = por %p194, %p195
    %p197 = scmp.ne.s32.totalorder %s183, %s184
    %p198 = scmp.eq.s32.totalorder %s23, 3
    %p199 = por %p197, %p198
    %p201 = scmp.ne.s32.totalorder %s184, %s200
    %p202 = scmp.eq.s32.totalorder %s23, 0
    %p203 = por %p201, %p202
    %s204 = ssub.s32 %s25, %s32
    %p205 = scmp.eq.s32.totalorder %s204, 0
    %s207 = sadd.s32 %s206, 1
    %s208 = scalar_select %p205, %s206, %s207
    %p211 = pneg %p205
    %p212 = scmp.eq.s32.totalorder %s17, 3
    %p213 = por %p211, %p212
    %p214 = scmp.ne.s32.totalorder %s206, %s209
    %p215 = scmp.eq.s32.totalorder %s17, 0
    %p216 = por %p214, %p215
    %p217 = scmp.ne.s32.totalorder %s206, %s209
    %p218 = scmp.eq.s32.totalorder %s22, 3
    %p219 = por %p217, %p218
    %p220 = scmp.ne.s32.totalorder %s209, %s210
    %p221 = scmp.eq.s32.totalorder %s22, 0
    %p222 = por %p220, %p221
    %p223 = scmp.ne.s32.totalorder %s209, %s210
    %p224 = scmp.eq.s32.totalorder %s23, 3
    %p225 = por %p223, %p224
    %p227 = scmp.ne.s32.totalorder %s210, %s226
    %p228 = scmp.eq.s32.totalorder %s23, 0
    %p229 = por %p227, %p228
    %s230 = ssub.s32 %s25, %s32
    %p231 = scmp.eq.s32.totalorder %s230, 0
    %s233 = sadd.s32 %s232, 1
    %s234 = scalar_select %p231, %s232, %s233
    %p237 = pneg %p231
    %p238 = scmp.eq.s32.totalorder %s17, 3
    %p239 = por %p237, %p238
    %p240 = scmp.ne.s32.totalorder %s232, %s235
    %p241 = scmp.eq.s32.totalorder %s17, 0
    %p242 = por %p240, %p241
    %p243 = scmp.ne.s32.totalorder %s232, %s235
    %p244 = scmp.eq.s32.totalorder %s22, 3
    %p245 = por %p243, %p244
    %p246 = scmp.ne.s32.totalorder %s235, %s236
    %p247 = scmp.eq.s32.totalorder %s22, 0
    %p248 = por %p246, %p247
    %p249 = scmp.ne.s32.totalorder %s235, %s236
    %p250 = scmp.eq.s32.totalorder %s23, 3
    %p251 = por %p249, %p250
    %p253 = scmp.ne.s32.totalorder %s236, %s252
    %p254 = scmp.eq.s32.totalorder %s23, 0
    %p255 = por %p253, %p254
    %s256 = ssub.s32 %s25, %s32
    %p257 = scmp.eq.s32.totalorder %s256, 0
    %s259 = sadd.s32 %s258, 1
    %s260 = scalar_select %p257, %s258, %s259
    %p263 = pneg %p257
    %p264 = scmp.eq.s32.totalorder %s17, 3
    %p265 = por %p263, %p264
    %p266 = scmp.ne.s32.totalorder %s258, %s261
    %p267 = scmp.eq.s32.totalorder %s17, 0
    %p268 = por %p266, %p267
    %p269 = scmp.ne.s32.totalorder %s258, %s261
    %p270 = scmp.eq.s32.totalorder %s22, 3
    %p271 = por %p269, %p270
    %p272 = scmp.ne.s32.totalorder %s261, %s262
    %p273 = scmp.eq.s32.totalorder %s22, 0
    %p274 = por %p272, %p273
    %p275 = scmp.ne.s32.totalorder %s261, %s262
    %p276 = scmp.eq.s32.totalorder %s23, 3
    %p277 = por %p275, %p276
    %p279 = scmp.ne.s32.totalorder %s262, %s278
    %p280 = scmp.eq.s32.totalorder %s23, 0
    %p281 = por %p279, %p280
    %s283 = sadd.s32 %s282, 1
    %p286 = scmp.eq.s32.totalorder %s17, 3
    %p287 = scmp.ne.s32.totalorder %s282, %s284
    %p288 = scmp.eq.s32.totalorder %s17, 0
    %p289 = por %p287, %p288
    %p290 = scmp.ne.s32.totalorder %s282, %s284
    %p291 = scmp.eq.s32.totalorder %s22, 3
    %p292 = por %p290, %p291
    %p293 = scmp.ne.s32.totalorder %s284, %s285
    %p294 = scmp.eq.s32.totalorder %s22, 0
    %p295 = por %p293, %p294
    %p296 = scmp.ne.s32.totalorder %s284, %s285
    %p297 = scmp.eq.s32.totalorder %s23, 3
    %p298 = por %p296, %p297
    %p300 = scmp.ne.s32.totalorder %s285, %s299
    %p301 = scmp.eq.s32.totalorder %s23, 0
    %p302 = por %p300, %p301
    %s303 = ssub.s32 %s24, %s36
    %p304 = scmp.eq.s32.totalorder %s303, 0
    %s306 = sadd.s32 %s305, 1
    %s307 = scalar_select %p304, %s305, %s306
    %p310 = pneg %p304
    %p311 = scmp.eq.s32.totalorder %s17, 3
    %p312 = por %p310, %p311
    %p313 = scmp.ne.s32.totalorder %s305, %s308
    %p314 = scmp.eq.s32.totalorder %s17, 0
    %p315 = por %p313, %p314
    %p316 = scmp.ne.s32.totalorder %s305, %s308
    %p317 = scmp.eq.s32.totalorder %s22, 3
    %p318 = por %p316, %p317
    %p319 = scmp.ne.s32.totalorder %s308, %s309
    %p320 = scmp.eq.s32.totalorder %s22, 0
    %p321 = por %p319, %p320
    %p322 = scmp.ne.s32.totalorder %s308, %s309
    %p323 = scmp.eq.s32.totalorder %s23, 3
    %p324 = por %p322, %p323
    %p326 = scmp.ne.s32.totalorder %s309, %s325
    %p327 = scmp.eq.s32.totalorder %s23, 0
    %p328 = por %p326, %p327
    %p329 = scmp.le.s32.totalorder 1, %s17
    %p330 = scmp.lt.s32.totalorder %s17, 5
    %p331 = pnand %p329, %p330
    %p332 = pneg %p331
    // Predicated region
    $region9: #{ts_transformer_forward.2} parent=5 // pred_check
      _
    $region10: #{ts_transformer_forward.2} parent=5 // pred_check_branch
      %334 = sbr.rel (%p331) target = $region12
    $region11: #{ts_transformer_forward.2} parent=5 // pred_region
      %s335 = ssub.s32 %s17, 1
      // Predicated region
      $region13: #{ts_transformer_forward.2} parent=11 // pred_check
        %p336 = pneg %p76
      $region14: #{ts_transformer_forward.2} parent=11 // pred_check_branch
        %338 = sbr.rel (%p336) target = $region16
      $region15: #{ts_transformer_forward.2} parent=11 // pred_region
        _
      $region16: #{ts_transformer_forward.2} parent=11 // pred_fallthru
        _
      // Predicated region
      $region17: #{ts_transformer_forward.2} parent=11 // pred_check
        %p339 = pneg %p97
      $region18: #{ts_transformer_forward.2} parent=11 // pred_check_branch
        %341 = sbr.rel (%p339) target = $region20
      $region19: #{ts_transformer_forward.2} parent=11 // pred_region
        _
      $region20: #{ts_transformer_forward.2} parent=11 // pred_fallthru
        _
      // Predicated region
      $region21: #{ts_transformer_forward.2} parent=11 // pred_check
        %p342 = pneg %p118
      $region22: #{ts_transformer_forward.2} parent=11 // pred_check_branch
        %344 = sbr.rel (%p342) target = $region24
      $region23: #{ts_transformer_forward.2} parent=11 // pred_region
        _
      $region24: #{ts_transformer_forward.2} parent=11 // pred_fallthru
        _
      // Predicated region
      $region25: #{ts_transformer_forward.2} parent=11 // pred_check
        %p345 = pneg %p295
      $region26: #{ts_transformer_forward.2} parent=11 // pred_check_branch
        %347 = sbr.rel (%p345) target = $region28
      $region27: #{ts_transformer_forward.2} parent=11 // pred_region
        _
      $region28: #{ts_transformer_forward.2} parent=11 // pred_fallthru
        _
    $region12: #{ts_transformer_forward.2} parent=5 // pred_fallthru
      _
    %p348 = scmp.lt.s32.totalorder %s17, 4
    // Predicated region
    $region29: #{ts_transformer_forward.2} parent=5 // pred_check
      %p349 = pneg %p348
    $region30: #{ts_transformer_forward.2} parent=5 // pred_check_branch
      %351 = sbr.rel (%p349) target = $region32
    $region31: #{ts_transformer_forward.2} parent=5 // pred_region
      // Predicated region
      $region33: #{ts_transformer_forward.2} parent=31 // pred_check
        %p352 = pneg %p49
      $region34: #{ts_transformer_forward.2} parent=31 // pred_check_branch
        %354 = sbr.rel (%p352) target = $region36
      $region35: #{ts_transformer_forward.2} parent=31 // pred_region
        %p355 = scmp.lt.s32.totalorder %s24, 1
        %s356 = scalar_select %p355, %s24, 1
        %s357 = smul.addr %s356, 8
        %s358 = scalar_lea.vmem %s0, %s357
      $region36: #{ts_transformer_forward.2} parent=31 // pred_fallthru
        _
      // Predicated region
      $region37: #{ts_transformer_forward.2} parent=31 // pred_check
        %p359 = pneg %p138
      $region38: #{ts_transformer_forward.2} parent=31 // pred_check_branch
        %361 = sbr.rel (%p359) target = $region40
      $region39: #{ts_transformer_forward.2} parent=31 // pred_region
        %p362 = scmp.lt.s32.totalorder %s25, 1
        %s363 = scalar_select %p362, %s25, 1
        %s364 = scalar_lea.vmem %s4, %s363
      $region40: #{ts_transformer_forward.2} parent=31 // pred_fallthru
        _
      // Predicated region
      $region41: #{ts_transformer_forward.2} parent=31 // pred_check
        %p365 = pneg %p164
      $region42: #{ts_transformer_forward.2} parent=31 // pred_check_branch
        %367 = sbr.rel (%p365) target = $region44
      $region43: #{ts_transformer_forward.2} parent=31 // pred_region
        %p368 = scmp.lt.s32.totalorder %s25, 1
        %s369 = scalar_select %p368, %s25, 1
        %s370 = smul.addr %s369, 4
        %s371 = smul.addr %s370, 4
        %s372 = scalar_lea.vmem %s5, %s371
      $region44: #{ts_transformer_forward.2} parent=31 // pred_fallthru
        _
      // Predicated region
      $region45: #{ts_transformer_forward.2} parent=31 // pred_check
        %p373 = pneg %p190
      $region46: #{ts_transformer_forward.2} parent=31 // pred_check_branch
        %375 = sbr.rel (%p373) target = $region48
      $region47: #{ts_transformer_forward.2} parent=31 // pred_region
        %p376 = scmp.lt.s32.totalorder %s25, 1
        %s377 = scalar_select %p376, %s25, 1
        %s378 = smul.addr %s377, 4
        %s379 = smul.addr %s378, 4
        %s380 = scalar_lea.vmem %s6, %s379
      $region48: #{ts_transformer_forward.2} parent=31 // pred_fallthru
        _
      // Predicated region
      $region49: #{ts_transformer_forward.2} parent=31 // pred_check
        %p381 = pneg %p216
      $region50: #{ts_transformer_forward.2} parent=31 // pred_check_branch
        %383 = sbr.rel (%p381) target = $region52
      $region51: #{ts_transformer_forward.2} parent=31 // pred_region
        %p384 = scmp.lt.s32.totalorder %s25, 1
        %s385 = scalar_select %p384, %s25, 1
        %s386 = scalar_lea.vmem %s7, %s385
      $region52: #{ts_transformer_forward.2} parent=31 // pred_fallthru
        _
      // Predicated region
      $region53: #{ts_transformer_forward.2} parent=31 // pred_check
        %p387 = pneg %p242
      $region54: #{ts_transformer_forward.2} parent=31 // pred_check_branch
        %389 = sbr.rel (%p387) target = $region56
      $region55: #{ts_transformer_forward.2} parent=31 // pred_region
        %p390 = scmp.lt.s32.totalorder %s25, 1
        %s391 = scalar_select %p390, %s25, 1
        %s392 = smul.addr %s391, 4
        %s393 = smul.addr %s392, 4
        %s394 = scalar_lea.vmem %s8, %s393
      $region56: #{ts_transformer_forward.2} parent=31 // pred_fallthru
        _
      // Predicated region
      $region57: #{ts_transformer_forward.2} parent=31 // pred_check
        %p395 = pneg %p268
      $region58: #{ts_transformer_forward.2} parent=31 // pred_check_branch
        %397 = sbr.rel (%p395) target = $region60
      $region59: #{ts_transformer_forward.2} parent=31 // pred_region
        %p398 = scmp.lt.s32.totalorder %s25, 1
        %s399 = scalar_select %p398, %s25, 1
        %s400 = smul.addr %s399, 16
        %s401 = smul.addr %s400, 4
        %s402 = scalar_lea.vmem %s9, %s401
      $region60: #{ts_transformer_forward.2} parent=31 // pred_fallthru
        _
    $region32: #{ts_transformer_forward.2} parent=5 // pred_fallthru
      _
    %p403 = scmp.le.s32.totalorder 1, %s17
    %p404 = scmp.lt.s32.totalorder %s17, 5
    %p405 = pnand %p403, %p404
    %p406 = pneg %p405
    // Predicated region
    $region61: #{ts_transformer_forward.2} parent=5 // pred_check
      _
    $region62: #{ts_transformer_forward.2} parent=5 // pred_check_branch
      %408 = sbr.rel (%p405) target = $region64
    $region63: #{ts_transformer_forward.2} parent=5 // pred_region
      %s409 = ssub.s32 %s17, 1
      %p410 = scmp.lt.s32.totalorder %s26, 1
      %s411 = scalar_select %p410, %s26, 1
      %s412 = smul.addr %s411, 8
      %s413 = scalar_lea.vmem %s0, %s412
      %p414 = pneg %p55
      %p415 = pneg %p52
      %p416 = pneg %p76
      %p417 = pneg %p73
      %p418 = pneg %p97
      %p419 = pneg %p94
      %p420 = pneg %p118
      %p421 = pneg %p115
      %p422 = scmp.lt.s32.totalorder %s27, 1
      %s423 = scalar_select %p422, %s27, 1
      %s424 = scalar_lea.vmem %s4, %s423
      %p425 = pneg %p144
      %p426 = pneg %p141
      %p427 = scmp.lt.s32.totalorder %s27, 1
      %s428 = scalar_select %p427, %s27, 1
      %s429 = smul.addr %s428, 4
      %s430 = smul.addr %s429, 4
      %s431 = scalar_lea.vmem %s5, %s430
      %p432 = pneg %p170
      %p433 = pneg %p167
      %p434 = scmp.lt.s32.totalorder %s27, 1
      %s435 = scalar_select %p434, %s27, 1
      %s436 = smul.addr %s435, 4
      %s437 = smul.addr %s436, 4
      %s438 = scalar_lea.vmem %s6, %s437
      %p439 = pneg %p196
      %p440 = pneg %p193
      %p441 = scmp.lt.s32.totalorder %s27, 1
      %s442 = scalar_select %p441, %s27, 1
      %s443 = scalar_lea.vmem %s7, %s442
      %p444 = pneg %p222
      %p445 = pneg %p219
      %p446 = scmp.lt.s32.totalorder %s27, 1
      %s447 = scalar_select %p446, %s27, 1
      %s448 = smul.addr %s447, 4
      %s449 = smul.addr %s448, 4
      %s450 = scalar_lea.vmem %s8, %s449
      %p451 = pneg %p248
      %p452 = pneg %p245
      %p453 = scmp.lt.s32.totalorder %s27, 1
      %s454 = scalar_select %p453, %s27, 1
      %s455 = smul.addr %s454, 16
      %s456 = smul.addr %s455, 4
      %s457 = scalar_lea.vmem %s9, %s456
      %p458 = pneg %p274
      %p459 = pneg %p271
      %p460 = pneg %p295
      %p461 = pneg %p292
      %p462 = pneg %p321
      %p463 = pneg %p318
      %p464 = scmp.lt.s32.totalorder %s26, 1
      %s465 = scalar_select %p464, %s26, 1
      %s466 = smul.addr %s465, 8
      %s467 = scalar_lea.vmem %s11, %s466
      %p468 = scmp.lt.s32.totalorder %s26, 1
      %s469 = scalar_select %p468, %s26, 1
      %s470 = smul.addr %s469, 8
      %s471 = scalar_lea.vmem %s0, %s470
      %p472 = scmp.lt.s32.totalorder %s27, 1
      %s473 = scalar_select %p472, %s27, 1
      %s474 = scalar_lea.vmem %s4, %s473
      %p475 = scmp.lt.s32.totalorder %s27, 1
      %s476 = scalar_select %p475, %s27, 1
      %s477 = smul.addr %s476, 4
      %s478 = smul.addr %s477, 4
      %s479 = scalar_lea.vmem %s5, %s478
      %p480 = scmp.lt.s32.totalorder %s27, 1
      %s481 = scalar_select %p480, %s27, 1
      %s482 = smul.addr %s481, 4
      %s483 = smul.addr %s482, 4
      %s484 = scalar_lea.vmem %s6, %s483
      %p485 = scmp.lt.s32.totalorder %s27, 1
      %s486 = scalar_select %p485, %s27, 1
      %s487 = scalar_lea.vmem %s7, %s486
      %p488 = scmp.lt.s32.totalorder %s27, 1
      %s489 = scalar_select %p488, %s27, 1
      %s490 = smul.addr %s489, 4
      %s491 = smul.addr %s490, 4
      %s492 = scalar_lea.vmem %s8, %s491
      %p493 = scmp.lt.s32.totalorder %s27, 1
      %s494 = scalar_select %p493, %s27, 1
      %s495 = smul.addr %s494, 16
      %s496 = smul.addr %s495, 4
      %s497 = scalar_lea.vmem %s9, %s496
      %p498 = scmp.lt.s32.totalorder %s26, 1
      %s499 = scalar_select %p498, %s26, 1
      %s500 = smul.addr %s499, 8
      %s501 = scalar_lea.vmem %s11, %s500
      %p503 = scmp.eq.s32.totalorder %s27, 0
      // Predicated region
      $region65: #{ts_transformer_forward.2} parent=63 // pred_check
        %p504 = pneg %p503
      $region66: #{ts_transformer_forward.2} parent=63 // pred_check_branch
        %506 = sbr.rel (%p504) target = $region68
      $region67: #{ts_transformer_forward.2} parent=63 // pred_region
        %v507 = vld [vmem:[%s471] sm:$0xff]
        %v508 = vld [vmem:[%s1] sm:$0x1f]
        %v509 = vld [vmem:[%s2] sm:$0x1]
        %v511 = vlaneseq
        %v512 = vshrl.u32 %v511, 7
        %v513 = vsub.s32 0, %v512
        %v514 = vrot.slane %v509, %v513
        %vm516 = vcmask 39936
        %v518 = vsel %vm516, %v507, 0
        %vm520 = vcmask 1044480
        %v522 = vsel %vm520, %v508, 0
        %524 = vmatprep.subr.mxu0 0.0
        %525 = vmatpush1.msra.mxu0 %v522
        %526 = vmatprep.subr.mxu0 0.0
        %527 = vmatpush1.msra.mxu0 0.0
        %528 = vmatprep.subr.mxu0 0.0
        %529 = vmatpush1.msra.mxu0 0.0
        %530 = vmatprep.subr.mxu0 0.0
        %531 = vmatpush1.msra.mxu0 0.0
        %532 = vmatprep.subr.mxu0 0.0
        %533 = vmatpush1.msra.mxu0 0.0
        %534 = vmatprep.subr.mxu0 0.0
        %535 = vmatpush1.msra.mxu0 0.0
        %536 = vmatprep.subr.mxu0 0.0
        %537 = vmatpush1.msra.mxu0 0.0
        %538 = vmatprep.subr.mxu0 0.0
        %539 = vmatpush1.msra.mxu0 0.0
        %540 = vmatprep.subr.mxu0 0.0
        %541 = vmatpush1.msra.mxu0 0.0
        %542 = vmatprep.subr.mxu0 0.0
        %543 = vmatpush1.msra.mxu0 0.0
        %544 = vmatprep.subr.mxu0 0.0
        %545 = vmatpush1.msra.mxu0 0.0
        %546 = vmatprep.subr.mxu0 0.0
        %547 = vmatpush1.msra.mxu0 0.0
        %548 = vmatprep.subr.mxu0 0.0
        %549 = vmatpush1.msra.mxu0 0.0
        %550 = vmatprep.subr.mxu0 0.0
        %551 = vmatpush1.msra.mxu0 0.0
        %552 = vmatprep.subr.mxu0 0.0
        %553 = vmatpush1.msra.mxu0 0.0
        %554 = vmatprep.subr.mxu0 0.0
        %555 = vmatpush1.msra.mxu0 0.0
        %556 = vmatprep.subr.mxu0 0.0
        %557 = vmatpush1.msra.mxu0 0.0
        %558 = vmatprep.subr.mxu0 0.0
        %559 = vmatpush1.msra.mxu0 0.0
        %560 = vmatprep.subr.mxu0 0.0
        %561 = vmatpush1.msra.mxu0 0.0
        %562 = vmatprep.subr.mxu0 0.0
        %563 = vmatpush1.msra.mxu0 0.0
        %564 = vmatprep.subr.mxu0 0.0
        %565 = vmatpush1.msra.mxu0 0.0
        %566 = vmatprep.subr.mxu0 0.0
        %567 = vmatpush1.msra.mxu0 0.0
        %568 = vmatprep.subr.mxu0 0.0
        %569 = vmatpush1.msra.mxu0 0.0
        %570 = vmatprep.subr.mxu0 0.0
        %571 = vmatpush1.msra.mxu0 0.0
        %572 = vmatprep.subr.mxu0 0.0
        %573 = vmatpush1.msra.mxu0 0.0
        %574 = vmatprep.subr.mxu0 0.0
        %575 = vmatpush1.msra.mxu0 0.0
        %576 = vmatprep.subr.mxu0 0.0
        %577 = vmatpush1.msra.mxu0 0.0
        %578 = vmatprep.subr.mxu0 0.0
        %579 = vmatpush1.msra.mxu0 0.0
        %580 = vmatprep.subr.mxu0 0.0
        %581 = vmatpush1.msra.mxu0 0.0
        %582 = vmatprep.subr.mxu0 0.0
        %583 = vmatpush1.msra.mxu0 0.0
        %584 = vmatprep.subr.mxu0 0.0
        %585 = vmatpush1.msra.mxu0 0.0
        %586 = vmatprep.subr.mxu0 0.0
        %587 = vmatpush1.msra.mxu0 0.0
        %588 = vmatprep.mubr.f32.mxu0 0.0
        %589 = vmatmul.mubr.f32.gmra.mrb[0].mxu0 %v518
        %v590 = vpop.f32.mrb[0].mxu0
        %v591 = vadd.f32 %v514, %v590
        %v592 = vpop.f32.mrb[0].mxu0
        %593 = vdwg.mxu0
        %v594 = vld [vmem:[%s3] sm:$0xff]
        %v595 = vadd.f32 %v591, %v594
        %vm596 = vcmask 261120
        %597 = vst.msk [vmem:[%s501] sm:$0xff] %vm596, %v595
      $region68: #{ts_transformer_forward.2} parent=63 // pred_fallthru
        _
      %v598 = vld [vmem:[%s501] sm:$0xff]
      %v599 = vld [vmem:[%s474] sm:$0x1]
      %vm600 = vcmask 261120
      %v601 = vsel %vm600, %v598, 0.0
      %602 = vadd.xlane.f32.xlu0 %v601
      %v603 = vpop.xlane.xlu0 %602
      %v604 = vrcp.pop 32.0
      %v605 = vmul.f32 %v603, %v604
      %v606 = vsub.f32 %v598, %v605
      %v607 = vmul.f32 %v606, %v606
      %v608 = vsel %vm600, %v607, 0.0
      %609 = vadd.xlane.f32.xlu0 %v608
      %v610 = vpop.xlane.xlu0 %609
      %v611 = vmul.f32 %v610, %v604
      %v612 = vadd.f32 %v611, 1e-05
      %v613 = vrsqrt.pop %v612
      %v614 = vmul.f32 %v606, %v613
      %v616 = vlaneseq
      %v617 = vshrl.u32 %v616, 7
      %v618 = vsub.s32 0, %v617
      %v619 = vrot.slane %v599, %v618
      %v621 = vmul.f32 %v614, %v619
      %v622 = vpack.c.bf16 %v621, %v621
      %v623 = vld [vmem:[%s479] sm:$0xf]
      %v624 = vld [vmem:[%s479 + $0x4] sm:$0xf]
      %v625 = vld [vmem:[%s479 + $0x8] sm:$0xf]
      %v626 = vld [vmem:[%s479 + $0xc] sm:$0xf]
      %v631 = vunpack.c.l.b16 %v623
      %v632 = vunpack.c.l.b16 %v624
      %v633 = vunpack.c.l.b16 %v625
      %v634 = vunpack.c.l.b16 %v626
      %v635 = vpack.c.b16 %v632, %v631
      %v636 = vpack.c.b16 %v634, %v633
      %v640 = vsel %vm600, %v622, 0
      %642 = vmatprep.subr.bf16.mxu0 0
      %643 = vmatpush1.bf16.msra.mxu0 %v635
      %644 = vmatprep.subr.bf16.mxu0 0
      %645 = vmatpush1.bf16.msra.mxu0 %v636
      %646 = vmatprep.subr.bf16.mxu0 0
      %647 = vmatpush1.bf16.msra.mxu0 0
      %648 = vmatprep.subr.bf16.mxu0 0
      %649 = vmatpush1.bf16.msra.mxu0 0
      %650 = vmatprep.subr.bf16.mxu0 0
      %651 = vmatpush1.bf16.msra.mxu0 0
      %652 = vmatprep.subr.bf16.mxu0 0
      %653 = vmatpush1.bf16.msra.mxu0 0
      %654 = vmatprep.subr.bf16.mxu0 0
      %655 = vmatpush1.bf16.msra.mxu0 0
      %656 = vmatprep.subr.bf16.mxu0 0
      %657 = vmatpush1.bf16.msra.mxu0 0
      %658 = vmatprep.subr.bf16.mxu0 0
      %659 = vmatpush1.bf16.msra.mxu0 0
      %660 = vmatprep.subr.bf16.mxu0 0
      %661 = vmatpush1.bf16.msra.mxu0 0
      %662 = vmatprep.subr.bf16.mxu0 0
      %663 = vmatpush1.bf16.msra.mxu0 0
      %664 = vmatprep.subr.bf16.mxu0 0
      %665 = vmatpush1.bf16.msra.mxu0 0
      %666 = vmatprep.subr.bf16.mxu0 0
      %667 = vmatpush1.bf16.msra.mxu0 0
      %668 = vmatprep.subr.bf16.mxu0 0
      %669 = vmatpush1.bf16.msra.mxu0 0
      %670 = vmatprep.subr.bf16.mxu0 0
      %671 = vmatpush1.bf16.msra.mxu0 0
      %672 = vmatprep.subr.bf16.mxu0 0
      %673 = vmatpush1.bf16.msra.mxu0 0
      %674 = vmatprep.mubr.bf16.mxu0 0
      %675 = vmatmul.mubr.bf16.gmra.mrb[0].mxu0 %v640
      %v676 = vpop.f32.mrb[0].mxu0
      %v677 = vadd.f32 0.0, %v676
      %v678 = vpop.f32.mrb[0].mxu0
      %v679 = vpop.f32.mrb[0].mxu0
      %v680 = vpop.f32.mrb[0].mxu0
      %681 = vdwg.mxu0
      %v682 = vld [vmem:[%s484] sm:$0xf]
      %v683 = vld [vmem:[%s484 + $0x4] sm:$0xf]
      %v684 = vld [vmem:[%s484 + $0x8] sm:$0xf]
      %v685 = vld [vmem:[%s484 + $0xc] sm:$0xf]
      %v686 = vpack.c.bf16 %v677, %v677
      %v687 = vunpack.c.l.bf16 %v682
      %v688 = vunpack.c.l.bf16 %v683
      %v689 = vunpack.c.l.bf16 %v684
      %v690 = vunpack.c.l.bf16 %v685
      %692 = vrot.lane.b32.xlu0 %v686, 96
      %v693 = vpop.permute.xlu0 %692
      %vm694 = vcmask 64512
      %v696 = vsel %vm694, %v686, 0
      %v699 = vsel %vm694, %v693, 0
      %701 = vmatprep.subr.bf16.mxu0 0
      %702 = vmatpush1.bf16.xpose.msra.mxu0 %v699
      %703 = vmatprep.subr.bf16.mxu0 0
      %704 = vmatpush1.bf16.xpose.msra.mxu0 0
      %705 = vmatprep.subr.bf16.mxu0 0
      %706 = vmatpush1.bf16.xpose.msra.mxu0 0
      %707 = vmatprep.subr.bf16.mxu0 0
      %708 = vmatpush1.bf16.xpose.msra.mxu0 0
      %709 = vmatprep.subr.bf16.mxu0 0
      %710 = vmatpush1.bf16.xpose.msra.mxu0 0
      %711 = vmatprep.subr.bf16.mxu0 0
      %712 = vmatpush1.bf16.xpose.msra.mxu0 0
      %713 = vmatprep.subr.bf16.mxu0 0
      %714 = vmatpush1.bf16.xpose.msra.mxu0 0
      %715 = vmatprep.subr.bf16.mxu0 0
      %716 = vmatpush1.bf16.xpose.msra.mxu0 0
      %717 = vmatprep.subr.bf16.mxu0 0
      %718 = vmatpush1.bf16.xpose.msra.mxu0 0
      %719 = vmatprep.subr.bf16.mxu0 0
      %720 = vmatpush1.bf16.xpose.msra.mxu0 0
      %721 = vmatprep.subr.bf16.mxu0 0
      %722 = vmatpush1.bf16.xpose.msra.mxu0 0
      %723 = vmatprep.subr.bf16.mxu0 0
      %724 = vmatpush1.bf16.xpose.msra.mxu0 0
      %725 = vmatprep.subr.bf16.mxu0 0
      %726 = vmatpush1.bf16.xpose.msra.mxu0 0
      %727 = vmatprep.subr.bf16.mxu0 0
      %728 = vmatpush1.bf16.xpose.msra.mxu0 0
      %729 = vmatprep.subr.bf16.mxu0 0
      %730 = vmatpush1.bf16.xpose.msra.mxu0 0
      %731 = vmatprep.subr.bf16.mxu0 0
      %732 = vmatpush1.bf16.xpose.msra.mxu0 0
      %733 = vmatprep.mubr.bf16.mxu0 0
      %734 = vmatmul.mubr.bf16.gmra.mrb[0].mxu0 %v696
      %v735 = vpop.f32.mrb[0].mxu0
      %v736 = vadd.f32 0.0, %v735
      %v737 = vpop.f32.mrb[0].mxu0
      %v738 = vpop.f32.mrb[0].mxu0
      %v739 = vpop.f32.mrb[0].mxu0
      %740 = vdwg.mxu0
      %v741 = vmul.f32 %v736, 0.35355338
      %v742 = vsel %vm694, %v741, -inf
      %743 = vmax.xlane.f32.xlu0 %v742
      %v744 = vpop.xlane.xlu0 %743
      %v745 = vsub.f32 %v741, %v744
      %v746 = vmul.f32 %v745, 1.442695
      %v747 = vpow.pop %v746
      %v748 = vsel %vm694, %v747, 0.0
      %749 = vadd.xlane.f32.xlu0 %v748
      %v750 = vpop.xlane.xlu0 %749
      %v751 = vrcp.pop %v750
      %v752 = vmul.f32 %v747, %v751
      %v753 = vpack.c.bf16 %v752, %v752
      %754 = vrot.lane.b32.xlu0 %v686, 64
      %v755 = vpop.permute.xlu0 %754
      %v757 = vsel %vm694, %v753, 0
      %vm759 = vcmask 1043456
      %v761 = vsel %vm759, %v755, 0
      %763 = vmatprep.subr.bf16.mxu0 0
      %764 = vmatpush1.bf16.msra.mxu0 %v761
      %765 = vmatprep.subr.bf16.mxu0 0
      %766 = vmatpush1.bf16.msra.mxu0 0
      %767 = vmatprep.subr.bf16.mxu0 0
      %768 = vmatpush1.bf16.msra.mxu0 0
      %769 = vmatprep.subr.bf16.mxu0 0
      %770 = vmatpush1.bf16.msra.mxu0 0
      %771 = vmatprep.subr.bf16.mxu0 0
      %772 = vmatpush1.bf16.msra.mxu0 0
      %773 = vmatprep.subr.bf16.mxu0 0
      %774 = vmatpush1.bf16.msra.mxu0 0
      %775 = vmatprep.subr.bf16.mxu0 0
      %776 = vmatpush1.bf16.msra.mxu0 0
      %777 = vmatprep.subr.bf16.mxu0 0
      %778 = vmatpush1.bf16.msra.mxu0 0
      %779 = vmatprep.subr.bf16.mxu0 0
      %780 = vmatpush1.bf16.msra.mxu0 0
      %781 = vmatprep.subr.bf16.mxu0 0
      %782 = vmatpush1.bf16.msra.mxu0 0
      %783 = vmatprep.subr.bf16.mxu0 0
      %784 = vmatpush1.bf16.msra.mxu0 0
      %785 = vmatprep.subr.bf16.mxu0 0
      %786 = vmatpush1.bf16.msra.mxu0 0
      %787 = vmatprep.subr.bf16.mxu0 0
      %788 = vmatpush1.bf16.msra.mxu0 0
      %789 = vmatprep.subr.bf16.mxu0 0
      %790 = vmatpush1.bf16.msra.mxu0 0
      %791 = vmatprep.subr.bf16.mxu0 0
      %792 = vmatpush1.bf16.msra.mxu0 0
      %793 = vmatprep.subr.bf16.mxu0 0
      %794 = vmatpush1.bf16.msra.mxu0 0
      %795 = vmatprep.mubr.bf16.mxu0 0
      %796 = vmatmul.mubr.bf16.gmra.mrb[0].mxu0 %v757
      %v797 = vpop.f32.mrb[0].mxu0
      %v798 = vadd.f32 0.0, %v797
      %v799 = vpop.f32.mrb[0].mxu0
      %v800 = vpop.f32.mrb[0].mxu0
      %v801 = vpop.f32.mrb[0].mxu0
      %802 = vdwg.mxu0
      %803 = vrot.lane.b32.xlu0 %v686, 120
      %v804 = vpop.permute.xlu0 %803
      %805 = vrot.lane.b32.xlu0 %v686, 88
      %v806 = vpop.permute.xlu0 %805
      %v808 = vsel %vm694, %v804, 0
      %v811 = vsel %vm694, %v806, 0
      %813 = vmatprep.subr.bf16.mxu0 0
      %814 = vmatpush1.bf16.xpose.msra.mxu0 %v811
      %815 = vmatprep.subr.bf16.mxu0 0
      %816 = vmatpush1.bf16.xpose.msra.mxu0 0
      %817 = vmatprep.subr.bf16.mxu0 0
      %818 = vmatpush1.bf16.xpose.msra.mxu0 0
      %819 = vmatprep.subr.bf16.mxu0 0
      %820 = vmatpush1.bf16.xpose.msra.mxu0 0
      %821 = vmatprep.subr.bf16.mxu0 0
      %822 = vmatpush1.bf16.xpose.msra.mxu0 0
      %823 = vmatprep.subr.bf16.mxu0 0
      %824 = vmatpush1.bf16.xpose.msra.mxu0 0
      %825 = vmatprep.subr.bf16.mxu0 0
      %826 = vmatpush1.bf16.xpose.msra.mxu0 0
      %827 = vmatprep.subr.bf16.mxu0 0
      %828 = vmatpush1.bf16.xpose.msra.mxu0 0
      %829 = vmatprep.subr.bf16.mxu0 0
      %830 = vmatpush1.bf16.xpose.msra.mxu0 0
      %831 = vmatprep.subr.bf16.mxu0 0
      %832 = vmatpush1.bf16.xpose.msra.mxu0 0
      %833 = vmatprep.subr.bf16.mxu0 0
      %834 = vmatpush1.bf16.xpose.msra.mxu0 0
      %835 = vmatprep.subr.bf16.mxu0 0
      %836 = vmatpush1.bf16.xpose.msra.mxu0 0
      %837 = vmatprep.subr.bf16.mxu0 0
      %838 = vmatpush1.bf16.xpose.msra.mxu0 0
      %839 = vmatprep.subr.bf16.mxu0 0
      %840 = vmatpush1.bf16.xpose.msra.mxu0 0
      %841 = vmatprep.subr.bf16.mxu0 0
      %842 = vmatpush1.bf16.xpose.msra.mxu0 0
      %843 = vmatprep.subr.bf16.mxu0 0
      %844 = vmatpush1.bf16.xpose.msra.mxu0 0
      %845 = vmatprep.mubr.bf16.mxu0 0
      %846 = vmatmul.mubr.bf16.gmra.mrb[0].mxu0 %v808
      %v847 = vpop.f32.mrb[0].mxu0
      %v848 = vadd.f32 0.0, %v847
      %v849 = vpop.f32.mrb[0].mxu0
      %v850 = vpop.f32.mrb[0].mxu0
      %v851 = vpop.f32.mrb[0].mxu0
      %852 = vdwg.mxu0
      %v853 = vmul.f32 %v848, 0.35355338
      %v854 = vsel %vm694, %v853, -inf
      %855 = vmax.xlane.f32.xlu0 %v854
      %v856 = vpop.xlane.xlu0 %855
      %v857 = vsub.f32 %v853, %v856
      %v858 = vmul.f32 %v857, 1.442695
      %v859 = vpow.pop %v858
      %v860 = vsel %vm694, %v859, 0.0
      %861 = vadd.xlane.f32.xlu0 %v860
      %v862 = vpop.xlane.xlu0 %861
      %v863 = vrcp.pop %v862
      %v864 = vmul.f32 %v859, %v863
      %v865 = vpack.c.bf16 %v864, %v864
      %866 = vrot.lane.b32.xlu0 %v686, 56
      %v867 = vpop.permute.xlu0 %866
      %v869 = vsel %vm694, %v865, 0
      %v872 = vsel %vm759, %v867, 0
      %874 = vmatprep.subr.bf16.mxu0 0
      %875 = vmatpush1.bf16.msra.mxu0 %v872
      %876 = vmatprep.subr.bf16.mxu0 0
      %877 = vmatpush1.bf16.msra.mxu0 0
      %878 = vmatprep.subr.bf16.mxu0 0
      %879 = vmatpush1.bf16.msra.mxu0 0
      %880 = vmatprep.subr.bf16.mxu0 0
      %881 = vmatpush1.bf16.msra.mxu0 0
      %882 = vmatprep.subr.bf16.mxu0 0
      %883 = vmatpush1.bf16.msra.mxu0 0
      %884 = vmatprep.subr.bf16.mxu0 0
      %885 = vmatpush1.bf16.msra.mxu0 0
      %886 = vmatprep.subr.bf16.mxu0 0
      %887 = vmatpush1.bf16.msra.mxu0 0
      %888 = vmatprep.subr.bf16.mxu0 0
      %889 = vmatpush1.bf16.msra.mxu0 0
      %890 = vmatprep.subr.bf16.mxu0 0
      %891 = vmatpush1.bf16.msra.mxu0 0
      %892 = vmatprep.subr.bf16.mxu0 0
      %893 = vmatpush1.bf16.msra.mxu0 0
      %894 = vmatprep.subr.bf16.mxu0 0
      %895 = vmatpush1.bf16.msra.mxu0 0
      %896 = vmatprep.subr.bf16.mxu0 0
      %897 = vmatpush1.bf16.msra.mxu0 0
      %898 = vmatprep.subr.bf16.mxu0 0
      %899 = vmatpush1.bf16.msra.mxu0 0
      %900 = vmatprep.subr.bf16.mxu0 0
      %901 = vmatpush1.bf16.msra.mxu0 0
      %902 = vmatprep.subr.bf16.mxu0 0
      %903 = vmatpush1.bf16.msra.mxu0 0
      %904 = vmatprep.subr.bf16.mxu0 0
      %905 = vmatpush1.bf16.msra.mxu0 0
      %906 = vmatprep.mubr.bf16.mxu0 0
      %907 = vmatmul.mubr.bf16.gmra.mrb[0].mxu0 %v869
      %v908 = vpop.f32.mrb[0].mxu0
      %v909 = vadd.f32 0.0, %v908
      %v910 = vpop.f32.mrb[0].mxu0
      %v911 = vpop.f32.mrb[0].mxu0
      %v912 = vpop.f32.mrb[0].mxu0
      %913 = vdwg.mxu0
      %v915 = vsel %vm694, %v909, 0
      %917 = vmatprep.subr.mxu0 0.0
      %918 = vmatpush1.msra.mxu0 %v688
      %919 = vmatprep.subr.mxu0 0.0
      %920 = vmatpush1.msra.mxu0 0.0
      %921 = vmatprep.subr.mxu0 0.0
      %922 = vmatpush1.msra.mxu0 0.0
      %923 = vmatprep.subr.mxu0 0.0
      %924 = vmatpush1.msra.mxu0 0.0
      %925 = vmatprep.subr.mxu0 0.0
      %926 = vmatpush1.msra.mxu0 0.0
      %927 = vmatprep.subr.mxu0 0.0
      %928 = vmatpush1.msra.mxu0 0.0
      %929 = vmatprep.subr.mxu0 0.0
      %930 = vmatpush1.msra.mxu0 0.0
      %931 = vmatprep.subr.mxu0 0.0
      %932 = vmatpush1.msra.mxu0 0.0
      %933 = vmatprep.subr.mxu0 0.0
      %934 = vmatpush1.msra.mxu0 0.0
      %935 = vmatprep.subr.mxu0 0.0
      %936 = vmatpush1.msra.mxu0 0.0
      %937 = vmatprep.subr.mxu0 0.0
      %938 = vmatpush1.msra.mxu0 0.0
      %939 = vmatprep.subr.mxu0 0.0
      %940 = vmatpush1.msra.mxu0 0.0
      %941 = vmatprep.subr.mxu0 0.0
      %942 = vmatpush1.msra.mxu0 0.0
      %943 = vmatprep.subr.mxu0 0.0
      %944 = vmatpush1.msra.mxu0 0.0
      %945 = vmatprep.subr.mxu0 0.0
      %946 = vmatpush1.msra.mxu0 0.0
      %947 = vmatprep.subr.mxu0 0.0
      %948 = vmatpush1.msra.mxu0 0.0
      %949 = vmatprep.subr.mxu0 0.0
      %950 = vmatpush1.msra.mxu0 0.0
      %951 = vmatprep.subr.mxu0 0.0
      %952 = vmatpush1.msra.mxu0 0.0
      %953 = vmatprep.subr.mxu0 0.0
      %954 = vmatpush1.msra.mxu0 0.0
      %955 = vmatprep.subr.mxu0 0.0
      %956 = vmatpush1.msra.mxu0 0.0
      %957 = vmatprep.subr.mxu0 0.0
      %958 = vmatpush1.msra.mxu0 0.0
      %959 = vmatprep.subr.mxu0 0.0
      %960 = vmatpush1.msra.mxu0 0.0
      %961 = vmatprep.subr.mxu0 0.0
      %962 = vmatpush1.msra.mxu0 0.0
      %963 = vmatprep.subr.mxu0 0.0
      %964 = vmatpush1.msra.mxu0 0.0
      %965 = vmatprep.subr.mxu0 0.0
      %966 = vmatpush1.msra.mxu0 0.0
      %967 = vmatprep.subr.mxu0 0.0
      %968 = vmatpush1.msra.mxu0 0.0
      %969 = vmatprep.subr.mxu0 0.0
      %970 = vmatpush1.msra.mxu0 0.0
      %971 = vmatprep.subr.mxu0 0.0
      %972 = vmatpush1.msra.mxu0 0.0
      %973 = vmatprep.subr.mxu0 0.0
      %974 = vmatpush1.msra.mxu0 0.0
      %975 = vmatprep.subr.mxu0 0.0
      %976 = vmatpush1.msra.mxu0 0.0
      %977 = vmatprep.subr.mxu0 0.0
      %978 = vmatpush1.msra.mxu0 0.0
      %979 = vmatprep.subr.mxu0 0.0
      %980 = vmatpush1.msra.mxu0 0.0
      %981 = vmatprep.mubr.f32.mxu0 0.0
      %982 = vmatmul.mubr.f32.gmra.mrb[0].mxu0 %v915
      %v983 = vpop.f32.mrb[0].mxu0
      %v984 = vadd.f32 0.0, %v983
      %v985 = vpop.f32.mrb[0].mxu0
      %986 = vdwg.mxu0
      %v988 = vsel %vm694, %v798, 0
      %990 = vmatprep.subr.mxu0 0.0
      %991 = vmatpush1.msra.mxu0 %v687
      %992 = vmatprep.subr.mxu0 0.0
      %993 = vmatpush1.msra.mxu0 0.0
      %994 = vmatprep.subr.mxu0 0.0
      %995 = vmatpush1.msra.mxu0 0.0
      %996 = vmatprep.subr.mxu0 0.0
      %997 = vmatpush1.msra.mxu0 0.0
      %998 = vmatprep.subr.mxu0 0.0
      %999 = vmatpush1.msra.mxu0 0.0
      %1000 = vmatprep.subr.mxu0 0.0
      %1001 = vmatpush1.msra.mxu0 0.0
      %1002 = vmatprep.subr.mxu0 0.0
      %1003 = vmatpush1.msra.mxu0 0.0
      %1004 = vmatprep.subr.mxu0 0.0
      %1005 = vmatpush1.msra.mxu0 0.0
      %1006 = vmatprep.subr.mxu0 0.0
      %1007 = vmatpush1.msra.mxu0 0.0
      %1008 = vmatprep.subr.mxu0 0.0
      %1009 = vmatpush1.msra.mxu0 0.0
      %1010 = vmatprep.subr.mxu0 0.0
      %1011 = vmatpush1.msra.mxu0 0.0
      %1012 = vmatprep.subr.mxu0 0.0
      %1013 = vmatpush1.msra.mxu0 0.0
      %1014 = vmatprep.subr.mxu0 0.0
      %1015 = vmatpush1.msra.mxu0 0.0
      %1016 = vmatprep.subr.mxu0 0.0
      %1017 = vmatpush1.msra.mxu0 0.0
      %1018 = vmatprep.subr.mxu0 0.0
      %1019 = vmatpush1.msra.mxu0 0.0
      %1020 = vmatprep.subr.mxu0 0.0
      %1021 = vmatpush1.msra.mxu0 0.0
      %1022 = vmatprep.subr.mxu0 0.0
      %1023 = vmatpush1.msra.mxu0 0.0
      %1024 = vmatprep.subr.mxu0 0.0
      %1025 = vmatpush1.msra.mxu0 0.0
      %1026 = vmatprep.subr.mxu0 0.0
      %1027 = vmatpush1.msra.mxu0 0.0
      %1028 = vmatprep.subr.mxu0 0.0
      %1029 = vmatpush1.msra.mxu0 0.0
      %1030 = vmatprep.subr.mxu0 0.0
      %1031 = vmatpush1.msra.mxu0 0.0
      %1032 = vmatprep.subr.mxu0 0.0
      %1033 = vmatpush1.msra.mxu0 0.0
      %1034 = vmatprep.subr.mxu0 0.0
      %1035 = vmatpush1.msra.mxu0 0.0
      %1036 = vmatprep.subr.mxu0 0.0
      %1037 = vmatpush1.msra.mxu0 0.0
      %1038 = vmatprep.subr.mxu0 0.0
      %1039 = vmatpush1.msra.mxu0 0.0
      %1040 = vmatprep.subr.mxu0 0.0
      %1041 = vmatpush1.msra.mxu0 0.0
      %1042 = vmatprep.subr.mxu0 0.0
      %1043 = vmatpush1.msra.mxu0 0.0
      %1044 = vmatprep.subr.mxu0 0.0
      %1045 = vmatpush1.msra.mxu0 0.0
      %1046 = vmatprep.subr.mxu0 0.0
      %1047 = vmatpush1.msra.mxu0 0.0
      %1048 = vmatprep.subr.mxu0 0.0
      %1049 = vmatpush1.msra.mxu0 0.0
      %1050 = vmatprep.subr.mxu0 0.0
      %1051 = vmatpush1.msra.mxu0 0.0
      %1052 = vmatprep.subr.mxu0 0.0
      %1053 = vmatpush1.msra.mxu0 0.0
      %1054 = vmatprep.mubr.f32.mxu0 0.0
      %1055 = vmatmul.mubr.f32.gmra.mrb[0].mxu0 %v988
      %v1056 = vpop.f32.mrb[0].mxu0
      %v1057 = vadd.f32 %v984, %v1056
      %v1058 = vpop.f32.mrb[0].mxu0
      %1059 = vdwg.mxu0
      %1060 = vrot.lane.b32.xlu0 %v686, 112
      %v1061 = vpop.permute.xlu0 %1060
      %1062 = vrot.lane.b32.xlu0 %v686, 80
      %v1063 = vpop.permute.xlu0 %1062
      %v1065 = vsel %vm694, %v1061, 0
      %v1068 = vsel %vm694, %v1063, 0
      %1070 = vmatprep.subr.bf16.mxu0 0
      %1071 = vmatpush1.bf16.xpose.msra.mxu0 %v1068
      %1072 = vmatprep.subr.bf16.mxu0 0
      %1073 = vmatpush1.bf16.xpose.msra.mxu0 0
      %1074 = vmatprep.subr.bf16.mxu0 0
      %1075 = vmatpush1.bf16.xpose.msra.mxu0 0
      %1076 = vmatprep.subr.bf16.mxu0 0
      %1077 = vmatpush1.bf16.xpose.msra.mxu0 0
      %1078 = vmatprep.subr.bf16.mxu0 0
      %1079 = vmatpush1.bf16.xpose.msra.mxu0 0
      %1080 = vmatprep.subr.bf16.mxu0 0
      %1081 = vmatpush1.bf16.xpose.msra.mxu0 0
      %1082 = vmatprep.subr.bf16.mxu0 0
      %1083 = vmatpush1.bf16.xpose.msra.mxu0 0
      %1084 = vmatprep.subr.bf16.mxu0 0
      %1085 = vmatpush1.bf16.xpose.msra.mxu0 0
      %1086 = vmatprep.subr.bf16.mxu0 0
      %1087 = vmatpush1.bf16.xpose.msra.mxu0 0
      %1088 = vmatprep.subr.bf16.mxu0 0
      %1089 = vmatpush1.bf16.xpose.msra.mxu0 0
      %1090 = vmatprep.subr.bf16.mxu0 0
      %1091 = vmatpush1.bf16.xpose.msra.mxu0 0
      %1092 = vmatprep.subr.bf16.mxu0 0
      %1093 = vmatpush1.bf16.xpose.msra.mxu0 0
      %1094 = vmatprep.subr.bf16.mxu0 0
      %1095 = vmatpush1.bf16.xpose.msra.mxu0 0
      %1096 = vmatprep.subr.bf16.mxu0 0
      %1097 = vmatpush1.bf16.xpose.msra.mxu0 0
      %1098 = vmatprep.subr.bf16.mxu0 0
      %1099 = vmatpush1.bf16.xpose.msra.mxu0 0
      %1100 = vmatprep.subr.bf16.mxu0 0
      %1101 = vmatpush1.bf16.xpose.msra.mxu0 0
      %1102 = vmatprep.mubr.bf16.mxu0 0
      %1103 = vmatmul.mubr.bf16.gmra.mrb[0].mxu0 %v1065
      %v1104 = vpop.f32.mrb[0].mxu0
      %v1105 = vadd.f32 0.0, %v1104
      %v1106 = vpop.f32.mrb[0].mxu0
      %v1107 = vpop.f32.mrb[0].mxu0
      %v1108 = vpop.f32.mrb[0].mxu0
      %1109 = vdwg.mxu0
      %v1110 = vmul.f32 %v1105, 0.35355338
      %v1111 = vsel %vm694, %v1110, -inf
      %1112 = vmax.xlane.f32.xlu0 %v1111
      %v1113 = vpop.xlane.xlu0 %1112
      %v1114 = vsub.f32 %v1110, %v1113
      %v1115 = vmul.f32 %v1114, 1.442695
      %v1116 = vpow.pop %v1115
      %v1117 = vsel %vm694, %v1116, 0.0
      %1118 = vadd.xlane.f32.xlu0 %v1117
      %v1119 = vpop.xlane.xlu0 %1118
      %v1120 = vrcp.pop %v1119
      %v1121 = vmul.f32 %v1116, %v1120
      %v1122 = vpack.c.bf16 %v1121, %v1121
      %1123 = vrot.lane.b32.xlu0 %v686, 48
      %v1124 = vpop.permute.xlu0 %1123
      %v1126 = vsel %vm694, %v1122, 0
      %v1129 = vsel %vm759, %v1124, 0
      %1131 = vmatprep.subr.bf16.mxu0 0
      %1132 = vmatpush1.bf16.msra.mxu0 %v1129
      %1133 = vmatprep.subr.bf16.mxu0 0
      %1134 = vmatpush1.bf16.msra.mxu0 0
      %1135 = vmatprep.subr.bf16.mxu0 0
      %1136 = vmatpush1.bf16.msra.mxu0 0
      %1137 = vmatprep.subr.bf16.mxu0 0
      %1138 = vmatpush1.bf16.msra.mxu0 0
      %1139 = vmatprep.subr.bf16.mxu0 0
      %1140 = vmatpush1.bf16.msra.mxu0 0
      %1141 = vmatprep.subr.bf16.mxu0 0
      %1142 = vmatpush1.bf16.msra.mxu0 0
      %1143 = vmatprep.subr.bf16.mxu0 0
      %1144 = vmatpush1.bf16.msra.mxu0 0
      %1145 = vmatprep.subr.bf16.mxu0 0
      %1146 = vmatpush1.bf16.msra.mxu0 0
      %1147 = vmatprep.subr.bf16.mxu0 0
      %1148 = vmatpush1.bf16.msra.mxu0 0
      %1149 = vmatprep.subr.bf16.mxu0 0
      %1150 = vmatpush1.bf16.msra.mxu0 0
      %1151 = vmatprep.subr.bf16.mxu0 0
      %1152 = vmatpush1.bf16.msra.mxu0 0
      %1153 = vmatprep.subr.bf16.mxu0 0
      %1154 = vmatpush1.bf16.msra.mxu0 0
      %1155 = vmatprep.subr.bf16.mxu0 0
      %1156 = vmatpush1.bf16.msra.mxu0 0
      %1157 = vmatprep.subr.bf16.mxu0 0
      %1158 = vmatpush1.bf16.msra.mxu0 0
      %1159 = vmatprep.subr.bf16.mxu0 0
      %1160 = vmatpush1.bf16.msra.mxu0 0
      %1161 = vmatprep.subr.bf16.mxu0 0
      %1162 = vmatpush1.bf16.msra.mxu0 0
      %1163 = vmatprep.mubr.bf16.mxu0 0
      %1164 = vmatmul.mubr.bf16.gmra.mrb[0].mxu0 %v1126
      %v1165 = vpop.f32.mrb[0].mxu0
      %v1166 = vadd.f32 0.0, %v1165
      %v1167 = vpop.f32.mrb[0].mxu0
      %v1168 = vpop.f32.mrb[0].mxu0
      %v1169 = vpop.f32.mrb[0].mxu0
      %1170 = vdwg.mxu0
      %v1172 = vsel %vm694, %v1166, 0
      %1174 = vmatprep.subr.mxu0 0.0
      %1175 = vmatpush1.msra.mxu0 %v689
      %1176 = vmatprep.subr.mxu0 0.0
      %1177 = vmatpush1.msra.mxu0 0.0
      %1178 = vmatprep.subr.mxu0 0.0
      %1179 = vmatpush1.msra.mxu0 0.0
      %1180 = vmatprep.subr.mxu0 0.0
      %1181 = vmatpush1.msra.mxu0 0.0
      %1182 = vmatprep.subr.mxu0 0.0
      %1183 = vmatpush1.msra.mxu0 0.0
      %1184 = vmatprep.subr.mxu0 0.0
      %1185 = vmatpush1.msra.mxu0 0.0
      %1186 = vmatprep.subr.mxu0 0.0
      %1187 = vmatpush1.msra.mxu0 0.0
      %1188 = vmatprep.subr.mxu0 0.0
      %1189 = vmatpush1.msra.mxu0 0.0
      %1190 = vmatprep.subr.mxu0 0.0
      %1191 = vmatpush1.msra.mxu0 0.0
      %1192 = vmatprep.subr.mxu0 0.0
      %1193 = vmatpush1.msra.mxu0 0.0
      %1194 = vmatprep.subr.mxu0 0.0
      %1195 = vmatpush1.msra.mxu0 0.0
      %1196 = vmatprep.subr.mxu0 0.0
      %1197 = vmatpush1.msra.mxu0 0.0
      %1198 = vmatprep.subr.mxu0 0.0
      %1199 = vmatpush1.msra.mxu0 0.0
      %1200 = vmatprep.subr.mxu0 0.0
      %1201 = vmatpush1.msra.mxu0 0.0
      %1202 = vmatprep.subr.mxu0 0.0
      %1203 = vmatpush1.msra.mxu0 0.0
      %1204 = vmatprep.subr.mxu0 0.0
      %1205 = vmatpush1.msra.mxu0 0.0
      %1206 = vmatprep.subr.mxu0 0.0
      %1207 = vmatpush1.msra.mxu0 0.0
      %1208 = vmatprep.subr.mxu0 0.0
      %1209 = vmatpush1.msra.mxu0 0.0
      %1210 = vmatprep.subr.mxu0 0.0
      %1211 = vmatpush1.msra.mxu0 0.0
      %1212 = vmatprep.subr.mxu0 0.0
      %1213 = vmatpush1.msra.mxu0 0.0
      %1214 = vmatprep.subr.mxu0 0.0
      %1215 = vmatpush1.msra.mxu0 0.0
      %1216 = vmatprep.subr.mxu0 0.0
      %1217 = vmatpush1.msra.mxu0 0.0
      %1218 = vmatprep.subr.mxu0 0.0
      %1219 = vmatpush1.msra.mxu0 0.0
      %1220 = vmatprep.subr.mxu0 0.0
      %1221 = vmatpush1.msra.mxu0 0.0
      %1222 = vmatprep.subr.mxu0 0.0
      %1223 = vmatpush1.msra.mxu0 0.0
      %1224 = vmatprep.subr.mxu0 0.0
      %1225 = vmatpush1.msra.mxu0 0.0
      %1226 = vmatprep.subr.mxu0 0.0
      %1227 = vmatpush1.msra.mxu0 0.0
      %1228 = vmatprep.subr.mxu0 0.0
      %1229 = vmatpush1.msra.mxu0 0.0
      %1230 = vmatprep.subr.mxu0 0.0
      %1231 = vmatpush1.msra.mxu0 0.0
      %1232 = vmatprep.subr.mxu0 0.0
      %1233 = vmatpush1.msra.mxu0 0.0
      %1234 = vmatprep.subr.mxu0 0.0
      %1235 = vmatpush1.msra.mxu0 0.0
      %1236 = vmatprep.subr.mxu0 0.0
      %1237 = vmatpush1.msra.mxu0 0.0
      %1238 = vmatprep.mubr.f32.mxu0 0.0
      %1239 = vmatmul.mubr.f32.gmra.mrb[0].mxu0 %v1172
      %v1240 = vpop.f32.mrb[0].mxu0
      %v1241 = vadd.f32 0.0, %v1240
      %v1242 = vpop.f32.mrb[0].mxu0
      %1243 = vdwg.mxu0
      %v1244 = vadd.f32 %v1057, %v1241
      %1245 = vrot.lane.b32.xlu0 %v686, 104
      %v1246 = vpop.permute.xlu0 %1245
      %1247 = vrot.lane.b32.xlu0 %v686, 72
      %v1248 = vpop.permute.xlu0 %1247
      %v1250 = vsel %vm694, %v1246, 0
      %v1253 = vsel %vm694, %v1248, 0
      %1255 = vmatprep.subr.bf16.mxu0 0
      %1256 = vmatpush1.bf16.xpose.msra.mxu0 %v1253
      %1257 = vmatprep.subr.bf16.mxu0 0
      %1258 = vmatpush1.bf16.xpose.msra.mxu0 0
      %1259 = vmatprep.subr.bf16.mxu0 0
      %1260 = vmatpush1.bf16.xpose.msra.mxu0 0
      %1261 = vmatprep.subr.bf16.mxu0 0
      %1262 = vmatpush1.bf16.xpose.msra.mxu0 0
      %1263 = vmatprep.subr.bf16.mxu0 0
      %1264 = vmatpush1.bf16.xpose.msra.mxu0 0
      %1265 = vmatprep.subr.bf16.mxu0 0
      %1266 = vmatpush1.bf16.xpose.msra.mxu0 0
      %1267 = vmatprep.subr.bf16.mxu0 0
      %1268 = vmatpush1.bf16.xpose.msra.mxu0 0
      %1269 = vmatprep.subr.bf16.mxu0 0
      %1270 = vmatpush1.bf16.xpose.msra.mxu0 0
      %1271 = vmatprep.subr.bf16.mxu0 0
      %1272 = vmatpush1.bf16.xpose.msra.mxu0 0
      %1273 = vmatprep.subr.bf16.mxu0 0
      %1274 = vmatpush1.bf16.xpose.msra.mxu0 0
      %1275 = vmatprep.subr.bf16.mxu0 0
      %1276 = vmatpush1.bf16.xpose.msra.mxu0 0
      %1277 = vmatprep.subr.bf16.mxu0 0
      %1278 = vmatpush1.bf16.xpose.msra.mxu0 0
      %1279 = vmatprep.subr.bf16.mxu0 0
      %1280 = vmatpush1.bf16.xpose.msra.mxu0 0
      %1281 = vmatprep.subr.bf16.mxu0 0
      %1282 = vmatpush1.bf16.xpose.msra.mxu0 0
      %1283 = vmatprep.subr.bf16.mxu0 0
      %1284 = vmatpush1.bf16.xpose.msra.mxu0 0
      %1285 = vmatprep.subr.bf16.mxu0 0
      %1286 = vmatpush1.bf16.xpose.msra.mxu0 0
      %1287 = vmatprep.mubr.bf16.mxu0 0
      %1288 = vmatmul.mubr.bf16.gmra.mrb[0].mxu0 %v1250
      %v1289 = vpop.f32.mrb[0].mxu0
      %v1290 = vadd.f32 0.0, %v1289
      %v1291 = vpop.f32.mrb[0].mxu0
      %v1292 = vpop.f32.mrb[0].mxu0
      %v1293 = vpop.f32.mrb[0].mxu0
      %1294 = vdwg.mxu0
      %v1295 = vmul.f32 %v1290, 0.35355338
      %v1296 = vsel %vm694, %v1295, -inf
      %1297 = vmax.xlane.f32.xlu0 %v1296
      %v1298 = vpop.xlane.xlu0 %1297
      %v1299 = vsub.f32 %v1295, %v1298
      %v1300 = vmul.f32 %v1299, 1.442695
      %v1301 = vpow.pop %v1300
      %v1302 = vsel %vm694, %v1301, 0.0
      %1303 = vadd.xlane.f32.xlu0 %v1302
      %v1304 = vpop.xlane.xlu0 %1303
      %v1305 = vrcp.pop %v1304
      %v1306 = vmul.f32 %v1301, %v1305
      %v1307 = vpack.c.bf16 %v1306, %v1306
      %1308 = vrot.lane.b32.xlu0 %v686, 40
      %v1309 = vpop.permute.xlu0 %1308
      %v1311 = vsel %vm694, %v1307, 0
      %v1314 = vsel %vm759, %v1309, 0
      %1316 = vmatprep.subr.bf16.mxu0 0
      %1317 = vmatpush1.bf16.msra.mxu0 %v1314
      %1318 = vmatprep.subr.bf16.mxu0 0
      %1319 = vmatpush1.bf16.msra.mxu0 0
      %1320 = vmatprep.subr.bf16.mxu0 0
      %1321 = vmatpush1.bf16.msra.mxu0 0
      %1322 = vmatprep.subr.bf16.mxu0 0
      %1323 = vmatpush1.bf16.msra.mxu0 0
      %1324 = vmatprep.subr.bf16.mxu0 0
      %1325 = vmatpush1.bf16.msra.mxu0 0
      %1326 = vmatprep.subr.bf16.mxu0 0
      %1327 = vmatpush1.bf16.msra.mxu0 0
      %1328 = vmatprep.subr.bf16.mxu0 0
      %1329 = vmatpush1.bf16.msra.mxu0 0
      %1330 = vmatprep.subr.bf16.mxu0 0
      %1331 = vmatpush1.bf16.msra.mxu0 0
      %1332 = vmatprep.subr.bf16.mxu0 0
      %1333 = vmatpush1.bf16.msra.mxu0 0
      %1334 = vmatprep.subr.bf16.mxu0 0
      %1335 = vmatpush1.bf16.msra.mxu0 0
      %1336 = vmatprep.subr.bf16.mxu0 0
      %1337 = vmatpush1.bf16.msra.mxu0 0
      %1338 = vmatprep.subr.bf16.mxu0 0
      %1339 = vmatpush1.bf16.msra.mxu0 0
      %1340 = vmatprep.subr.bf16.mxu0 0
      %1341 = vmatpush1.bf16.msra.mxu0 0
      %1342 = vmatprep.subr.bf16.mxu0 0
      %1343 = vmatpush1.bf16.msra.mxu0 0
      %1344 = vmatprep.subr.bf16.mxu0 0
      %1345 = vmatpush1.bf16.msra.mxu0 0
      %1346 = vmatprep.subr.bf16.mxu0 0
      %1347 = vmatpush1.bf16.msra.mxu0 0
      %1348 = vmatprep.mubr.bf16.mxu0 0
      %1349 = vmatmul.mubr.bf16.gmra.mrb[0].mxu0 %v1311
      %v1350 = vpop.f32.mrb[0].mxu0
      %v1351 = vadd.f32 0.0, %v1350
      %v1352 = vpop.f32.mrb[0].mxu0
      %v1353 = vpop.f32.mrb[0].mxu0
      %v1354 = vpop.f32.mrb[0].mxu0
      %1355 = vdwg.mxu0
      %v1357 = vsel %vm694, %v1351, 0
      %1359 = vmatprep.subr.mxu0 0.0
      %1360 = vmatpush1.msra.mxu0 %v690
      %1361 = vmatprep.subr.mxu0 0.0
      %1362 = vmatpush1.msra.mxu0 0.0
      %1363 = vmatprep.subr.mxu0 0.0
      %1364 = vmatpush1.msra.mxu0 0.0
      %1365 = vmatprep.subr.mxu0 0.0
      %1366 = vmatpush1.msra.mxu0 0.0
      %1367 = vmatprep.subr.mxu0 0.0
      %1368 = vmatpush1.msra.mxu0 0.0
      %1369 = vmatprep.subr.mxu0 0.0
      %1370 = vmatpush1.msra.mxu0 0.0
      %1371 = vmatprep.subr.mxu0 0.0
      %1372 = vmatpush1.msra.mxu0 0.0
      %1373 = vmatprep.subr.mxu0 0.0
      %1374 = vmatpush1.msra.mxu0 0.0
      %1375 = vmatprep.subr.mxu0 0.0
      %1376 = vmatpush1.msra.mxu0 0.0
      %1377 = vmatprep.subr.mxu0 0.0
      %1378 = vmatpush1.msra.mxu0 0.0
      %1379 = vmatprep.subr.mxu0 0.0
      %1380 = vmatpush1.msra.mxu0 0.0
      %1381 = vmatprep.subr.mxu0 0.0
      %1382 = vmatpush1.msra.mxu0 0.0
      %1383 = vmatprep.subr.mxu0 0.0
      %1384 = vmatpush1.msra.mxu0 0.0
      %1385 = vmatprep.subr.mxu0 0.0
      %1386 = vmatpush1.msra.mxu0 0.0
      %1387 = vmatprep.subr.mxu0 0.0
      %1388 = vmatpush1.msra.mxu0 0.0
      %1389 = vmatprep.subr.mxu0 0.0
      %1390 = vmatpush1.msra.mxu0 0.0
      %1391 = vmatprep.subr.mxu0 0.0
      %1392 = vmatpush1.msra.mxu0 0.0
      %1393 = vmatprep.subr.mxu0 0.0
      %1394 = vmatpush1.msra.mxu0 0.0
      %1395 = vmatprep.subr.mxu0 0.0
      %1396 = vmatpush1.msra.mxu0 0.0
      %1397 = vmatprep.subr.mxu0 0.0
      %1398 = vmatpush1.msra.mxu0 0.0
      %1399 = vmatprep.subr.mxu0 0.0
      %1400 = vmatpush1.msra.mxu0 0.0
      %1401 = vmatprep.subr.mxu0 0.0
      %1402 = vmatpush1.msra.mxu0 0.0
      %1403 = vmatprep.subr.mxu0 0.0
      %1404 = vmatpush1.msra.mxu0 0.0
      %1405 = vmatprep.subr.mxu0 0.0
      %1406 = vmatpush1.msra.mxu0 0.0
      %1407 = vmatprep.subr.mxu0 0.0
      %1408 = vmatpush1.msra.mxu0 0.0
      %1409 = vmatprep.subr.mxu0 0.0
      %1410 = vmatpush1.msra.mxu0 0.0
      %1411 = vmatprep.subr.mxu0 0.0
      %1412 = vmatpush1.msra.mxu0 0.0
      %1413 = vmatprep.subr.mxu0 0.0
      %1414 = vmatpush1.msra.mxu0 0.0
      %1415 = vmatprep.subr.mxu0 0.0
      %1416 = vmatpush1.msra.mxu0 0.0
      %1417 = vmatprep.subr.mxu0 0.0
      %1418 = vmatpush1.msra.mxu0 0.0
      %1419 = vmatprep.subr.mxu0 0.0
      %1420 = vmatpush1.msra.mxu0 0.0
      %1421 = vmatprep.subr.mxu0 0.0
      %1422 = vmatpush1.msra.mxu0 0.0
      %1423 = vmatprep.mubr.f32.mxu0 0.0
      %1424 = vmatmul.mubr.f32.gmra.mrb[0].mxu0 %v1357
      %v1425 = vpop.f32.mrb[0].mxu0
      %v1426 = vadd.f32 0.0, %v1425
      %v1427 = vpop.f32.mrb[0].mxu0
      %1428 = vdwg.mxu0
      %v1429 = vadd.f32 %v1244, %v1426
      %v1430 = vadd.f32 %v598, %v1429
      %v1431 = vld [vmem:[%s487] sm:$0x1]
      %v1432 = vsel %vm600, %v1430, 0.0
      %1433 = vadd.xlane.f32.xlu0 %v1432
      %v1434 = vpop.xlane.xlu0 %1433
      %v1435 = vmul.f32 %v1434, %v604
      %v1436 = vsub.f32 %v1430, %v1435
      %v1437 = vmul.f32 %v1436, %v1436
      %v1438 = vsel %vm600, %v1437, 0.0
      %1439 = vadd.xlane.f32.xlu0 %v1438
      %v1440 = vpop.xlane.xlu0 %1439
      %v1441 = vmul.f32 %v1440, %v604
      %v1442 = vadd.f32 %v1441, 1e-05
      %v1443 = vrsqrt.pop %v1442
      %v1444 = vmul.f32 %v1436, %v1443
      %v1446 = vlaneseq
      %v1447 = vshrl.u32 %v1446, 7
      %v1448 = vsub.s32 0, %v1447
      %v1449 = vrot.slane %v1431, %v1448
      %v1451 = vmul.f32 %v1444, %v1449
      %v1452 = vpack.c.bf16 %v1451, %v1451
      %v1453 = vld [vmem:[%s492] sm:$0xf]
      %v1454 = vld [vmem:[%s492 + $0x4] sm:$0xf]
      %v1455 = vld [vmem:[%s492 + $0x8] sm:$0xf]
      %v1456 = vld [vmem:[%s492 + $0xc] sm:$0xf]
      %v1461 = vunpack.c.l.b16 %v1453
      %v1462 = vunpack.c.l.b16 %v1454
      %v1463 = vunpack.c.l.b16 %v1455
      %v1464 = vunpack.c.l.b16 %v1456
      %v1465 = vpack.c.b16 %v1462, %v1461
      %v1466 = vpack.c.b16 %v1464, %v1463
      %v1470 = vsel %vm600, %v1452, 0
      %1472 = vmatprep.subr.bf16.mxu0 0
      %1473 = vmatpush1.bf16.msra.mxu0 %v1465
      %1474 = vmatprep.subr.bf16.mxu0 0
      %1475 = vmatpush1.bf16.msra.mxu0 %v1466
      %1476 = vmatprep.subr.bf16.mxu0 0
      %1477 = vmatpush1.bf16.msra.mxu0 0
      %1478 = vmatprep.subr.bf16.mxu0 0
      %1479 = vmatpush1.bf16.msra.mxu0 0
      %1480 = vmatprep.subr.bf16.mxu0 0
      %1481 = vmatpush1.bf16.msra.mxu0 0
      %1482 = vmatprep.subr.bf16.mxu0 0
      %1483 = vmatpush1.bf16.msra.mxu0 0
      %1484 = vmatprep.subr.bf16.mxu0 0
      %1485 = vmatpush1.bf16.msra.mxu0 0
      %1486 = vmatprep.subr.bf16.mxu0 0
      %1487 = vmatpush1.bf16.msra.mxu0 0
      %1488 = vmatprep.subr.bf16.mxu0 0
      %1489 = vmatpush1.bf16.msra.mxu0 0
      %1490 = vmatprep.subr.bf16.mxu0 0
      %1491 = vmatpush1.bf16.msra.mxu0 0
      %1492 = vmatprep.subr.bf16.mxu0 0
      %1493 = vmatpush1.bf16.msra.mxu0 0
      %1494 = vmatprep.subr.bf16.mxu0 0
      %1495 = vmatpush1.bf16.msra.mxu0 0
      %1496 = vmatprep.subr.bf16.mxu0 0
      %1497 = vmatpush1.bf16.msra.mxu0 0
      %1498 = vmatprep.subr.bf16.mxu0 0
      %1499 = vmatpush1.bf16.msra.mxu0 0
      %1500 = vmatprep.subr.bf16.mxu0 0
      %1501 = vmatpush1.bf16.msra.mxu0 0
      %1502 = vmatprep.subr.bf16.mxu0 0
      %1503 = vmatpush1.bf16.msra.mxu0 0
      %1504 = vmatprep.mubr.bf16.mxu0 0
      %1505 = vmatmul.mubr.bf16.gmra.mrb[0].mxu0 %v1470
      %v1506 = vpop.f32.mrb[0].mxu0
      %v1507 = vadd.f32 0.0, %v1506
      %v1508 = vpop.f32.mrb[0].mxu0
      %v1509 = vpop.f32.mrb[0].mxu0
      %v1510 = vpop.f32.mrb[0].mxu0
      %1511 = vdwg.mxu0
      %v1512 = vmul.f32 %v1507, 0.5
      %v1513 = vmul.f32 %v1507, 0.70710677
      %v1514 = verf.f32.pop %v1513
      %v1515 = vadd.f32 %v1514, 1.0
      %v1516 = vmul.f32 %v1512, %v1515
      %v1517 = vpack.c.bf16 %v1516, %v1516
      %v1518 = vld [vmem:[%s497] sm:$0xf]
      %v1519 = vld [vmem:[%s497 + $0x4] sm:$0xf]
      %v1520 = vld [vmem:[%s497 + $0x8] sm:$0xf]
      %v1521 = vld [vmem:[%s497 + $0xc] sm:$0xf]
      %v1522 = vld [vmem:[%s497 + $0x10] sm:$0xf]
      %v1523 = vld [vmem:[%s497 + $0x14] sm:$0xf]
      %v1524 = vld [vmem:[%s497 + $0x18] sm:$0xf]
      %v1525 = vld [vmem:[%s497 + $0x1c] sm:$0xf]
      %v1526 = vld [vmem:[%s497 + $0x20] sm:$0xf]
      %v1527 = vld [vmem:[%s497 + $0x24] sm:$0xf]
      %v1528 = vld [vmem:[%s497 + $0x28] sm:$0xf]
      %v1529 = vld [vmem:[%s497 + $0x2c] sm:$0xf]
      %v1530 = vld [vmem:[%s497 + $0x30] sm:$0xf]
      %v1531 = vld [vmem:[%s497 + $0x34] sm:$0xf]
      %v1532 = vld [vmem:[%s497 + $0x38] sm:$0xf]
      %v1533 = vld [vmem:[%s497 + $0x3c] sm:$0xf]
      %v1550 = vunpack.c.l.b16 %v1518
      %v1551 = vunpack.c.l.b16 %v1519
      %v1552 = vunpack.c.l.b16 %v1520
      %v1553 = vunpack.c.l.b16 %v1521
      %v1554 = vunpack.c.l.b16 %v1522
      %v1555 = vunpack.c.l.b16 %v1523
      %v1556 = vunpack.c.l.b16 %v1524
      %v1557 = vunpack.c.l.b16 %v1525
      %v1558 = vunpack.c.l.b16 %v1526
      %v1559 = vunpack.c.l.b16 %v1527
      %v1560 = vunpack.c.l.b16 %v1528
      %v1561 = vunpack.c.l.b16 %v1529
      %v1562 = vunpack.c.l.b16 %v1530
      %v1563 = vunpack.c.l.b16 %v1531
      %v1564 = vunpack.c.l.b16 %v1532
      %v1565 = vunpack.c.l.b16 %v1533
      %v1566 = vpack.c.b16 %v1551, %v1550
      %v1567 = vpack.c.b16 %v1553, %v1552
      %v1568 = vpack.c.b16 %v1555, %v1554
      %v1569 = vpack.c.b16 %v1557, %v1556
      %v1570 = vpack.c.b16 %v1559, %v1558
      %v1571 = vpack.c.b16 %v1561, %v1560
      %v1572 = vpack.c.b16 %v1563, %v1562
      %v1573 = vpack.c.b16 %v1565, %v1564
      %1582 = vmatprep.subr.bf16.mxu0 0
      %1583 = vmatpush1.bf16.msra.mxu0 %v1566
      %1584 = vmatprep.subr.bf16.mxu0 0
      %1585 = vmatpush1.bf16.msra.mxu0 %v1567
      %1586 = vmatprep.subr.bf16.mxu0 0
      %1587 = vmatpush1.bf16.msra.mxu0 %v1568
      %1588 = vmatprep.subr.bf16.mxu0 0
      %1589 = vmatpush1.bf16.msra.mxu0 %v1569
      %1590 = vmatprep.subr.bf16.mxu0 0
      %1591 = vmatpush1.bf16.msra.mxu0 %v1570
      %1592 = vmatprep.subr.bf16.mxu0 0
      %1593 = vmatpush1.bf16.msra.mxu0 %v1571
      %1594 = vmatprep.subr.bf16.mxu0 0
      %1595 = vmatpush1.bf16.msra.mxu0 %v1572
      %1596 = vmatprep.subr.bf16.mxu0 0
      %1597 = vmatpush1.bf16.msra.mxu0 %v1573
      %1598 = vmatprep.subr.bf16.mxu0 0
      %1599 = vmatpush1.bf16.msra.mxu0 0
      %1600 = vmatprep.subr.bf16.mxu0 0
      %1601 = vmatpush1.bf16.msra.mxu0 0
      %1602 = vmatprep.subr.bf16.mxu0 0
      %1603 = vmatpush1.bf16.msra.mxu0 0
      %1604 = vmatprep.subr.bf16.mxu0 0
      %1605 = vmatpush1.bf16.msra.mxu0 0
      %1606 = vmatprep.subr.bf16.mxu0 0
      %1607 = vmatpush1.bf16.msra.mxu0 0
      %1608 = vmatprep.subr.bf16.mxu0 0
      %1609 = vmatpush1.bf16.msra.mxu0 0
      %1610 = vmatprep.subr.bf16.mxu0 0
      %1611 = vmatpush1.bf16.msra.mxu0 0
      %1612 = vmatprep.subr.bf16.mxu0 0
      %1613 = vmatpush1.bf16.msra.mxu0 0
      %1614 = vmatprep.mubr.bf16.mxu0 0
      %1615 = vmatmul.mubr.bf16.gmra.mrb[0].mxu0 %v1517
      %v1616 = vpop.f32.mrb[0].mxu0
      %v1617 = vadd.f32 0.0, %v1616
      %v1618 = vpop.f32.mrb[0].mxu0
      %v1619 = vpop.f32.mrb[0].mxu0
      %v1620 = vpop.f32.mrb[0].mxu0
      %1621 = vdwg.mxu0
      %v1622 = vadd.f32 %v1430, %v1617
      %p1623 = scmp.eq.s32.totalorder %s27, 1
      // Predicated region
      $region69: #{ts_transformer_forward.2} parent=63 // pred_check
        %p1624 = pneg %p1623
      $region70: #{ts_transformer_forward.2} parent=63 // pred_check_branch
        %1626 = sbr.rel (%p1624) target = $region72
      $region71: #{ts_transformer_forward.2} parent=63 // pred_region
        %v1627 = vld [vmem:[%s10] sm:$0x1]
        %v1628 = vsel %vm600, %v1622, 0.0
        %1629 = vadd.xlane.f32.xlu0 %v1628
        %v1630 = vpop.xlane.xlu0 %1629
        %v1631 = vmul.f32 %v1630, %v604
        %v1632 = vsub.f32 %v1622, %v1631
        %v1633 = vmul.f32 %v1632, %v1632
        %v1634 = vsel %vm600, %v1633, 0.0
        %1635 = vadd.xlane.f32.xlu0 %v1634
        %v1636 = vpop.xlane.xlu0 %1635
        %v1637 = vmul.f32 %v1636, %v604
        %v1638 = vadd.f32 %v1637, 1e-05
        %v1639 = vrsqrt.pop %v1638
        %v1640 = vmul.f32 %v1632, %v1639
        %v1642 = vlaneseq
        %v1643 = vshrl.u32 %v1642, 7
        %v1644 = vsub.s32 0, %v1643
        %v1645 = vrot.slane %v1627, %v1644
        %v1647 = vmul.f32 %v1640, %v1645
        %1648 = vst.msk [vmem:[%s501] sm:$0xff] %vm600, %v1647
      $region72: #{ts_transformer_forward.2} parent=63 // pred_fallthru
        _
      %p1649 = scmp.lt.s32.totalorder %s27, 1
      // Predicated region
      $region73: #{ts_transformer_forward.2} parent=63 // pred_check
        %p1650 = pneg %p1649
      $region74: #{ts_transformer_forward.2} parent=63 // pred_check_branch
        %1652 = sbr.rel (%p1650) target = $region76
      $region75: #{ts_transformer_forward.2} parent=63 // pred_region
        %1653 = vst.msk [vmem:[%s501] sm:$0xff] %vm600, %v1622
      $region76: #{ts_transformer_forward.2} parent=63 // pred_fallthru
        _
      %p1654 = scmp.lt.s32.totalorder %s26, 1
      %s1655 = scalar_select %p1654, %s26, 1
      %s1656 = smul.addr %s1655, 8
      %s1657 = scalar_lea.vmem %s11, %s1656
      // Predicated region
      $region77: #{ts_transformer_forward.2} parent=63 // pred_check
        %p1658 = pneg %p318
      $region78: #{ts_transformer_forward.2} parent=63 // pred_check_branch
        %1660 = sbr.rel (%p1658) target = $region80
      $region79: #{ts_transformer_forward.2} parent=63 // pred_region
        _
      $region80: #{ts_transformer_forward.2} parent=63 // pred_fallthru
        _
    $region64: #{ts_transformer_forward.2} parent=5 // pred_fallthru
      _
    %p1661 = scmp.le.s32.totalorder 2, %s17
    // Predicated region
    $region81: #{ts_transformer_forward.2} parent=5 // pred_check
      %p1662 = pneg %p1661
    $region82: #{ts_transformer_forward.2} parent=5 // pred_check_branch
      %1664 = sbr.rel (%p1662) target = $region84
    $region83: #{ts_transformer_forward.2} parent=5 // pred_region
      %s1665 = ssub.s32 %s17, 2
      // Predicated region
      $region85: #{ts_transformer_forward.2} parent=83 // pred_check
        %p1666 = pneg %p324
      $region86: #{ts_transformer_forward.2} parent=83 // pred_check_branch
        %1668 = sbr.rel (%p1666) target = $region88
      $region87: #{ts_transformer_forward.2} parent=83 // pred_region
        %p1669 = scmp.lt.s32.totalorder %s28, 1
        %s1670 = scalar_select %p1669, %s28, 1
        %s1671 = smul.addr %s1670, 8
        %s1672 = scalar_lea.vmem %s11, %s1671
      $region88: #{ts_transformer_forward.2} parent=83 // pred_fallthru
        _
    $region84: #{ts_transformer_forward.2} parent=5 // pred_fallthru
      _
  $region6: #{ts_transformer_forward.2} parent=0 // loop_footer
    %s21 = sadd.s32 1, %s17
  $region7: #{ts_transformer_forward.2} parent=0 // loop_footer_branch
    %16 = sbr.rel target = $region3
  $region8: #{ts_transformer_forward.2} parent=0 // loop_exit
    _

// kernel: ts_transformer_forward.3
$region0: #{ts_transformer_forward.3}
  #allocation0 [shape = 'u32[]', space=smem, size = 0x4, offset = 0x4, fixed_abs, tag = 'smem constant byte address 0x4 - core index']
  #allocation1 [shape = 'u32[144,128]{1,0:T(1,128)}', space=vmem, size = 0x12000, scoped, tag = 'internal scratch']
  #allocation2 [shape = 'f32[8,32]{1,0:T(8,128)}', space=vmem, size = 0x1000, scoped, tag = 'scratch operand']
  %s0 = inlined_call_operand.vmem [shape: f32[2,8,2], index: 0, kind: input, shape index: {}]
  %s1 = inlined_call_operand.vmem [shape: f32[2,32], index: 1, kind: input, shape index: {}]
  %s2 = inlined_call_operand.vmem [shape: f32[1,32], index: 2, kind: input, shape index: {}]
  %s3 = inlined_call_operand.vmem [shape: f32[8,32], index: 3, kind: input, shape index: {}]
  %s4 = inlined_call_operand.vmem [shape: f32[2,8,32], index: 4, kind: input, shape index: {}]
  %s5 = inlined_call_operand.vmem [shape: f32[8,8], index: 5, kind: input, shape index: {}]
  %s6 = inlined_call_operand.vmem [shape: f32[2,1,32], index: 6, kind: input, shape index: {}]
  %s7 = inlined_call_operand.vmem [shape: bf16[2,32,96], index: 7, kind: input, shape index: {}]
  %s8 = inlined_call_operand.vmem [shape: bf16[2,32,32], index: 8, kind: input, shape index: {}]
  %s9 = inlined_call_operand.vmem [shape: f32[2,1,32], index: 9, kind: input, shape index: {}]
  %s10 = inlined_call_operand.vmem [shape: bf16[2,32,32], index: 10, kind: input, shape index: {}]
  %s11 = inlined_call_operand.vmem [shape: bf16[2,32,64], index: 11, kind: input, shape index: {}]
  %s12 = inlined_call_operand.vmem [shape: bf16[2,32,32], index: 12, kind: input, shape index: {}]
  %s13 = inlined_call_operand.vmem [shape: f32[2,1,32], index: 13, kind: input, shape index: {}]
  %s14 = inlined_call_operand.vmem [shape: bf16[2,32,128], index: 14, kind: input, shape index: {}]
  %s15 = inlined_call_operand.vmem [shape: bf16[2,128,32], index: 15, kind: input, shape index: {}]
  %s16 = inlined_call_operand.vmem [shape: f32[1,32], index: 16, kind: input, shape index: {}]
  %s17 = inlined_call_operand.vmem [shape: f32[32,128], index: 17, kind: input, shape index: {}]
  %s18 = inlined_call_operand.vmem [shape: f32[1,128], index: 18, kind: input, shape index: {}]
  %s19 = inlined_call_operand.vmem [shape: f32[2,8,128], index: 19, kind: output, shape index: {}]
  %s20 = sld [smem:[#allocation0]]
  $region117: #{ts_transformer_forward.3} parent=0
    _
  %s22 = ssub.s32 1, %s20
  %s23 = scalar_select 0, %s22, %s20
  loop: start=0, step=1, limit=6
  $region2: #{ts_transformer_forward.3} parent=0 // loop_pre_header
    _
  $region3: #{ts_transformer_forward.3} parent=0 // loop_header
    %s25 = sphi 0, %s29
    %p26 = scmp.ge.s32.totalorder %s25, 6
    %s32 = sphi 0, %s44
    %s33 = sphi 0, %s40
    %s34 = sphi 0, %s32
    %s35 = sphi 0, %s33
    %s36 = sphi 0, %s34
    %s37 = sphi 0, %s35
    %s47 = sphi 0, %s49
    %s50 = sphi 0, %s47
    %s51 = sphi 0, %s50
    %s67 = sphi 0, %s51
    %s71 = sphi 0, %s71
    %s73 = sphi 0, %s71
    %s74 = sphi 0, %s73
    %s88 = sphi 0, %s74
    %s92 = sphi 0, %s92
    %s94 = sphi 0, %s92
    %s95 = sphi 0, %s94
    %s109 = sphi 0, %s95
    %s113 = sphi 0, %s113
    %s115 = sphi 0, %s113
    %s116 = sphi 0, %s115
    %s130 = sphi 0, %s116
    %s136 = sphi 0, %s138
    %s139 = sphi 0, %s136
    %s140 = sphi 0, %s139
    %s156 = sphi 0, %s140
    %s160 = sphi 0, %s160
    %s162 = sphi 0, %s160
    %s163 = sphi 0, %s162
    %s177 = sphi 0, %s163
    %s183 = sphi 0, %s185
    %s186 = sphi 0, %s183
    %s187 = sphi 0, %s186
    %s203 = sphi 0, %s187
    %s209 = sphi 0, %s211
    %s212 = sphi 0, %s209
    %s213 = sphi 0, %s212
    %s229 = sphi 0, %s213
    %s235 = sphi 0, %s237
    %s238 = sphi 0, %s235
    %s239 = sphi 0, %s238
    %s255 = sphi 0, %s239
    %s261 = sphi 0, %s263
    %s264 = sphi 0, %s261
    %s265 = sphi 0, %s264
    %s281 = sphi 0, %s265
    %s287 = sphi 0, %s289
    %s290 = sphi 0, %s287
    %s291 = sphi 0, %s290
    %s307 = sphi 0, %s291
    %s313 = sphi 0, %s315
    %s316 = sphi 0, %s313
    %s317 = sphi 0, %s316
    %s333 = sphi 0, %s317
    %s339 = sphi 0, %s341
    %s342 = sphi 0, %s339
    %s343 = sphi 0, %s342
    %s359 = sphi 0, %s343
    %s365 = sphi 0, %s367
    %s368 = sphi 0, %s365
    %s369 = sphi 0, %s368
    %s385 = sphi 0, %s369
    %s391 = sphi 0, %s393
    %s394 = sphi 0, %s391
    %s395 = sphi 0, %s394
    %s411 = sphi 0, %s395
    %s417 = sphi 0, %s419
    %s420 = sphi 0, %s417
    %s421 = sphi 0, %s420
    %s437 = sphi 0, %s421
    %s441 = sphi 0, %s441
    %s443 = sphi 0, %s441
    %s444 = sphi 0, %s443
    %s458 = sphi 0, %s444
    %s462 = sphi 0, %s462
    %s464 = sphi 0, %s462
    %s465 = sphi 0, %s464
    %s479 = sphi 0, %s465
    %s483 = sphi 0, %s483
    %s485 = sphi 0, %s483
    %s486 = sphi 0, %s485
    %s500 = sphi 0, %s486
    %s506 = sphi 0, %s508
    %s509 = sphi 0, %s506
    %s510 = sphi 0, %s509
    %s526 = sphi 0, %s510
  $region4: #{ts_transformer_forward.3} parent=0 // loop_header_branch
    %28 = sbr.rel (%p26) target = $region8
  $region5: #{ts_transformer_forward.3} parent=0 // loop_body
    %s30 = ssub.s32 %s25, 1
    %s31 = ssub.s32 %s25, 2
    %s38 = sadd.s32 1, %s33
    %p39 = scmp.ge.s32.totalorder %s38, 2
    %s40 = scalar_select %p39, 0, %s38
    %s41 = sadd.s32 1, %s32
    %s42 = scalar_select %p39, %s41, %s32
    %p43 = scmp.ge.s32.totalorder %s42, 2
    %s44 = scalar_select %p43, 0, %s42
    %s45 = ssub.s32 %s32, %s44
    %p46 = scmp.eq.s32.totalorder %s45, 0
    %s48 = sadd.s32 %s47, 1
    %s49 = scalar_select %p46, %s47, %s48
    %p52 = pneg %p46
    %p53 = scmp.eq.s32.totalorder %s25, 3
    %p54 = por %p52, %p53
    %p55 = scmp.ne.s32.totalorder %s47, %s50
    %p56 = scmp.eq.s32.totalorder %s25, 0
    %p57 = por %p55, %p56
    %p58 = scmp.ne.s32.totalorder %s47, %s50
    %p59 = scmp.eq.s32.totalorder %s30, 3
    %p60 = por %p58, %p59
    %p61 = scmp.ne.s32.totalorder %s50, %s51
    %p62 = scmp.eq.s32.totalorder %s30, 0
    %p63 = por %p61, %p62
    %p64 = scmp.ne.s32.totalorder %s50, %s51
    %p65 = scmp.eq.s32.totalorder %s31, 3
    %p66 = por %p64, %p65
    %p68 = scmp.ne.s32.totalorder %s51, %s67
    %p69 = scmp.eq.s32.totalorder %s31, 0
    %p70 = por %p68, %p69
    %s72 = sadd.s32 %s71, 1
    %p75 = scmp.eq.s32.totalorder %s25, 3
    %p76 = scmp.ne.s32.totalorder %s71, %s73
    %p77 = scmp.eq.s32.totalorder %s25, 0
    %p78 = por %p76, %p77
    %p79 = scmp.ne.s32.totalorder %s71, %s73
    %p80 = scmp.eq.s32.totalorder %s30, 3
    %p81 = por %p79, %p80
    %p82 = scmp.ne.s32.totalorder %s73, %s74
    %p83 = scmp.eq.s32.totalorder %s30, 0
    %p84 = por %p82, %p83
    %p85 = scmp.ne.s32.totalorder %s73, %s74
    %p86 = scmp.eq.s32.totalorder %s31, 3
    %p87 = por %p85, %p86
    %p89 = scmp.ne.s32.totalorder %s74, %s88
    %p90 = scmp.eq.s32.totalorder %s31, 0
    %p91 = por %p89, %p90
    %s93 = sadd.s32 %s92, 1
    %p96 = scmp.eq.s32.totalorder %s25, 3
    %p97 = scmp.ne.s32.totalorder %s92, %s94
    %p98 = scmp.eq.s32.totalorder %s25, 0
    %p99 = por %p97, %p98
    %p100 = scmp.ne.s32.totalorder %s92, %s94
    %p101 = scmp.eq.s32.totalorder %s30, 3
    %p102 = por %p100, %p101
    %p103 = scmp.ne.s32.totalorder %s94, %s95
    %p104 = scmp.eq.s32.totalorder %s30, 0
    %p105 = por %p103, %p104
    %p106 = scmp.ne.s32.totalorder %s94, %s95
    %p107 = scmp.eq.s32.totalorder %s31, 3
    %p108 = por %p106, %p107
    %p110 = scmp.ne.s32.totalorder %s95, %s109
    %p111 = scmp.eq.s32.totalorder %s31, 0
    %p112 = por %p110, %p111
    %s114 = sadd.s32 %s113, 1
    %p117 = scmp.eq.s32.totalorder %s25, 3
    %p118 = scmp.ne.s32.totalorder %s113, %s115
    %p119 = scmp.eq.s32.totalorder %s25, 0
    %p120 = por %p118, %p119
    %p121 = scmp.ne.s32.totalorder %s113, %s115
    %p122 = scmp.eq.s32.totalorder %s30, 3
    %p123 = por %p121, %p122
    %p124 = scmp.ne.s32.totalorder %s115, %s116
    %p125 = scmp.eq.s32.totalorder %s30, 0
    %p126 = por %p124, %p125
    %p127 = scmp.ne.s32.totalorder %s115, %s116
    %p128 = scmp.eq.s32.totalorder %s31, 3
    %p129 = por %p127, %p128
    %p131 = scmp.ne.s32.totalorder %s116, %s130
    %p132 = scmp.eq.s32.totalorder %s31, 0
    %p133 = por %p131, %p132
    %s134 = ssub.s32 %s32, %s44
    %p135 = scmp.eq.s32.totalorder %s134, 0
    %s137 = sadd.s32 %s136, 1
    %s138 = scalar_select %p135, %s136, %s137
    %p141 = pneg %p135
    %p142 = scmp.eq.s32.totalorder %s25, 3
    %p143 = por %p141, %p142
    %p144 = scmp.ne.s32.totalorder %s136, %s139
    %p145 = scmp.eq.s32.totalorder %s25, 0
    %p146 = por %p144, %p145
    %p147 = scmp.ne.s32.totalorder %s136, %s139
    %p148 = scmp.eq.s32.totalorder %s30, 3
    %p149 = por %p147, %p148
    %p150 = scmp.ne.s32.totalorder %s139, %s140
    %p151 = scmp.eq.s32.totalorder %s30, 0
    %p152 = por %p150, %p151
    %p153 = scmp.ne.s32.totalorder %s139, %s140
    %p154 = scmp.eq.s32.totalorder %s31, 3
    %p155 = por %p153, %p154
    %p157 = scmp.ne.s32.totalorder %s140, %s156
    %p158 = scmp.eq.s32.totalorder %s31, 0
    %p159 = por %p157, %p158
    %s161 = sadd.s32 %s160, 1
    %p164 = scmp.eq.s32.totalorder %s25, 3
    %p165 = scmp.ne.s32.totalorder %s160, %s162
    %p166 = scmp.eq.s32.totalorder %s25, 0
    %p167 = por %p165, %p166
    %p168 = scmp.ne.s32.totalorder %s160, %s162
    %p169 = scmp.eq.s32.totalorder %s30, 3
    %p170 = por %p168, %p169
    %p171 = scmp.ne.s32.totalorder %s162, %s163
    %p172 = scmp.eq.s32.totalorder %s30, 0
    %p173 = por %p171, %p172
    %p174 = scmp.ne.s32.totalorder %s162, %s163
    %p175 = scmp.eq.s32.totalorder %s31, 3
    %p176 = por %p174, %p175
    %p178 = scmp.ne.s32.totalorder %s163, %s177
    %p179 = scmp.eq.s32.totalorder %s31, 0
    %p180 = por %p178, %p179
    %s181 = ssub.s32 %s33, %s40
    %p182 = scmp.eq.s32.totalorder %s181, 0
    %s184 = sadd.s32 %s183, 1
    %s185 = scalar_select %p182, %s183, %s184
    %p188 = pneg %p182
    %p189 = scmp.eq.s32.totalorder %s25, 3
    %p190 = por %p188, %p189
    %p191 = scmp.ne.s32.totalorder %s183, %s186
    %p192 = scmp.eq.s32.totalorder %s25, 0
    %p193 = por %p191, %p192
    %p194 = scmp.ne.s32.totalorder %s183, %s186
    %p195 = scmp.eq.s32.totalorder %s30, 3
    %p196 = por %p194, %p195
    %p197 = scmp.ne.s32.totalorder %s186, %s187
    %p198 = scmp.eq.s32.totalorder %s30, 0
    %p199 = por %p197, %p198
    %p200 = scmp.ne.s32.totalorder %s186, %s187
    %p201 = scmp.eq.s32.totalorder %s31, 3
    %p202 = por %p200, %p201
    %p204 = scmp.ne.s32.totalorder %s187, %s203
    %p205 = scmp.eq.s32.totalorder %s31, 0
    %p206 = por %p204, %p205
    %s207 = ssub.s32 %s33, %s40
    %p208 = scmp.eq.s32.totalorder %s207, 0
    %s210 = sadd.s32 %s209, 1
    %s211 = scalar_select %p208, %s209, %s210
    %p214 = pneg %p208
    %p215 = scmp.eq.s32.totalorder %s25, 3
    %p216 = por %p214, %p215
    %p217 = scmp.ne.s32.totalorder %s209, %s212
    %p218 = scmp.eq.s32.totalorder %s25, 0
    %p219 = por %p217, %p218
    %p220 = scmp.ne.s32.totalorder %s209, %s212
    %p221 = scmp.eq.s32.totalorder %s30, 3
    %p222 = por %p220, %p221
    %p223 = scmp.ne.s32.totalorder %s212, %s213
    %p224 = scmp.eq.s32.totalorder %s30, 0
    %p225 = por %p223, %p224
    %p226 = scmp.ne.s32.totalorder %s212, %s213
    %p227 = scmp.eq.s32.totalorder %s31, 3
    %p228 = por %p226, %p227
    %p230 = scmp.ne.s32.totalorder %s213, %s229
    %p231 = scmp.eq.s32.totalorder %s31, 0
    %p232 = por %p230, %p231
    %s233 = ssub.s32 %s33, %s40
    %p234 = scmp.eq.s32.totalorder %s233, 0
    %s236 = sadd.s32 %s235, 1
    %s237 = scalar_select %p234, %s235, %s236
    %p240 = pneg %p234
    %p241 = scmp.eq.s32.totalorder %s25, 3
    %p242 = por %p240, %p241
    %p243 = scmp.ne.s32.totalorder %s235, %s238
    %p244 = scmp.eq.s32.totalorder %s25, 0
    %p245 = por %p243, %p244
    %p246 = scmp.ne.s32.totalorder %s235, %s238
    %p247 = scmp.eq.s32.totalorder %s30, 3
    %p248 = por %p246, %p247
    %p249 = scmp.ne.s32.totalorder %s238, %s239
    %p250 = scmp.eq.s32.totalorder %s30, 0
    %p251 = por %p249, %p250
    %p252 = scmp.ne.s32.totalorder %s238, %s239
    %p253 = scmp.eq.s32.totalorder %s31, 3
    %p254 = por %p252, %p253
    %p256 = scmp.ne.s32.totalorder %s239, %s255
    %p257 = scmp.eq.s32.totalorder %s31, 0
    %p258 = por %p256, %p257
    %s259 = ssub.s32 %s33, %s40
    %p260 = scmp.eq.s32.totalorder %s259, 0
    %s262 = sadd.s32 %s261, 1
    %s263 = scalar_select %p260, %s261, %s262
    %p266 = pneg %p260
    %p267 = scmp.eq.s32.totalorder %s25, 3
    %p268 = por %p266, %p267
    %p269 = scmp.ne.s32.totalorder %s261, %s264
    %p270 = scmp.eq.s32.totalorder %s25, 0
    %p271 = por %p269, %p270
    %p272 = scmp.ne.s32.totalorder %s261, %s264
    %p273 = scmp.eq.s32.totalorder %s30, 3
    %p274 = por %p272, %p273
    %p275 = scmp.ne.s32.totalorder %s264, %s265
    %p276 = scmp.eq.s32.totalorder %s30, 0
    %p277 = por %p275, %p276
    %p278 = scmp.ne.s32.totalorder %s264, %s265
    %p279 = scmp.eq.s32.totalorder %s31, 3
    %p280 = por %p278, %p279
    %p282 = scmp.ne.s32.totalorder %s265, %s281
    %p283 = scmp.eq.s32.totalorder %s31, 0
    %p284 = por %p282, %p283
    %s285 = ssub.s32 %s33, %s40
    %p286 = scmp.eq.s32.totalorder %s285, 0
    %s288 = sadd.s32 %s287, 1
    %s289 = scalar_select %p286, %s287, %s288
    %p292 = pneg %p286
    %p293 = scmp.eq.s32.totalorder %s25, 3
    %p294 = por %p292, %p293
    %p295 = scmp.ne.s32.totalorder %s287, %s290
    %p296 = scmp.eq.s32.totalorder %s25, 0
    %p297 = por %p295, %p296
    %p298 = scmp.ne.s32.totalorder %s287, %s290
    %p299 = scmp.eq.s32.totalorder %s30, 3
    %p300 = por %p298, %p299
    %p301 = scmp.ne.s32.totalorder %s290, %s291
    %p302 = scmp.eq.s32.totalorder %s30, 0
    %p303 = por %p301, %p302
    %p304 = scmp.ne.s32.totalorder %s290, %s291
    %p305 = scmp.eq.s32.totalorder %s31, 3
    %p306 = por %p304, %p305
    %p308 = scmp.ne.s32.totalorder %s291, %s307
    %p309 = scmp.eq.s32.totalorder %s31, 0
    %p310 = por %p308, %p309
    %s311 = ssub.s32 %s33, %s40
    %p312 = scmp.eq.s32.totalorder %s311, 0
    %s314 = sadd.s32 %s313, 1
    %s315 = scalar_select %p312, %s313, %s314
    %p318 = pneg %p312
    %p319 = scmp.eq.s32.totalorder %s25, 3
    %p320 = por %p318, %p319
    %p321 = scmp.ne.s32.totalorder %s313, %s316
    %p322 = scmp.eq.s32.totalorder %s25, 0
    %p323 = por %p321, %p322
    %p324 = scmp.ne.s32.totalorder %s313, %s316
    %p325 = scmp.eq.s32.totalorder %s30, 3
    %p326 = por %p324, %p325
    %p327 = scmp.ne.s32.totalorder %s316, %s317
    %p328 = scmp.eq.s32.totalorder %s30, 0
    %p329 = por %p327, %p328
    %p330 = scmp.ne.s32.totalorder %s316, %s317
    %p331 = scmp.eq.s32.totalorder %s31, 3
    %p332 = por %p330, %p331
    %p334 = scmp.ne.s32.totalorder %s317, %s333
    %p335 = scmp.eq.s32.totalorder %s31, 0
    %p336 = por %p334, %p335
    %s337 = ssub.s32 %s33, %s40
    %p338 = scmp.eq.s32.totalorder %s337, 0
    %s340 = sadd.s32 %s339, 1
    %s341 = scalar_select %p338, %s339, %s340
    %p344 = pneg %p338
    %p345 = scmp.eq.s32.totalorder %s25, 3
    %p346 = por %p344, %p345
    %p347 = scmp.ne.s32.totalorder %s339, %s342
    %p348 = scmp.eq.s32.totalorder %s25, 0
    %p349 = por %p347, %p348
    %p350 = scmp.ne.s32.totalorder %s339, %s342
    %p351 = scmp.eq.s32.totalorder %s30, 3
    %p352 = por %p350, %p351
    %p353 = scmp.ne.s32.totalorder %s342, %s343
    %p354 = scmp.eq.s32.totalorder %s30, 0
    %p355 = por %p353, %p354
    %p356 = scmp.ne.s32.totalorder %s342, %s343
    %p357 = scmp.eq.s32.totalorder %s31, 3
    %p358 = por %p356, %p357
    %p360 = scmp.ne.s32.totalorder %s343, %s359
    %p361 = scmp.eq.s32.totalorder %s31, 0
    %p362 = por %p360, %p361
    %s363 = ssub.s32 %s33, %s40
    %p364 = scmp.eq.s32.totalorder %s363, 0
    %s366 = sadd.s32 %s365, 1
    %s367 = scalar_select %p364, %s365, %s366
    %p370 = pneg %p364
    %p371 = scmp.eq.s32.totalorder %s25, 3
    %p372 = por %p370, %p371
    %p373 = scmp.ne.s32.totalorder %s365, %s368
    %p374 = scmp.eq.s32.totalorder %s25, 0
    %p375 = por %p373, %p374
    %p376 = scmp.ne.s32.totalorder %s365, %s368
    %p377 = scmp.eq.s32.totalorder %s30, 3
    %p378 = por %p376, %p377
    %p379 = scmp.ne.s32.totalorder %s368, %s369
    %p380 = scmp.eq.s32.totalorder %s30, 0
    %p381 = por %p379, %p380
    %p382 = scmp.ne.s32.totalorder %s368, %s369
    %p383 = scmp.eq.s32.totalorder %s31, 3
    %p384 = por %p382, %p383
    %p386 = scmp.ne.s32.totalorder %s369, %s385
    %p387 = scmp.eq.s32.totalorder %s31, 0
    %p388 = por %p386, %p387
    %s389 = ssub.s32 %s33, %s40
    %p390 = scmp.eq.s32.totalorder %s389, 0
    %s392 = sadd.s32 %s391, 1
    %s393 = scalar_select %p390, %s391, %s392
    %p396 = pneg %p390
    %p397 = scmp.eq.s32.totalorder %s25, 3
    %p398 = por %p396, %p397
    %p399 = scmp.ne.s32.totalorder %s391, %s394
    %p400 = scmp.eq.s32.totalorder %s25, 0
    %p401 = por %p399, %p400
    %p402 = scmp.ne.s32.totalorder %s391, %s394
    %p403 = scmp.eq.s32.totalorder %s30, 3
    %p404 = por %p402, %p403
    %p405 = scmp.ne.s32.totalorder %s394, %s395
    %p406 = scmp.eq.s32.totalorder %s30, 0
    %p407 = por %p405, %p406
    %p408 = scmp.ne.s32.totalorder %s394, %s395
    %p409 = scmp.eq.s32.totalorder %s31, 3
    %p410 = por %p408, %p409
    %p412 = scmp.ne.s32.totalorder %s395, %s411
    %p413 = scmp.eq.s32.totalorder %s31, 0
    %p414 = por %p412, %p413
    %s415 = ssub.s32 %s33, %s40
    %p416 = scmp.eq.s32.totalorder %s415, 0
    %s418 = sadd.s32 %s417, 1
    %s419 = scalar_select %p416, %s417, %s418
    %p422 = pneg %p416
    %p423 = scmp.eq.s32.totalorder %s25, 3
    %p424 = por %p422, %p423
    %p425 = scmp.ne.s32.totalorder %s417, %s420
    %p426 = scmp.eq.s32.totalorder %s25, 0
    %p427 = por %p425, %p426
    %p428 = scmp.ne.s32.totalorder %s417, %s420
    %p429 = scmp.eq.s32.totalorder %s30, 3
    %p430 = por %p428, %p429
    %p431 = scmp.ne.s32.totalorder %s420, %s421
    %p432 = scmp.eq.s32.totalorder %s30, 0
    %p433 = por %p431, %p432
    %p434 = scmp.ne.s32.totalorder %s420, %s421
    %p435 = scmp.eq.s32.totalorder %s31, 3
    %p436 = por %p434, %p435
    %p438 = scmp.ne.s32.totalorder %s421, %s437
    %p439 = scmp.eq.s32.totalorder %s31, 0
    %p440 = por %p438, %p439
    %s442 = sadd.s32 %s441, 1
    %p445 = scmp.eq.s32.totalorder %s25, 3
    %p446 = scmp.ne.s32.totalorder %s441, %s443
    %p447 = scmp.eq.s32.totalorder %s25, 0
    %p448 = por %p446, %p447
    %p449 = scmp.ne.s32.totalorder %s441, %s443
    %p450 = scmp.eq.s32.totalorder %s30, 3
    %p451 = por %p449, %p450
    %p452 = scmp.ne.s32.totalorder %s443, %s444
    %p453 = scmp.eq.s32.totalorder %s30, 0
    %p454 = por %p452, %p453
    %p455 = scmp.ne.s32.totalorder %s443, %s444
    %p456 = scmp.eq.s32.totalorder %s31, 3
    %p457 = por %p455, %p456
    %p459 = scmp.ne.s32.totalorder %s444, %s458
    %p460 = scmp.eq.s32.totalorder %s31, 0
    %p461 = por %p459, %p460
    %s463 = sadd.s32 %s462, 1
    %p466 = scmp.eq.s32.totalorder %s25, 3
    %p467 = scmp.ne.s32.totalorder %s462, %s464
    %p468 = scmp.eq.s32.totalorder %s25, 0
    %p469 = por %p467, %p468
    %p470 = scmp.ne.s32.totalorder %s462, %s464
    %p471 = scmp.eq.s32.totalorder %s30, 3
    %p472 = por %p470, %p471
    %p473 = scmp.ne.s32.totalorder %s464, %s465
    %p474 = scmp.eq.s32.totalorder %s30, 0
    %p475 = por %p473, %p474
    %p476 = scmp.ne.s32.totalorder %s464, %s465
    %p477 = scmp.eq.s32.totalorder %s31, 3
    %p478 = por %p476, %p477
    %p480 = scmp.ne.s32.totalorder %s465, %s479
    %p481 = scmp.eq.s32.totalorder %s31, 0
    %p482 = por %p480, %p481
    %s484 = sadd.s32 %s483, 1
    %p487 = scmp.eq.s32.totalorder %s25, 3
    %p488 = scmp.ne.s32.totalorder %s483, %s485
    %p489 = scmp.eq.s32.totalorder %s25, 0
    %p490 = por %p488, %p489
    %p491 = scmp.ne.s32.totalorder %s483, %s485
    %p492 = scmp.eq.s32.totalorder %s30, 3
    %p493 = por %p491, %p492
    %p494 = scmp.ne.s32.totalorder %s485, %s486
    %p495 = scmp.eq.s32.totalorder %s30, 0
    %p496 = por %p494, %p495
    %p497 = scmp.ne.s32.totalorder %s485, %s486
    %p498 = scmp.eq.s32.totalorder %s31, 3
    %p499 = por %p497, %p498
    %p501 = scmp.ne.s32.totalorder %s486, %s500
    %p502 = scmp.eq.s32.totalorder %s31, 0
    %p503 = por %p501, %p502
    %s504 = ssub.s32 %s32, %s44
    %p505 = scmp.eq.s32.totalorder %s504, 0
    %s507 = sadd.s32 %s506, 1
    %s508 = scalar_select %p505, %s506, %s507
    %p511 = pneg %p505
    %p512 = scmp.eq.s32.totalorder %s25, 3
    %p513 = por %p511, %p512
    %p514 = scmp.ne.s32.totalorder %s506, %s509
    %p515 = scmp.eq.s32.totalorder %s25, 0
    %p516 = por %p514, %p515
    %p517 = scmp.ne.s32.totalorder %s506, %s509
    %p518 = scmp.eq.s32.totalorder %s30, 3
    %p519 = por %p517, %p518
    %p520 = scmp.ne.s32.totalorder %s509, %s510
    %p521 = scmp.eq.s32.totalorder %s30, 0
    %p522 = por %p520, %p521
    %p523 = scmp.ne.s32.totalorder %s509, %s510
    %p524 = scmp.eq.s32.totalorder %s31, 3
    %p525 = por %p523, %p524
    %p527 = scmp.ne.s32.totalorder %s510, %s526
    %p528 = scmp.eq.s32.totalorder %s31, 0
    %p529 = por %p527, %p528
    %p530 = scmp.le.s32.totalorder 1, %s25
    %p531 = scmp.lt.s32.totalorder %s25, 5
    %p532 = pnand %p530, %p531
    %p533 = pneg %p532
    // Predicated region
    $region9: #{ts_transformer_forward.3} parent=5 // pred_check
      _
    $region10: #{ts_transformer_forward.3} parent=5 // pred_check_branch
      %535 = sbr.rel (%p532) target = $region12
    $region11: #{ts_transformer_forward.3} parent=5 // pred_region
      %s536 = ssub.s32 %s25, 1
      // Predicated region
      $region13: #{ts_transformer_forward.3} parent=11 // pred_check
        %p537 = pneg %p84
      $region14: #{ts_transformer_forward.3} parent=11 // pred_check_branch
        %539 = sbr.rel (%p537) target = $region16
      $region15: #{ts_transformer_forward.3} parent=11 // pred_region
        _
      $region16: #{ts_transformer_forward.3} parent=11 // pred_fallthru
        _
      // Predicated region
      $region17: #{ts_transformer_forward.3} parent=11 // pred_check
        %p540 = pneg %p105
      $region18: #{ts_transformer_forward.3} parent=11 // pred_check_branch
        %542 = sbr.rel (%p540) target = $region20
      $region19: #{ts_transformer_forward.3} parent=11 // pred_region
        _
      $region20: #{ts_transformer_forward.3} parent=11 // pred_fallthru
        _
      // Predicated region
      $region21: #{ts_transformer_forward.3} parent=11 // pred_check
        %p543 = pneg %p126
      $region22: #{ts_transformer_forward.3} parent=11 // pred_check_branch
        %545 = sbr.rel (%p543) target = $region24
      $region23: #{ts_transformer_forward.3} parent=11 // pred_region
        _
      $region24: #{ts_transformer_forward.3} parent=11 // pred_fallthru
        _
      // Predicated region
      $region25: #{ts_transformer_forward.3} parent=11 // pred_check
        %p546 = pneg %p173
      $region26: #{ts_transformer_forward.3} parent=11 // pred_check_branch
        %548 = sbr.rel (%p546) target = $region28
      $region27: #{ts_transformer_forward.3} parent=11 // pred_region
        _
      $region28: #{ts_transformer_forward.3} parent=11 // pred_fallthru
        _
      // Predicated region
      $region29: #{ts_transformer_forward.3} parent=11 // pred_check
        %p549 = pneg %p454
      $region30: #{ts_transformer_forward.3} parent=11 // pred_check_branch
        %551 = sbr.rel (%p549) target = $region32
      $region31: #{ts_transformer_forward.3} parent=11 // pred_region
        _
      $region32: #{ts_transformer_forward.3} parent=11 // pred_fallthru
        _
      // Predicated region
      $region33: #{ts_transformer_forward.3} parent=11 // pred_check
        %p552 = pneg %p475
      $region34: #{ts_transformer_forward.3} parent=11 // pred_check_branch
        %554 = sbr.rel (%p552) target = $region36
      $region35: #{ts_transformer_forward.3} parent=11 // pred_region
        _
      $region36: #{ts_transformer_forward.3} parent=11 // pred_fallthru
        _
      // Predicated region
      $region37: #{ts_transformer_forward.3} parent=11 // pred_check
        %p555 = pneg %p496
      $region38: #{ts_transformer_forward.3} parent=11 // pred_check_branch
        %557 = sbr.rel (%p555) target = $region40
      $region39: #{ts_transformer_forward.3} parent=11 // pred_region
        _
      $region40: #{ts_transformer_forward.3} parent=11 // pred_fallthru
        _
    $region12: #{ts_transformer_forward.3} parent=5 // pred_fallthru
      _
    %p558 = scmp.lt.s32.totalorder %s25, 4
    // Predicated region
    $region41: #{ts_transformer_forward.3} parent=5 // pred_check
      %p559 = pneg %p558
    $region42: #{ts_transformer_forward.3} parent=5 // pred_check_branch
      %561 = sbr.rel (%p559) target = $region44
    $region43: #{ts_transformer_forward.3} parent=5 // pred_region
      // Predicated region
      $region45: #{ts_transformer_forward.3} parent=43 // pred_check
        %p562 = pneg %p57
      $region46: #{ts_transformer_forward.3} parent=43 // pred_check_branch
        %564 = sbr.rel (%p562) target = $region48
      $region47: #{ts_transformer_forward.3} parent=43 // pred_region
        %p565 = scmp.lt.s32.totalorder %s32, 1
        %s566 = scalar_select %p565, %s32, 1
        %s567 = smul.addr %s566, 8
        %s568 = scalar_lea.vmem %s0, %s567
      $region48: #{ts_transformer_forward.3} parent=43 // pred_fallthru
        _
      // Predicated region
      $region49: #{ts_transformer_forward.3} parent=43 // pred_check
        %p569 = pneg %p146
      $region50: #{ts_transformer_forward.3} parent=43 // pred_check_branch
        %571 = sbr.rel (%p569) target = $region52
      $region51: #{ts_transformer_forward.3} parent=43 // pred_region
        %p572 = scmp.lt.s32.totalorder %s32, 1
        %s573 = scalar_select %p572, %s32, 1
        %s574 = smul.addr %s573, 8
        %s575 = scalar_lea.vmem %s4, %s574
      $region52: #{ts_transformer_forward.3} parent=43 // pred_fallthru
        _
      // Predicated region
      $region53: #{ts_transformer_forward.3} parent=43 // pred_check
        %p576 = pneg %p193
      $region54: #{ts_transformer_forward.3} parent=43 // pred_check_branch
        %578 = sbr.rel (%p576) target = $region56
      $region55: #{ts_transformer_forward.3} parent=43 // pred_region
        %p579 = scmp.lt.s32.totalorder %s33, 1
        %s580 = scalar_select %p579, %s33, 1
        %s581 = scalar_lea.vmem %s6, %s580
      $region56: #{ts_transformer_forward.3} parent=43 // pred_fallthru
        _
      // Predicated region
      $region57: #{ts_transformer_forward.3} parent=43 // pred_check
        %p582 = pneg %p219
      $region58: #{ts_transformer_forward.3} parent=43 // pred_check_branch
        %584 = sbr.rel (%p582) target = $region60
      $region59: #{ts_transformer_forward.3} parent=43 // pred_region
        %p585 = scmp.lt.s32.totalorder %s33, 1
        %s586 = scalar_select %p585, %s33, 1
        %s587 = smul.addr %s586, 4
        %s588 = smul.addr %s587, 4
        %s589 = scalar_lea.vmem %s7, %s588
      $region60: #{ts_transformer_forward.3} parent=43 // pred_fallthru
        _
      // Predicated region
      $region61: #{ts_transformer_forward.3} parent=43 // pred_check
        %p590 = pneg %p245
      $region62: #{ts_transformer_forward.3} parent=43 // pred_check_branch
        %592 = sbr.rel (%p590) target = $region64
      $region63: #{ts_transformer_forward.3} parent=43 // pred_region
        %p593 = scmp.lt.s32.totalorder %s33, 1
        %s594 = scalar_select %p593, %s33, 1
        %s595 = smul.addr %s594, 4
        %s596 = smul.addr %s595, 4
        %s597 = scalar_lea.vmem %s8, %s596
      $region64: #{ts_transformer_forward.3} parent=43 // pred_fallthru
        _
      // Predicated region
      $region65: #{ts_transformer_forward.3} parent=43 // pred_check
        %p598 = pneg %p271
      $region66: #{ts_transformer_forward.3} parent=43 // pred_check_branch
        %600 = sbr.rel (%p598) target = $region68
      $region67: #{ts_transformer_forward.3} parent=43 // pred_region
        %p601 = scmp.lt.s32.totalorder %s33, 1
        %s602 = scalar_select %p601, %s33, 1
        %s603 = scalar_lea.vmem %s9, %s602
      $region68: #{ts_transformer_forward.3} parent=43 // pred_fallthru
        _
      // Predicated region
      $region69: #{ts_transformer_forward.3} parent=43 // pred_check
        %p604 = pneg %p297
      $region70: #{ts_transformer_forward.3} parent=43 // pred_check_branch
        %606 = sbr.rel (%p604) target = $region72
      $region71: #{ts_transformer_forward.3} parent=43 // pred_region
        %p607 = scmp.lt.s32.totalorder %s33, 1
        %s608 = scalar_select %p607, %s33, 1
        %s609 = smul.addr %s608, 4
        %s610 = smul.addr %s609, 4
        %s611 = scalar_lea.vmem %s10, %s610
      $region72: #{ts_transformer_forward.3} parent=43 // pred_fallthru
        _
      // Predicated region
      $region73: #{ts_transformer_forward.3} parent=43 // pred_check
        %p612 = pneg %p323
      $region74: #{ts_transformer_forward.3} parent=43 // pred_check_branch
        %614 = sbr.rel (%p612) target = $region76
      $region75: #{ts_transformer_forward.3} parent=43 // pred_region
        %p615 = scmp.lt.s32.totalorder %s33, 1
        %s616 = scalar_select %p615, %s33, 1
        %s617 = smul.addr %s616, 4
        %s618 = smul.addr %s617, 4
        %s619 = scalar_lea.vmem %s11, %s618
      $region76: #{ts_transformer_forward.3} parent=43 // pred_fallthru
        _
      // Predicated region
      $region77: #{ts_transformer_forward.3} parent=43 // pred_check
        %p620 = pneg %p349
      $region78: #{ts_transformer_forward.3} parent=43 // pred_check_branch
        %622 = sbr.rel (%p620) target = $region80
      $region79: #{ts_transformer_forward.3} parent=43 // pred_region
        %p623 = scmp.lt.s32.totalorder %s33, 1
        %s624 = scalar_select %p623, %s33, 1
        %s625 = smul.addr %s624, 4
        %s626 = smul.addr %s625, 4
        %s627 = scalar_lea.vmem %s12, %s626
      $region80: #{ts_transformer_forward.3} parent=43 // pred_fallthru
        _
      // Predicated region
      $region81: #{ts_transformer_forward.3} parent=43 // pred_check
        %p628 = pneg %p375
      $region82: #{ts_transformer_forward.3} parent=43 // pred_check_branch
        %630 = sbr.rel (%p628) target = $region84
      $region83: #{ts_transformer_forward.3} parent=43 // pred_region
        %p631 = scmp.lt.s32.totalorder %s33, 1
        %s632 = scalar_select %p631, %s33, 1
        %s633 = scalar_lea.vmem %s13, %s632
      $region84: #{ts_transformer_forward.3} parent=43 // pred_fallthru
        _
      // Predicated region
      $region85: #{ts_transformer_forward.3} parent=43 // pred_check
        %p634 = pneg %p401
      $region86: #{ts_transformer_forward.3} parent=43 // pred_check_branch
        %636 = sbr.rel (%p634) target = $region88
      $region87: #{ts_transformer_forward.3} parent=43 // pred_region
        %p637 = scmp.lt.s32.totalorder %s33, 1
        %s638 = scalar_select %p637, %s33, 1
        %s639 = smul.addr %s638, 4
        %s640 = smul.addr %s639, 4
        %s641 = scalar_lea.vmem %s14, %s640
      $region88: #{ts_transformer_forward.3} parent=43 // pred_fallthru
        _
      // Predicated region
      $region89: #{ts_transformer_forward.3} parent=43 // pred_check
        %p642 = pneg %p427
      $region90: #{ts_transformer_forward.3} parent=43 // pred_check_branch
        %644 = sbr.rel (%p642) target = $region92
      $region91: #{ts_transformer_forward.3} parent=43 // pred_region
        %p645 = scmp.lt.s32.totalorder %s33, 1
        %s646 = scalar_select %p645, %s33, 1
        %s647 = smul.addr %s646, 16
        %s648 = smul.addr %s647, 4
        %s649 = scalar_lea.vmem %s15, %s648
      $region92: #{ts_transformer_forward.3} parent=43 // pred_fallthru
        _
    $region44: #{ts_transformer_forward.3} parent=5 // pred_fallthru
      _
    %p650 = scmp.le.s32.totalorder 1, %s25
    %p651 = scmp.lt.s32.totalorder %s25, 5
    %p652 = pnand %p650, %p651
    %p653 = pneg %p652
    // Predicated region
    $region93: #{ts_transformer_forward.3} parent=5 // pred_check
      _
    $region94: #{ts_transformer_forward.3} parent=5 // pred_check_branch
      %655 = sbr.rel (%p652) target = $region96
    $region95: #{ts_transformer_forward.3} parent=5 // pred_region
      %s656 = ssub.s32 %s25, 1
      %p657 = scmp.lt.s32.totalorder %s34, 1
      %s658 = scalar_select %p657, %s34, 1
      %s659 = smul.addr %s658, 8
      %s660 = scalar_lea.vmem %s0, %s659
      %p661 = pneg %p63
      %p662 = pneg %p60
      %p663 = pneg %p84
      %p664 = pneg %p81
      %p665 = pneg %p105
      %p666 = pneg %p102
      %p667 = pneg %p126
      %p668 = pneg %p123
      %p669 = scmp.lt.s32.totalorder %s34, 1
      %s670 = scalar_select %p669, %s34, 1
      %s671 = smul.addr %s670, 8
      %s672 = scalar_lea.vmem %s4, %s671
      %p673 = pneg %p152
      %p674 = pneg %p149
      %p675 = pneg %p173
      %p676 = pneg %p170
      %p677 = scmp.lt.s32.totalorder %s35, 1
      %s678 = scalar_select %p677, %s35, 1
      %s679 = scalar_lea.vmem %s6, %s678
      %p680 = pneg %p199
      %p681 = pneg %p196
      %p682 = scmp.lt.s32.totalorder %s35, 1
      %s683 = scalar_select %p682, %s35, 1
      %s684 = smul.addr %s683, 4
      %s685 = smul.addr %s684, 4
      %s686 = scalar_lea.vmem %s7, %s685
      %p687 = pneg %p225
      %p688 = pneg %p222
      %p689 = scmp.lt.s32.totalorder %s35, 1
      %s690 = scalar_select %p689, %s35, 1
      %s691 = smul.addr %s690, 4
      %s692 = smul.addr %s691, 4
      %s693 = scalar_lea.vmem %s8, %s692
      %p694 = pneg %p251
      %p695 = pneg %p248
      %p696 = scmp.lt.s32.totalorder %s35, 1
      %s697 = scalar_select %p696, %s35, 1
      %s698 = scalar_lea.vmem %s9, %s697
      %p699 = pneg %p277
      %p700 = pneg %p274
      %p701 = scmp.lt.s32.totalorder %s35, 1
      %s702 = scalar_select %p701, %s35, 1
      %s703 = smul.addr %s702, 4
      %s704 = smul.addr %s703, 4
      %s705 = scalar_lea.vmem %s10, %s704
      %p706 = pneg %p303
      %p707 = pneg %p300
      %p708 = scmp.lt.s32.totalorder %s35, 1
      %s709 = scalar_select %p708, %s35, 1
      %s710 = smul.addr %s709, 4
      %s711 = smul.addr %s710, 4
      %s712 = scalar_lea.vmem %s11, %s711
      %p713 = pneg %p329
      %p714 = pneg %p326
      %p715 = scmp.lt.s32.totalorder %s35, 1
      %s716 = scalar_select %p715, %s35, 1
      %s717 = smul.addr %s716, 4
      %s718 = smul.addr %s717, 4
      %s719 = scalar_lea.vmem %s12, %s718
      %p720 = pneg %p355
      %p721 = pneg %p352
      %p722 = scmp.lt.s32.totalorder %s35, 1
      %s723 = scalar_select %p722, %s35, 1
      %s724 = scalar_lea.vmem %s13, %s723
      %p725 = pneg %p381
      %p726 = pneg %p378
      %p727 = scmp.lt.s32.totalorder %s35, 1
      %s728 = scalar_select %p727, %s35, 1
      %s729 = smul.addr %s728, 4
      %s730 = smul.addr %s729, 4
      %s731 = scalar_lea.vmem %s14, %s730
      %p732 = pneg %p407
      %p733 = pneg %p404
      %p734 = scmp.lt.s32.totalorder %s35, 1
      %s735 = scalar_select %p734, %s35, 1
      %s736 = smul.addr %s735, 16
      %s737 = smul.addr %s736, 4
      %s738 = scalar_lea.vmem %s15, %s737
      %p739 = pneg %p433
      %p740 = pneg %p430
      %p741 = pneg %p454
      %p742 = pneg %p451
      %p743 = pneg %p475
      %p744 = pneg %p472
      %p745 = pneg %p496
      %p746 = pneg %p493
      %p747 = pneg %p522
      %p748 = pneg %p519
      %p749 = scmp.lt.s32.totalorder %s34, 1
      %s750 = scalar_select %p749, %s34, 1
      %s751 = smul.addr %s750, 8
      %s752 = scalar_lea.vmem %s19, %s751
      %p753 = scmp.lt.s32.totalorder %s34, 1
      %s754 = scalar_select %p753, %s34, 1
      %s755 = smul.addr %s754, 8
      %s756 = scalar_lea.vmem %s0, %s755
      %p757 = scmp.lt.s32.totalorder %s34, 1
      %s758 = scalar_select %p757, %s34, 1
      %s759 = smul.addr %s758, 8
      %s760 = scalar_lea.vmem %s4, %s759
      %p761 = scmp.lt.s32.totalorder %s35, 1
      %s762 = scalar_select %p761, %s35, 1
      %s763 = scalar_lea.vmem %s6, %s762
      %p764 = scmp.lt.s32.totalorder %s35, 1
      %s765 = scalar_select %p764, %s35, 1
      %s766 = smul.addr %s765, 4
      %s767 = smul.addr %s766, 4
      %s768 = scalar_lea.vmem %s7, %s767
      %p769 = scmp.lt.s32.totalorder %s35, 1
      %s770 = scalar_select %p769, %s35, 1
      %s771 = smul.addr %s770, 4
      %s772 = smul.addr %s771, 4
      %s773 = scalar_lea.vmem %s8, %s772
      %p774 = scmp.lt.s32.totalorder %s35, 1
      %s775 = scalar_select %p774, %s35, 1
      %s776 = scalar_lea.vmem %s9, %s775
      %p777 = scmp.lt.s32.totalorder %s35, 1
      %s778 = scalar_select %p777, %s35, 1
      %s779 = smul.addr %s778, 4
      %s780 = smul.addr %s779, 4
      %s781 = scalar_lea.vmem %s10, %s780
      %p782 = scmp.lt.s32.totalorder %s35, 1
      %s783 = scalar_select %p782, %s35, 1
      %s784 = smul.addr %s783, 4
      %s785 = smul.addr %s784, 4
      %s786 = scalar_lea.vmem %s11, %s785
      %p787 = scmp.lt.s32.totalorder %s35, 1
      %s788 = scalar_select %p787, %s35, 1
      %s789 = smul.addr %s788, 4
      %s790 = smul.addr %s789, 4
      %s791 = scalar_lea.vmem %s12, %s790
      %p792 = scmp.lt.s32.totalorder %s35, 1
      %s793 = scalar_select %p792, %s35, 1
      %s794 = scalar_lea.vmem %s13, %s793
      %p795 = scmp.lt.s32.totalorder %s35, 1
      %s796 = scalar_select %p795, %s35, 1
      %s797 = smul.addr %s796, 4
      %s798 = smul.addr %s797, 4
      %s799 = scalar_lea.vmem %s14, %s798
      %p800 = scmp.lt.s32.totalorder %s35, 1
      %s801 = scalar_select %p800, %s35, 1
      %s802 = smul.addr %s801, 16
      %s803 = smul.addr %s802, 4
      %s804 = scalar_lea.vmem %s15, %s803
      %p805 = scmp.lt.s32.totalorder %s34, 1
      %s806 = scalar_select %p805, %s34, 1
      %s807 = smul.addr %s806, 8
      %s808 = scalar_lea.vmem %s19, %s807
      %p810 = scmp.eq.s32.totalorder %s35, 0
      // Predicated region
      $region97: #{ts_transformer_forward.3} parent=95 // pred_check
        %p811 = pneg %p810
      $region98: #{ts_transformer_forward.3} parent=95 // pred_check_branch
        %813 = sbr.rel (%p811) target = $region100
      $region99: #{ts_transformer_forward.3} parent=95 // pred_region
        %v814 = vld [vmem:[%s756] sm:$0xff]
        %v815 = vld [vmem:[%s1] sm:$0x3]
        %v816 = vld [vmem:[%s2] sm:$0x1]
        %v818 = vlaneseq
        %v819 = vshrl.u32 %v818, 7
        %v820 = vsub.s32 0, %v819
        %v821 = vrot.slane %v816, %v820
        %vm823 = vcmask 15360
        %v825 = vsel %vm823, %v814, 0
        %vm827 = vcmask 1041408
        %v829 = vsel %vm827, %v815, 0
        %831 = vmatprep.subr.mxu0 0.0
        %832 = vmatpush1.msra.mxu0 %v829
        %833 = vmatprep.subr.mxu0 0.0
        %834 = vmatpush1.msra.mxu0 0.0
        %835 = vmatprep.subr.mxu0 0.0
        %836 = vmatpush1.msra.mxu0 0.0
        %837 = vmatprep.subr.mxu0 0.0
        %838 = vmatpush1.msra.mxu0 0.0
        %839 = vmatprep.subr.mxu0 0.0
        %840 = vmatpush1.msra.mxu0 0.0
        %841 = vmatprep.subr.mxu0 0.0
        %842 = vmatpush1.msra.mxu0 0.0
        %843 = vmatprep.subr.mxu0 0.0
        %844 = vmatpush1.msra.mxu0 0.0
        %845 = vmatprep.subr.mxu0 0.0
        %846 = vmatpush1.msra.mxu0 0.0
        %847 = vmatprep.subr.mxu0 0.0
        %848 = vmatpush1.msra.mxu0 0.0
        %849 = vmatprep.subr.mxu0 0.0
        %850 = vmatpush1.msra.mxu0 0.0
        %851 = vmatprep.subr.mxu0 0.0
        %852 = vmatpush1.msra.mxu0 0.0
        %853 = vmatprep.subr.mxu0 0.0
        %854 = vmatpush1.msra.mxu0 0.0
        %855 = vmatprep.subr.mxu0 0.0
        %856 = vmatpush1.msra.mxu0 0.0
        %857 = vmatprep.subr.mxu0 0.0
        %858 = vmatpush1.msra.mxu0 0.0
        %859 = vmatprep.subr.mxu0 0.0
        %860 = vmatpush1.msra.mxu0 0.0
        %861 = vmatprep.subr.mxu0 0.0
        %862 = vmatpush1.msra.mxu0 0.0
        %863 = vmatprep.subr.mxu0 0.0
        %864 = vmatpush1.msra.mxu0 0.0
        %865 = vmatprep.subr.mxu0 0.0
        %866 = vmatpush1.msra.mxu0 0.0
        %867 = vmatprep.subr.mxu0 0.0
        %868 = vmatpush1.msra.mxu0 0.0
        %869 = vmatprep.subr.mxu0 0.0
        %870 = vmatpush1.msra.mxu0 0.0
        %871 = vmatprep.subr.mxu0 0.0
        %872 = vmatpush1.msra.mxu0 0.0
        %873 = vmatprep.subr.mxu0 0.0
        %874 = vmatpush1.msra.mxu0 0.0
        %875 = vmatprep.subr.mxu0 0.0
        %876 = vmatpush1.msra.mxu0 0.0
        %877 = vmatprep.subr.mxu0 0.0
        %878 = vmatpush1.msra.mxu0 0.0
        %879 = vmatprep.subr.mxu0 0.0
        %880 = vmatpush1.msra.mxu0 0.0
        %881 = vmatprep.subr.mxu0 0.0
        %882 = vmatpush1.msra.mxu0 0.0
        %883 = vmatprep.subr.mxu0 0.0
        %884 = vmatpush1.msra.mxu0 0.0
        %885 = vmatprep.subr.mxu0 0.0
        %886 = vmatpush1.msra.mxu0 0.0
        %887 = vmatprep.subr.mxu0 0.0
        %888 = vmatpush1.msra.mxu0 0.0
        %889 = vmatprep.subr.mxu0 0.0
        %890 = vmatpush1.msra.mxu0 0.0
        %891 = vmatprep.subr.mxu0 0.0
        %892 = vmatpush1.msra.mxu0 0.0
        %893 = vmatprep.subr.mxu0 0.0
        %894 = vmatpush1.msra.mxu0 0.0
        %895 = vmatprep.mubr.f32.mxu0 0.0
        %896 = vmatmul.mubr.f32.gmra.mrb[0].mxu0 %v825
        %v897 = vpop.f32.mrb[0].mxu0
        %v898 = vadd.f32 %v821, %v897
        %v899 = vpop.f32.mrb[0].mxu0
        %900 = vdwg.mxu0
        %v901 = vld [vmem:[%s3] sm:$0xff]
        %v902 = vadd.f32 %v898, %v901
        %vm903 = vcmask 261120
        %904 = vst.msk [vmem:[#allocation2] sm:$0xff] %vm903, %v902
      $region100: #{ts_transformer_forward.3} parent=95 // pred_fallthru
        _
      %v905 = vld [vmem:[#allocation2] sm:$0xff]
      %v906 = vld [vmem:[%s760] sm:$0xff]
      %v907 = vld [vmem:[%s763] sm:$0x1]
      %vm908 = vcmask 261120
      %v909 = vsel %vm908, %v905, 0.0
      %910 = vadd.xlane.f32.xlu0 %v909
      %v911 = vpop.xlane.xlu0 %910
      %v912 = vrcp.pop 32.0
      %v913 = vmul.f32 %v911, %v912
      %v914 = vsub.f32 %v905, %v913
      %v915 = vmul.f32 %v914, %v914
      %v916 = vsel %vm908, %v915, 0.0
      %917 = vadd.xlane.f32.xlu0 %v916
      %v918 = vpop.xlane.xlu0 %917
      %v919 = vmul.f32 %v918, %v912
      %v920 = vadd.f32 %v919, 1e-05
      %v921 = vrsqrt.pop %v920
      %v922 = vmul.f32 %v914, %v921
      %v924 = vlaneseq
      %v925 = vshrl.u32 %v924, 7
      %v926 = vsub.s32 0, %v925
      %v927 = vrot.slane %v907, %v926
      %v929 = vmul.f32 %v922, %v927
      %v930 = vpack.c.bf16 %v929, %v929
      %v931 = vld [vmem:[%s768] sm:$0xf]
      %v932 = vld [vmem:[%s768 + $0x4] sm:$0xf]
      %v933 = vld [vmem:[%s768 + $0x8] sm:$0xf]
      %v934 = vld [vmem:[%s768 + $0xc] sm:$0xf]
      %v939 = vunpack.c.l.b16 %v931
      %v940 = vunpack.c.l.b16 %v932
      %v941 = vunpack.c.l.b16 %v933
      %v942 = vunpack.c.l.b16 %v934
      %v943 = vpack.c.b16 %v940, %v939
      %v944 = vpack.c.b16 %v942, %v941
      %v948 = vsel %vm908, %v930, 0
      %950 = vmatprep.subr.bf16.mxu0 0
      %951 = vmatpush1.bf16.msra.mxu0 %v943
      %952 = vmatprep.subr.bf16.mxu0 0
      %953 = vmatpush1.bf16.msra.mxu0 %v944
      %954 = vmatprep.subr.bf16.mxu0 0
      %955 = vmatpush1.bf16.msra.mxu0 0
      %956 = vmatprep.subr.bf16.mxu0 0
      %957 = vmatpush1.bf16.msra.mxu0 0
      %958 = vmatprep.subr.bf16.mxu0 0
      %959 = vmatpush1.bf16.msra.mxu0 0
      %960 = vmatprep.subr.bf16.mxu0 0
      %961 = vmatpush1.bf16.msra.mxu0 0
      %962 = vmatprep.subr.bf16.mxu0 0
      %963 = vmatpush1.bf16.msra.mxu0 0
      %964 = vmatprep.subr.bf16.mxu0 0
      %965 = vmatpush1.bf16.msra.mxu0 0
      %966 = vmatprep.subr.bf16.mxu0 0
      %967 = vmatpush1.bf16.msra.mxu0 0
      %968 = vmatprep.subr.bf16.mxu0 0
      %969 = vmatpush1.bf16.msra.mxu0 0
      %970 = vmatprep.subr.bf16.mxu0 0
      %971 = vmatpush1.bf16.msra.mxu0 0
      %972 = vmatprep.subr.bf16.mxu0 0
      %973 = vmatpush1.bf16.msra.mxu0 0
      %974 = vmatprep.subr.bf16.mxu0 0
      %975 = vmatpush1.bf16.msra.mxu0 0
      %976 = vmatprep.subr.bf16.mxu0 0
      %977 = vmatpush1.bf16.msra.mxu0 0
      %978 = vmatprep.subr.bf16.mxu0 0
      %979 = vmatpush1.bf16.msra.mxu0 0
      %980 = vmatprep.subr.bf16.mxu0 0
      %981 = vmatpush1.bf16.msra.mxu0 0
      %982 = vmatprep.mubr.bf16.mxu0 0
      %983 = vmatmul.mubr.bf16.gmra.mrb[0].mxu0 %v948
      %v984 = vpop.f32.mrb[0].mxu0
      %v985 = vadd.f32 0.0, %v984
      %v986 = vpop.f32.mrb[0].mxu0
      %v987 = vpop.f32.mrb[0].mxu0
      %v988 = vpop.f32.mrb[0].mxu0
      %989 = vdwg.mxu0
      %v990 = vld [vmem:[%s773] sm:$0xf]
      %v991 = vld [vmem:[%s773 + $0x4] sm:$0xf]
      %v992 = vld [vmem:[%s773 + $0x8] sm:$0xf]
      %v993 = vld [vmem:[%s773 + $0xc] sm:$0xf]
      %v994 = vld [vmem:[%s5] sm:$0xff]
      %v995 = vpack.c.bf16 %v985, %v985
      %v996 = vunpack.c.l.bf16 %v990
      %v997 = vunpack.c.l.bf16 %v991
      %v998 = vunpack.c.l.bf16 %v992
      %v999 = vunpack.c.l.bf16 %v993
      %1001 = vrot.lane.b32.xlu0 %v995, 96
      %v1002 = vpop.permute.xlu0 %1001
      %vm1003 = vcmask 64512
      %v1005 = vsel %vm1003, %v995, 0
      %v1008 = vsel %vm1003, %v1002, 0
      %1010 = vmatprep.subr.bf16.mxu0 0
      %1011 = vmatpush1.bf16.xpose.msra.mxu0 %v1008
      %1012 = vmatprep.subr.bf16.mxu0 0
      %1013 = vmatpush1.bf16.xpose.msra.mxu0 0
      %1014 = vmatprep.subr.bf16.mxu0 0
      %1015 = vmatpush1.bf16.xpose.msra.mxu0 0
      %1016 = vmatprep.subr.bf16.mxu0 0
      %1017 = vmatpush1.bf16.xpose.msra.mxu0 0
      %1018 = vmatprep.subr.bf16.mxu0 0
      %1019 = vmatpush1.bf16.xpose.msra.mxu0 0
      %1020 = vmatprep.subr.bf16.mxu0 0
      %1021 = vmatpush1.bf16.xpose.msra.mxu0 0
      %1022 = vmatprep.subr.bf16.mxu0 0
      %1023 = vmatpush1.bf16.xpose.msra.mxu0 0
      %1024 = vmatprep.subr.bf16.mxu0 0
      %1025 = vmatpush1.bf16.xpose.msra.mxu0 0
      %1026 = vmatprep.subr.bf16.mxu0 0
      %1027 = vmatpush1.bf16.xpose.msra.mxu0 0
      %1028 = vmatprep.subr.bf16.mxu0 0
      %1029 = vmatpush1.bf16.xpose.msra.mxu0 0
      %1030 = vmatprep.subr.bf16.mxu0 0
      %1031 = vmatpush1.bf16.xpose.msra.mxu0 0
      %1032 = vmatprep.subr.bf16.mxu0 0
      %1033 = vmatpush1.bf16.xpose.msra.mxu0 0
      %1034 = vmatprep.subr.bf16.mxu0 0
      %1035 = vmatpush1.bf16.xpose.msra.mxu0 0
      %1036 = vmatprep.subr.bf16.mxu0 0
      %1037 = vmatpush1.bf16.xpose.msra.mxu0 0
      %1038 = vmatprep.subr.bf16.mxu0 0
      %1039 = vmatpush1.bf16.xpose.msra.mxu0 0
      %1040 = vmatprep.subr.bf16.mxu0 0
      %1041 = vmatpush1.bf16.xpose.msra.mxu0 0
      %1042 = vmatprep.mubr.bf16.mxu0 0
      %1043 = vmatmul.mubr.bf16.gmra.mrb[0].mxu0 %v1005
      %v1044 = vpop.f32.mrb[0].mxu0
      %v1045 = vadd.f32 0.0, %v1044
      %v1046 = vpop.f32.mrb[0].mxu0
      %v1047 = vpop.f32.mrb[0].mxu0
      %v1048 = vpop.f32.mrb[0].mxu0
      %1049 = vdwg.mxu0
      %v1050 = vmul.f32 %v1045, 0.35355338
      %v1051 = vadd.f32 %v1050, %v994
      %v1052 = vsel %vm1003, %v1051, -inf
      %1053 = vmax.xlane.f32.xlu0 %v1052
      %v1054 = vpop.xlane.xlu0 %1053
      %v1055 = vsub.f32 %v1051, %v1054
      %v1056 = vmul.f32 %v1055, 1.442695
      %v1057 = vpow.pop %v1056
      %v1058 = vsel %vm1003, %v1057, 0.0
      %1059 = vadd.xlane.f32.xlu0 %v1058
      %v1060 = vpop.xlane.xlu0 %1059
      %v1061 = vrcp.pop %v1060
      %v1062 = vmul.f32 %v1057, %v1061
      %v1063 = vpack.c.bf16 %v1062, %v1062
      %1064 = vrot.lane.b32.xlu0 %v995, 64
      %v1065 = vpop.permute.xlu0 %1064
      %v1067 = vsel %vm1003, %v1063, 0
      %vm1069 = vcmask 1043456
      %v1071 = vsel %vm1069, %v1065, 0
      %1073 = vmatprep.subr.bf16.mxu0 0
      %1074 = vmatpush1.bf16.msra.mxu0 %v1071
      %1075 = vmatprep.subr.bf16.mxu0 0
      %1076 = vmatpush1.bf16.msra.mxu0 0
      %1077 = vmatprep.subr.bf16.mxu0 0
      %1078 = vmatpush1.bf16.msra.mxu0 0
      %1079 = vmatprep.subr.bf16.mxu0 0
      %1080 = vmatpush1.bf16.msra.mxu0 0
      %1081 = vmatprep.subr.bf16.mxu0 0
      %1082 = vmatpush1.bf16.msra.mxu0 0
      %1083 = vmatprep.subr.bf16.mxu0 0
      %1084 = vmatpush1.bf16.msra.mxu0 0
      %1085 = vmatprep.subr.bf16.mxu0 0
      %1086 = vmatpush1.bf16.msra.mxu0 0
      %1087 = vmatprep.subr.bf16.mxu0 0
      %1088 = vmatpush1.bf16.msra.mxu0 0
      %1089 = vmatprep.subr.bf16.mxu0 0
      %1090 = vmatpush1.bf16.msra.mxu0 0
      %1091 = vmatprep.subr.bf16.mxu0 0
      %1092 = vmatpush1.bf16.msra.mxu0 0
      %1093 = vmatprep.subr.bf16.mxu0 0
      %1094 = vmatpush1.bf16.msra.mxu0 0
      %1095 = vmatprep.subr.bf16.mxu0 0
      %1096 = vmatpush1.bf16.msra.mxu0 0
      %1097 = vmatprep.subr.bf16.mxu0 0
      %1098 = vmatpush1.bf16.msra.mxu0 0
      %1099 = vmatprep.subr.bf16.mxu0 0
      %1100 = vmatpush1.bf16.msra.mxu0 0
      %1101 = vmatprep.subr.bf16.mxu0 0
      %1102 = vmatpush1.bf16.msra.mxu0 0
      %1103 = vmatprep.subr.bf16.mxu0 0
      %1104 = vmatpush1.bf16.msra.mxu0 0
      %1105 = vmatprep.mubr.bf16.mxu0 0
      %1106 = vmatmul.mubr.bf16.gmra.mrb[0].mxu0 %v1067
      %v1107 = vpop.f32.mrb[0].mxu0
      %v1108 = vadd.f32 0.0, %v1107
      %v1109 = vpop.f32.mrb[0].mxu0
      %v1110 = vpop.f32.mrb[0].mxu0
      %v1111 = vpop.f32.mrb[0].mxu0
      %1112 = vdwg.mxu0
      %1113 = vrot.lane.b32.xlu0 %v995, 120
      %v1114 = vpop.permute.xlu0 %1113
      %1115 = vrot.lane.b32.xlu0 %v995, 88
      %v1116 = vpop.permute.xlu0 %1115
      %v1118 = vsel %vm1003, %v1114, 0
      %v1121 = vsel %vm1003, %v1116, 0
      %1123 = vmatprep.subr.bf16.mxu0 0
      %1124 = vmatpush1.bf16.xpose.msra.mxu0 %v1121
      %1125 = vmatprep.subr.bf16.mxu0 0
      %1126 = vmatpush1.bf16.xpose.msra.mxu0 0
      %1127 = vmatprep.subr.bf16.mxu0 0
      %1128 = vmatpush1.bf16.xpose.msra.mxu0 0
      %1129 = vmatprep.subr.bf16.mxu0 0
      %1130 = vmatpush1.bf16.xpose.msra.mxu0 0
      %1131 = vmatprep.subr.bf16.mxu0 0
      %1132 = vmatpush1.bf16.xpose.msra.mxu0 0
      %1133 = vmatprep.subr.bf16.mxu0 0
      %1134 = vmatpush1.bf16.xpose.msra.mxu0 0
      %1135 = vmatprep.subr.bf16.mxu0 0
      %1136 = vmatpush1.bf16.xpose.msra.mxu0 0
      %1137 = vmatprep.subr.bf16.mxu0 0
      %1138 = vmatpush1.bf16.xpose.msra.mxu0 0
      %1139 = vmatprep.subr.bf16.mxu0 0
      %1140 = vmatpush1.bf16.xpose.msra.mxu0 0
      %1141 = vmatprep.subr.bf16.mxu0 0
      %1142 = vmatpush1.bf16.xpose.msra.mxu0 0
      %1143 = vmatprep.subr.bf16.mxu0 0
      %1144 = vmatpush1.bf16.xpose.msra.mxu0 0
      %1145 = vmatprep.subr.bf16.mxu0 0
      %1146 = vmatpush1.bf16.xpose.msra.mxu0 0
      %1147 = vmatprep.subr.bf16.mxu0 0
      %1148 = vmatpush1.bf16.xpose.msra.mxu0 0
      %1149 = vmatprep.subr.bf16.mxu0 0
      %1150 = vmatpush1.bf16.xpose.msra.mxu0 0
      %1151 = vmatprep.subr.bf16.mxu0 0
      %1152 = vmatpush1.bf16.xpose.msra.mxu0 0
      %1153 = vmatprep.subr.bf16.mxu0 0
      %1154 = vmatpush1.bf16.xpose.msra.mxu0 0
      %1155 = vmatprep.mubr.bf16.mxu0 0
      %1156 = vmatmul.mubr.bf16.gmra.mrb[0].mxu0 %v1118
      %v1157 = vpop.f32.mrb[0].mxu0
      %v1158 = vadd.f32 0.0, %v1157
      %v1159 = vpop.f32.mrb[0].mxu0
      %v1160 = vpop.f32.mrb[0].mxu0
      %v1161 = vpop.f32.mrb[0].mxu0
      %1162 = vdwg.mxu0
      %v1163 = vmul.f32 %v1158, 0.35355338
      %v1164 = vadd.f32 %v1163, %v994
      %v1165 = vsel %vm1003, %v1164, -inf
      %1166 = vmax.xlane.f32.xlu0 %v1165
      %v1167 = vpop.xlane.xlu0 %1166
      %v1168 = vsub.f32 %v1164, %v1167
      %v1169 = vmul.f32 %v1168, 1.442695
      %v1170 = vpow.pop %v1169
      %v1171 = vsel %vm1003, %v1170, 0.0
      %1172 = vadd.xlane.f32.xlu0 %v1171
      %v1173 = vpop.xlane.xlu0 %1172
      %v1174 = vrcp.pop %v1173
      %v1175 = vmul.f32 %v1170, %v1174
      %v1176 = vpack.c.bf16 %v1175, %v1175
      %1177 = vrot.lane.b32.xlu0 %v995, 56
      %v1178 = vpop.permute.xlu0 %1177
      %v1180 = vsel %vm1003, %v1176, 0
      %v1183 = vsel %vm1069, %v1178, 0
      %1185 = vmatprep.subr.bf16.mxu0 0
      %1186 = vmatpush1.bf16.msra.mxu0 %v1183
      %1187 = vmatprep.subr.bf16.mxu0 0
      %1188 = vmatpush1.bf16.msra.mxu0 0
      %1189 = vmatprep.subr.bf16.mxu0 0
      %1190 = vmatpush1.bf16.msra.mxu0 0
      %1191 = vmatprep.subr.bf16.mxu0 0
      %1192 = vmatpush1.bf16.msra.mxu0 0
      %1193 = vmatprep.subr.bf16.mxu0 0
      %1194 = vmatpush1.bf16.msra.mxu0 0
      %1195 = vmatprep.subr.bf16.mxu0 0
      %1196 = vmatpush1.bf16.msra.mxu0 0
      %1197 = vmatprep.subr.bf16.mxu0 0
      %1198 = vmatpush1.bf16.msra.mxu0 0
      %1199 = vmatprep.subr.bf16.mxu0 0
      %1200 = vmatpush1.bf16.msra.mxu0 0
      %1201 = vmatprep.subr.bf16.mxu0 0
      %1202 = vmatpush1.bf16.msra.mxu0 0
      %1203 = vmatprep.subr.bf16.mxu0 0
      %1204 = vmatpush1.bf16.msra.mxu0 0
      %1205 = vmatprep.subr.bf16.mxu0 0
      %1206 = vmatpush1.bf16.msra.mxu0 0
      %1207 = vmatprep.subr.bf16.mxu0 0
      %1208 = vmatpush1.bf16.msra.mxu0 0
      %1209 = vmatprep.subr.bf16.mxu0 0
      %1210 = vmatpush1.bf16.msra.mxu0 0
      %1211 = vmatprep.subr.bf16.mxu0 0
      %1212 = vmatpush1.bf16.msra.mxu0 0
      %1213 = vmatprep.subr.bf16.mxu0 0
      %1214 = vmatpush1.bf16.msra.mxu0 0
      %1215 = vmatprep.subr.bf16.mxu0 0
      %1216 = vmatpush1.bf16.msra.mxu0 0
      %1217 = vmatprep.mubr.bf16.mxu0 0
      %1218 = vmatmul.mubr.bf16.gmra.mrb[0].mxu0 %v1180
      %v1219 = vpop.f32.mrb[0].mxu0
      %v1220 = vadd.f32 0.0, %v1219
      %v1221 = vpop.f32.mrb[0].mxu0
      %v1222 = vpop.f32.mrb[0].mxu0
      %v1223 = vpop.f32.mrb[0].mxu0
      %1224 = vdwg.mxu0
      %v1226 = vsel %vm1003, %v1220, 0
      %1228 = vmatprep.subr.mxu0 0.0
      %1229 = vmatpush1.msra.mxu0 %v997
      %1230 = vmatprep.subr.mxu0 0.0
      %1231 = vmatpush1.msra.mxu0 0.0
      %1232 = vmatprep.subr.mxu0 0.0
      %1233 = vmatpush1.msra.mxu0 0.0
      %1234 = vmatprep.subr.mxu0 0.0
      %1235 = vmatpush1.msra.mxu0 0.0
      %1236 = vmatprep.subr.mxu0 0.0
      %1237 = vmatpush1.msra.mxu0 0.0
      %1238 = vmatprep.subr.mxu0 0.0
      %1239 = vmatpush1.msra.mxu0 0.0
      %1240 = vmatprep.subr.mxu0 0.0
      %1241 = vmatpush1.msra.mxu0 0.0
      %1242 = vmatprep.subr.mxu0 0.0
      %1243 = vmatpush1.msra.mxu0 0.0
      %1244 = vmatprep.subr.mxu0 0.0
      %1245 = vmatpush1.msra.mxu0 0.0
      %1246 = vmatprep.subr.mxu0 0.0
      %1247 = vmatpush1.msra.mxu0 0.0
      %1248 = vmatprep.subr.mxu0 0.0
      %1249 = vmatpush1.msra.mxu0 0.0
      %1250 = vmatprep.subr.mxu0 0.0
      %1251 = vmatpush1.msra.mxu0 0.0
      %1252 = vmatprep.subr.mxu0 0.0
      %1253 = vmatpush1.msra.mxu0 0.0
      %1254 = vmatprep.subr.mxu0 0.0
      %1255 = vmatpush1.msra.mxu0 0.0
      %1256 = vmatprep.subr.mxu0 0.0
      %1257 = vmatpush1.msra.mxu0 0.0
      %1258 = vmatprep.subr.mxu0 0.0
      %1259 = vmatpush1.msra.mxu0 0.0
      %1260 = vmatprep.subr.mxu0 0.0
      %1261 = vmatpush1.msra.mxu0 0.0
      %1262 = vmatprep.subr.mxu0 0.0
      %1263 = vmatpush1.msra.mxu0 0.0
      %1264 = vmatprep.subr.mxu0 0.0
      %1265 = vmatpush1.msra.mxu0 0.0
      %1266 = vmatprep.subr.mxu0 0.0
      %1267 = vmatpush1.msra.mxu0 0.0
      %1268 = vmatprep.subr.mxu0 0.0
      %1269 = vmatpush1.msra.mxu0 0.0
      %1270 = vmatprep.subr.mxu0 0.0
      %1271 = vmatpush1.msra.mxu0 0.0
      %1272 = vmatprep.subr.mxu0 0.0
      %1273 = vmatpush1.msra.mxu0 0.0
      %1274 = vmatprep.subr.mxu0 0.0
      %1275 = vmatpush1.msra.mxu0 0.0
      %1276 = vmatprep.subr.mxu0 0.0
      %1277 = vmatpush1.msra.mxu0 0.0
      %1278 = vmatprep.subr.mxu0 0.0
      %1279 = vmatpush1.msra.mxu0 0.0
      %1280 = vmatprep.subr.mxu0 0.0
      %1281 = vmatpush1.msra.mxu0 0.0
      %1282 = vmatprep.subr.mxu0 0.0
      %1283 = vmatpush1.msra.mxu0 0.0
      %1284 = vmatprep.subr.mxu0 0.0
      %1285 = vmatpush1.msra.mxu0 0.0
      %1286 = vmatprep.subr.mxu0 0.0
      %1287 = vmatpush1.msra.mxu0 0.0
      %1288 = vmatprep.subr.mxu0 0.0
      %1289 = vmatpush1.msra.mxu0 0.0
      %1290 = vmatprep.subr.mxu0 0.0
      %1291 = vmatpush1.msra.mxu0 0.0
      %1292 = vmatprep.mubr.f32.mxu0 0.0
      %1293 = vmatmul.mubr.f32.gmra.mrb[0].mxu0 %v1226
      %v1294 = vpop.f32.mrb[0].mxu0
      %v1295 = vadd.f32 0.0, %v1294
      %v1296 = vpop.f32.mrb[0].mxu0
      %1297 = vdwg.mxu0
      %v1299 = vsel %vm1003, %v1108, 0
      %1301 = vmatprep.subr.mxu0 0.0
      %1302 = vmatpush1.msra.mxu0 %v996
      %1303 = vmatprep.subr.mxu0 0.0
      %1304 = vmatpush1.msra.mxu0 0.0
      %1305 = vmatprep.subr.mxu0 0.0
      %1306 = vmatpush1.msra.mxu0 0.0
      %1307 = vmatprep.subr.mxu0 0.0
      %1308 = vmatpush1.msra.mxu0 0.0
      %1309 = vmatprep.subr.mxu0 0.0
      %1310 = vmatpush1.msra.mxu0 0.0
      %1311 = vmatprep.subr.mxu0 0.0
      %1312 = vmatpush1.msra.mxu0 0.0
      %1313 = vmatprep.subr.mxu0 0.0
      %1314 = vmatpush1.msra.mxu0 0.0
      %1315 = vmatprep.subr.mxu0 0.0
      %1316 = vmatpush1.msra.mxu0 0.0
      %1317 = vmatprep.subr.mxu0 0.0
      %1318 = vmatpush1.msra.mxu0 0.0
      %1319 = vmatprep.subr.mxu0 0.0
      %1320 = vmatpush1.msra.mxu0 0.0
      %1321 = vmatprep.subr.mxu0 0.0
      %1322 = vmatpush1.msra.mxu0 0.0
      %1323 = vmatprep.subr.mxu0 0.0
      %1324 = vmatpush1.msra.mxu0 0.0
      %1325 = vmatprep.subr.mxu0 0.0
      %1326 = vmatpush1.msra.mxu0 0.0
      %1327 = vmatprep.subr.mxu0 0.0
      %1328 = vmatpush1.msra.mxu0 0.0
      %1329 = vmatprep.subr.mxu0 0.0
      %1330 = vmatpush1.msra.mxu0 0.0
      %1331 = vmatprep.subr.mxu0 0.0
      %1332 = vmatpush1.msra.mxu0 0.0
      %1333 = vmatprep.subr.mxu0 0.0
      %1334 = vmatpush1.msra.mxu0 0.0
      %1335 = vmatprep.subr.mxu0 0.0
      %1336 = vmatpush1.msra.mxu0 0.0
      %1337 = vmatprep.subr.mxu0 0.0
      %1338 = vmatpush1.msra.mxu0 0.0
      %1339 = vmatprep.subr.mxu0 0.0
      %1340 = vmatpush1.msra.mxu0 0.0
      %1341 = vmatprep.subr.mxu0 0.0
      %1342 = vmatpush1.msra.mxu0 0.0
      %1343 = vmatprep.subr.mxu0 0.0
      %1344 = vmatpush1.msra.mxu0 0.0
      %1345 = vmatprep.subr.mxu0 0.0
      %1346 = vmatpush1.msra.mxu0 0.0
      %1347 = vmatprep.subr.mxu0 0.0
      %1348 = vmatpush1.msra.mxu0 0.0
      %1349 = vmatprep.subr.mxu0 0.0
      %1350 = vmatpush1.msra.mxu0 0.0
      %1351 = vmatprep.subr.mxu0 0.0
      %1352 = vmatpush1.msra.mxu0 0.0
      %1353 = vmatprep.subr.mxu0 0.0
      %1354 = vmatpush1.msra.mxu0 0.0
      %1355 = vmatprep.subr.mxu0 0.0
      %1356 = vmatpush1.msra.mxu0 0.0
      %1357 = vmatprep.subr.mxu0 0.0
      %1358 = vmatpush1.msra.mxu0 0.0
      %1359 = vmatprep.subr.mxu0 0.0
      %1360 = vmatpush1.msra.mxu0 0.0
      %1361 = vmatprep.subr.mxu0 0.0
      %1362 = vmatpush1.msra.mxu0 0.0
      %1363 = vmatprep.subr.mxu0 0.0
      %1364 = vmatpush1.msra.mxu0 0.0
      %1365 = vmatprep.mubr.f32.mxu0 0.0
      %1366 = vmatmul.mubr.f32.gmra.mrb[0].mxu0 %v1299
      %v1367 = vpop.f32.mrb[0].mxu0
      %v1368 = vadd.f32 %v1295, %v1367
      %v1369 = vpop.f32.mrb[0].mxu0
      %1370 = vdwg.mxu0
      %1371 = vrot.lane.b32.xlu0 %v995, 112
      %v1372 = vpop.permute.xlu0 %1371
      %1373 = vrot.lane.b32.xlu0 %v995, 80
      %v1374 = vpop.permute.xlu0 %1373
      %v1376 = vsel %vm1003, %v1372, 0
      %v1379 = vsel %vm1003, %v1374, 0
      %1381 = vmatprep.subr.bf16.mxu0 0
      %1382 = vmatpush1.bf16.xpose.msra.mxu0 %v1379
      %1383 = vmatprep.subr.bf16.mxu0 0
      %1384 = vmatpush1.bf16.xpose.msra.mxu0 0
      %1385 = vmatprep.subr.bf16.mxu0 0
      %1386 = vmatpush1.bf16.xpose.msra.mxu0 0
      %1387 = vmatprep.subr.bf16.mxu0 0
      %1388 = vmatpush1.bf16.xpose.msra.mxu0 0
      %1389 = vmatprep.subr.bf16.mxu0 0
      %1390 = vmatpush1.bf16.xpose.msra.mxu0 0
      %1391 = vmatprep.subr.bf16.mxu0 0
      %1392 = vmatpush1.bf16.xpose.msra.mxu0 0
      %1393 = vmatprep.subr.bf16.mxu0 0
      %1394 = vmatpush1.bf16.xpose.msra.mxu0 0
      %1395 = vmatprep.subr.bf16.mxu0 0
      %1396 = vmatpush1.bf16.xpose.msra.mxu0 0
      %1397 = vmatprep.subr.bf16.mxu0 0
      %1398 = vmatpush1.bf16.xpose.msra.mxu0 0
      %1399 = vmatprep.subr.bf16.mxu0 0
      %1400 = vmatpush1.bf16.xpose.msra.mxu0 0
      %1401 = vmatprep.subr.bf16.mxu0 0
      %1402 = vmatpush1.bf16.xpose.msra.mxu0 0
      %1403 = vmatprep.subr.bf16.mxu0 0
      %1404 = vmatpush1.bf16.xpose.msra.mxu0 0
      %1405 = vmatprep.subr.bf16.mxu0 0
      %1406 = vmatpush1.bf16.xpose.msra.mxu0 0
      %1407 = vmatprep.subr.bf16.mxu0 0
      %1408 = vmatpush1.bf16.xpose.msra.mxu0 0
      %1409 = vmatprep.subr.bf16.mxu0 0
      %1410 = vmatpush1.bf16.xpose.msra.mxu0 0
      %1411 = vmatprep.subr.bf16.mxu0 0
      %1412 = vmatpush1.bf16.xpose.msra.mxu0 0
      %1413 = vmatprep.mubr.bf16.mxu0 0
      %1414 = vmatmul.mubr.bf16.gmra.mrb[0].mxu0 %v1376
      %v1415 = vpop.f32.mrb[0].mxu0
      %v1416 = vadd.f32 0.0, %v1415
      %v1417 = vpop.f32.mrb[0].mxu0
      %v1418 = vpop.f32.mrb[0].mxu0
      %v1419 = vpop.f32.mrb[0].mxu0
      %1420 = vdwg.mxu0
      %v1421 = vmul.f32 %v1416, 0.35355338
      %v1422 = vadd.f32 %v1421, %v994
      %v1423 = vsel %vm1003, %v1422, -inf
      %1424 = vmax.xlane.f32.xlu0 %v1423
      %v1425 = vpop.xlane.xlu0 %1424
      %v1426 = vsub.f32 %v1422, %v1425
      %v1427 = vmul.f32 %v1426, 1.442695
      %v1428 = vpow.pop %v1427
      %v1429 = vsel %vm1003, %v1428, 0.0
      %1430 = vadd.xlane.f32.xlu0 %v1429
      %v1431 = vpop.xlane.xlu0 %1430
      %v1432 = vrcp.pop %v1431
      %v1433 = vmul.f32 %v1428, %v1432
      %v1434 = vpack.c.bf16 %v1433, %v1433
      %1435 = vrot.lane.b32.xlu0 %v995, 48
      %v1436 = vpop.permute.xlu0 %1435
      %v1438 = vsel %vm1003, %v1434, 0
      %v1441 = vsel %vm1069, %v1436, 0
      %1443 = vmatprep.subr.bf16.mxu0 0
      %1444 = vmatpush1.bf16.msra.mxu0 %v1441
      %1445 = vmatprep.subr.bf16.mxu0 0
      %1446 = vmatpush1.bf16.msra.mxu0 0
      %1447 = vmatprep.subr.bf16.mxu0 0
      %1448 = vmatpush1.bf16.msra.mxu0 0
      %1449 = vmatprep.subr.bf16.mxu0 0
      %1450 = vmatpush1.bf16.msra.mxu0 0
      %1451 = vmatprep.subr.bf16.mxu0 0
      %1452 = vmatpush1.bf16.msra.mxu0 0
      %1453 = vmatprep.subr.bf16.mxu0 0
      %1454 = vmatpush1.bf16.msra.mxu0 0
      %1455 = vmatprep.subr.bf16.mxu0 0
      %1456 = vmatpush1.bf16.msra.mxu0 0
      %1457 = vmatprep.subr.bf16.mxu0 0
      %1458 = vmatpush1.bf16.msra.mxu0 0
      %1459 = vmatprep.subr.bf16.mxu0 0
      %1460 = vmatpush1.bf16.msra.mxu0 0
      %1461 = vmatprep.subr.bf16.mxu0 0
      %1462 = vmatpush1.bf16.msra.mxu0 0
      %1463 = vmatprep.subr.bf16.mxu0 0
      %1464 = vmatpush1.bf16.msra.mxu0 0
      %1465 = vmatprep.subr.bf16.mxu0 0
      %1466 = vmatpush1.bf16.msra.mxu0 0
      %1467 = vmatprep.subr.bf16.mxu0 0
      %1468 = vmatpush1.bf16.msra.mxu0 0
      %1469 = vmatprep.subr.bf16.mxu0 0
      %1470 = vmatpush1.bf16.msra.mxu0 0
      %1471 = vmatprep.subr.bf16.mxu0 0
      %1472 = vmatpush1.bf16.msra.mxu0 0
      %1473 = vmatprep.subr.bf16.mxu0 0
      %1474 = vmatpush1.bf16.msra.mxu0 0
      %1475 = vmatprep.mubr.bf16.mxu0 0
      %1476 = vmatmul.mubr.bf16.gmra.mrb[0].mxu0 %v1438
      %v1477 = vpop.f32.mrb[0].mxu0
      %v1478 = vadd.f32 0.0, %v1477
      %v1479 = vpop.f32.mrb[0].mxu0
      %v1480 = vpop.f32.mrb[0].mxu0
      %v1481 = vpop.f32.mrb[0].mxu0
      %1482 = vdwg.mxu0
      %v1484 = vsel %vm1003, %v1478, 0
      %1486 = vmatprep.subr.mxu0 0.0
      %1487 = vmatpush1.msra.mxu0 %v998
      %1488 = vmatprep.subr.mxu0 0.0
      %1489 = vmatpush1.msra.mxu0 0.0
      %1490 = vmatprep.subr.mxu0 0.0
      %1491 = vmatpush1.msra.mxu0 0.0
      %1492 = vmatprep.subr.mxu0 0.0
      %1493 = vmatpush1.msra.mxu0 0.0
      %1494 = vmatprep.subr.mxu0 0.0
      %1495 = vmatpush1.msra.mxu0 0.0
      %1496 = vmatprep.subr.mxu0 0.0
      %1497 = vmatpush1.msra.mxu0 0.0
      %1498 = vmatprep.subr.mxu0 0.0
      %1499 = vmatpush1.msra.mxu0 0.0
      %1500 = vmatprep.subr.mxu0 0.0
      %1501 = vmatpush1.msra.mxu0 0.0
      %1502 = vmatprep.subr.mxu0 0.0
      %1503 = vmatpush1.msra.mxu0 0.0
      %1504 = vmatprep.subr.mxu0 0.0
      %1505 = vmatpush1.msra.mxu0 0.0
      %1506 = vmatprep.subr.mxu0 0.0
      %1507 = vmatpush1.msra.mxu0 0.0
      %1508 = vmatprep.subr.mxu0 0.0
      %1509 = vmatpush1.msra.mxu0 0.0
      %1510 = vmatprep.subr.mxu0 0.0
      %1511 = vmatpush1.msra.mxu0 0.0
      %1512 = vmatprep.subr.mxu0 0.0
      %1513 = vmatpush1.msra.mxu0 0.0
      %1514 = vmatprep.subr.mxu0 0.0
      %1515 = vmatpush1.msra.mxu0 0.0
      %1516 = vmatprep.subr.mxu0 0.0
      %1517 = vmatpush1.msra.mxu0 0.0
      %1518 = vmatprep.subr.mxu0 0.0
      %1519 = vmatpush1.msra.mxu0 0.0
      %1520 = vmatprep.subr.mxu0 0.0
      %1521 = vmatpush1.msra.mxu0 0.0
      %1522 = vmatprep.subr.mxu0 0.0
      %1523 = vmatpush1.msra.mxu0 0.0
      %1524 = vmatprep.subr.mxu0 0.0
      %1525 = vmatpush1.msra.mxu0 0.0
      %1526 = vmatprep.subr.mxu0 0.0
      %1527 = vmatpush1.msra.mxu0 0.0
      %1528 = vmatprep.subr.mxu0 0.0
      %1529 = vmatpush1.msra.mxu0 0.0
      %1530 = vmatprep.subr.mxu0 0.0
      %1531 = vmatpush1.msra.mxu0 0.0
      %1532 = vmatprep.subr.mxu0 0.0
      %1533 = vmatpush1.msra.mxu0 0.0
      %1534 = vmatprep.subr.mxu0 0.0
      %1535 = vmatpush1.msra.mxu0 0.0
      %1536 = vmatprep.subr.mxu0 0.0
      %1537 = vmatpush1.msra.mxu0 0.0
      %1538 = vmatprep.subr.mxu0 0.0
      %1539 = vmatpush1.msra.mxu0 0.0
      %1540 = vmatprep.subr.mxu0 0.0
      %1541 = vmatpush1.msra.mxu0 0.0
      %1542 = vmatprep.subr.mxu0 0.0
      %1543 = vmatpush1.msra.mxu0 0.0
      %1544 = vmatprep.subr.mxu0 0.0
      %1545 = vmatpush1.msra.mxu0 0.0
      %1546 = vmatprep.subr.mxu0 0.0
      %1547 = vmatpush1.msra.mxu0 0.0
      %1548 = vmatprep.subr.mxu0 0.0
      %1549 = vmatpush1.msra.mxu0 0.0
      %1550 = vmatprep.mubr.f32.mxu0 0.0
      %1551 = vmatmul.mubr.f32.gmra.mrb[0].mxu0 %v1484
      %v1552 = vpop.f32.mrb[0].mxu0
      %v1553 = vadd.f32 0.0, %v1552
      %v1554 = vpop.f32.mrb[0].mxu0
      %1555 = vdwg.mxu0
      %v1556 = vadd.f32 %v1368, %v1553
      %1557 = vrot.lane.b32.xlu0 %v995, 104
      %v1558 = vpop.permute.xlu0 %1557
      %1559 = vrot.lane.b32.xlu0 %v995, 72
      %v1560 = vpop.permute.xlu0 %1559
      %v1562 = vsel %vm1003, %v1558, 0
      %v1565 = vsel %vm1003, %v1560, 0
      %1567 = vmatprep.subr.bf16.mxu0 0
      %1568 = vmatpush1.bf16.xpose.msra.mxu0 %v1565
      %1569 = vmatprep.subr.bf16.mxu0 0
      %1570 = vmatpush1.bf16.xpose.msra.mxu0 0
      %1571 = vmatprep.subr.bf16.mxu0 0
      %1572 = vmatpush1.bf16.xpose.msra.mxu0 0
      %1573 = vmatprep.subr.bf16.mxu0 0
      %1574 = vmatpush1.bf16.xpose.msra.mxu0 0
      %1575 = vmatprep.subr.bf16.mxu0 0
      %1576 = vmatpush1.bf16.xpose.msra.mxu0 0
      %1577 = vmatprep.subr.bf16.mxu0 0
      %1578 = vmatpush1.bf16.xpose.msra.mxu0 0
      %1579 = vmatprep.subr.bf16.mxu0 0
      %1580 = vmatpush1.bf16.xpose.msra.mxu0 0
      %1581 = vmatprep.subr.bf16.mxu0 0
      %1582 = vmatpush1.bf16.xpose.msra.mxu0 0
      %1583 = vmatprep.subr.bf16.mxu0 0
      %1584 = vmatpush1.bf16.xpose.msra.mxu0 0
      %1585 = vmatprep.subr.bf16.mxu0 0
      %1586 = vmatpush1.bf16.xpose.msra.mxu0 0
      %1587 = vmatprep.subr.bf16.mxu0 0
      %1588 = vmatpush1.bf16.xpose.msra.mxu0 0
      %1589 = vmatprep.subr.bf16.mxu0 0
      %1590 = vmatpush1.bf16.xpose.msra.mxu0 0
      %1591 = vmatprep.subr.bf16.mxu0 0
      %1592 = vmatpush1.bf16.xpose.msra.mxu0 0
      %1593 = vmatprep.subr.bf16.mxu0 0
      %1594 = vmatpush1.bf16.xpose.msra.mxu0 0
      %1595 = vmatprep.subr.bf16.mxu0 0
      %1596 = vmatpush1.bf16.xpose.msra.mxu0 0
      %1597 = vmatprep.subr.bf16.mxu0 0
      %1598 = vmatpush1.bf16.xpose.msra.mxu0 0
      %1599 = vmatprep.mubr.bf16.mxu0 0
      %1600 = vmatmul.mubr.bf16.gmra.mrb[0].mxu0 %v1562
      %v1601 = vpop.f32.mrb[0].mxu0
      %v1602 = vadd.f32 0.0, %v1601
      %v1603 = vpop.f32.mrb[0].mxu0
      %v1604 = vpop.f32.mrb[0].mxu0
      %v1605 = vpop.f32.mrb[0].mxu0
      %1606 = vdwg.mxu0
      %v1607 = vmul.f32 %v1602, 0.35355338
      %v1608 = vadd.f32 %v1607, %v994
      %v1609 = vsel %vm1003, %v1608, -inf
      %1610 = vmax.xlane.f32.xlu0 %v1609
      %v1611 = vpop.xlane.xlu0 %1610
      %v1612 = vsub.f32 %v1608, %v1611
      %v1613 = vmul.f32 %v1612, 1.442695
      %v1614 = vpow.pop %v1613
      %v1615 = vsel %vm1003, %v1614, 0.0
      %1616 = vadd.xlane.f32.xlu0 %v1615
      %v1617 = vpop.xlane.xlu0 %1616
      %v1618 = vrcp.pop %v1617
      %v1619 = vmul.f32 %v1614, %v1618
      %v1620 = vpack.c.bf16 %v1619, %v1619
      %1621 = vrot.lane.b32.xlu0 %v995, 40
      %v1622 = vpop.permute.xlu0 %1621
      %v1624 = vsel %vm1003, %v1620, 0
      %v1627 = vsel %vm1069, %v1622, 0
      %1629 = vmatprep.subr.bf16.mxu0 0
      %1630 = vmatpush1.bf16.msra.mxu0 %v1627
      %1631 = vmatprep.subr.bf16.mxu0 0
      %1632 = vmatpush1.bf16.msra.mxu0 0
      %1633 = vmatprep.subr.bf16.mxu0 0
      %1634 = vmatpush1.bf16.msra.mxu0 0
      %1635 = vmatprep.subr.bf16.mxu0 0
      %1636 = vmatpush1.bf16.msra.mxu0 0
      %1637 = vmatprep.subr.bf16.mxu0 0
      %1638 = vmatpush1.bf16.msra.mxu0 0
      %1639 = vmatprep.subr.bf16.mxu0 0
      %1640 = vmatpush1.bf16.msra.mxu0 0
      %1641 = vmatprep.subr.bf16.mxu0 0
      %1642 = vmatpush1.bf16.msra.mxu0 0
      %1643 = vmatprep.subr.bf16.mxu0 0
      %1644 = vmatpush1.bf16.msra.mxu0 0
      %1645 = vmatprep.subr.bf16.mxu0 0
      %1646 = vmatpush1.bf16.msra.mxu0 0
      %1647 = vmatprep.subr.bf16.mxu0 0
      %1648 = vmatpush1.bf16.msra.mxu0 0
      %1649 = vmatprep.subr.bf16.mxu0 0
      %1650 = vmatpush1.bf16.msra.mxu0 0
      %1651 = vmatprep.subr.bf16.mxu0 0
      %1652 = vmatpush1.bf16.msra.mxu0 0
      %1653 = vmatprep.subr.bf16.mxu0 0
      %1654 = vmatpush1.bf16.msra.mxu0 0
      %1655 = vmatprep.subr.bf16.mxu0 0
      %1656 = vmatpush1.bf16.msra.mxu0 0
      %1657 = vmatprep.subr.bf16.mxu0 0
      %1658 = vmatpush1.bf16.msra.mxu0 0
      %1659 = vmatprep.subr.bf16.mxu0 0
      %1660 = vmatpush1.bf16.msra.mxu0 0
      %1661 = vmatprep.mubr.bf16.mxu0 0
      %1662 = vmatmul.mubr.bf16.gmra.mrb[0].mxu0 %v1624
      %v1663 = vpop.f32.mrb[0].mxu0
      %v1664 = vadd.f32 0.0, %v1663
      %v1665 = vpop.f32.mrb[0].mxu0
      %v1666 = vpop.f32.mrb[0].mxu0
      %v1667 = vpop.f32.mrb[0].mxu0
      %1668 = vdwg.mxu0
      %v1670 = vsel %vm1003, %v1664, 0
      %1672 = vmatprep.subr.mxu0 0.0
      %1673 = vmatpush1.msra.mxu0 %v999
      %1674 = vmatprep.subr.mxu0 0.0
      %1675 = vmatpush1.msra.mxu0 0.0
      %1676 = vmatprep.subr.mxu0 0.0
      %1677 = vmatpush1.msra.mxu0 0.0
      %1678 = vmatprep.subr.mxu0 0.0
      %1679 = vmatpush1.msra.mxu0 0.0
      %1680 = vmatprep.subr.mxu0 0.0
      %1681 = vmatpush1.msra.mxu0 0.0
      %1682 = vmatprep.subr.mxu0 0.0
      %1683 = vmatpush1.msra.mxu0 0.0
      %1684 = vmatprep.subr.mxu0 0.0
      %1685 = vmatpush1.msra.mxu0 0.0
      %1686 = vmatprep.subr.mxu0 0.0
      %1687 = vmatpush1.msra.mxu0 0.0
      %1688 = vmatprep.subr.mxu0 0.0
      %1689 = vmatpush1.msra.mxu0 0.0
      %1690 = vmatprep.subr.mxu0 0.0
      %1691 = vmatpush1.msra.mxu0 0.0
      %1692 = vmatprep.subr.mxu0 0.0
      %1693 = vmatpush1.msra.mxu0 0.0
      %1694 = vmatprep.subr.mxu0 0.0
      %1695 = vmatpush1.msra.mxu0 0.0
      %1696 = vmatprep.subr.mxu0 0.0
      %1697 = vmatpush1.msra.mxu0 0.0
      %1698 = vmatprep.subr.mxu0 0.0
      %1699 = vmatpush1.msra.mxu0 0.0
      %1700 = vmatprep.subr.mxu0 0.0
      %1701 = vmatpush1.msra.mxu0 0.0
      %1702 = vmatprep.subr.mxu0 0.0
      %1703 = vmatpush1.msra.mxu0 0.0
      %1704 = vmatprep.subr.mxu0 0.0
      %1705 = vmatpush1.msra.mxu0 0.0
      %1706 = vmatprep.subr.mxu0 0.0
      %1707 = vmatpush1.msra.mxu0 0.0
      %1708 = vmatprep.subr.mxu0 0.0
      %1709 = vmatpush1.msra.mxu0 0.0
      %1710 = vmatprep.subr.mxu0 0.0
      %1711 = vmatpush1.msra.mxu0 0.0
      %1712 = vmatprep.subr.mxu0 0.0
      %1713 = vmatpush1.msra.mxu0 0.0
      %1714 = vmatprep.subr.mxu0 0.0
      %1715 = vmatpush1.msra.mxu0 0.0
      %1716 = vmatprep.subr.mxu0 0.0
      %1717 = vmatpush1.msra.mxu0 0.0
      %1718 = vmatprep.subr.mxu0 0.0
      %1719 = vmatpush1.msra.mxu0 0.0
      %1720 = vmatprep.subr.mxu0 0.0
      %1721 = vmatpush1.msra.mxu0 0.0
      %1722 = vmatprep.subr.mxu0 0.0
      %1723 = vmatpush1.msra.mxu0 0.0
      %1724 = vmatprep.subr.mxu0 0.0
      %1725 = vmatpush1.msra.mxu0 0.0
      %1726 = vmatprep.subr.mxu0 0.0
      %1727 = vmatpush1.msra.mxu0 0.0
      %1728 = vmatprep.subr.mxu0 0.0
      %1729 = vmatpush1.msra.mxu0 0.0
      %1730 = vmatprep.subr.mxu0 0.0
      %1731 = vmatpush1.msra.mxu0 0.0
      %1732 = vmatprep.subr.mxu0 0.0
      %1733 = vmatpush1.msra.mxu0 0.0
      %1734 = vmatprep.subr.mxu0 0.0
      %1735 = vmatpush1.msra.mxu0 0.0
      %1736 = vmatprep.mubr.f32.mxu0 0.0
      %1737 = vmatmul.mubr.f32.gmra.mrb[0].mxu0 %v1670
      %v1738 = vpop.f32.mrb[0].mxu0
      %v1739 = vadd.f32 0.0, %v1738
      %v1740 = vpop.f32.mrb[0].mxu0
      %1741 = vdwg.mxu0
      %v1742 = vadd.f32 %v1556, %v1739
      %v1743 = vadd.f32 %v905, %v1742
      %v1744 = vld [vmem:[%s776] sm:$0x1]
      %v1745 = vsel %vm908, %v1743, 0.0
      %1746 = vadd.xlane.f32.xlu0 %v1745
      %v1747 = vpop.xlane.xlu0 %1746
      %v1748 = vmul.f32 %v1747, %v912
      %v1749 = vsub.f32 %v1743, %v1748
      %v1750 = vmul.f32 %v1749, %v1749
      %v1751 = vsel %vm908, %v1750, 0.0
      %1752 = vadd.xlane.f32.xlu0 %v1751
      %v1753 = vpop.xlane.xlu0 %1752
      %v1754 = vmul.f32 %v1753, %v912
      %v1755 = vadd.f32 %v1754, 1e-05
      %v1756 = vrsqrt.pop %v1755
      %v1757 = vmul.f32 %v1749, %v1756
      %v1759 = vlaneseq
      %v1760 = vshrl.u32 %v1759, 7
      %v1761 = vsub.s32 0, %v1760
      %v1762 = vrot.slane %v1744, %v1761
      %v1764 = vmul.f32 %v1757, %v1762
      %v1765 = vpack.c.bf16 %v1764, %v1764
      %v1766 = vld [vmem:[%s781] sm:$0xf]
      %v1767 = vld [vmem:[%s781 + $0x4] sm:$0xf]
      %v1768 = vld [vmem:[%s781 + $0x8] sm:$0xf]
      %v1769 = vld [vmem:[%s781 + $0xc] sm:$0xf]
      %v1774 = vunpack.c.l.b16 %v1766
      %v1775 = vunpack.c.l.b16 %v1767
      %v1776 = vunpack.c.l.b16 %v1768
      %v1777 = vunpack.c.l.b16 %v1769
      %v1778 = vpack.c.b16 %v1775, %v1774
      %v1779 = vpack.c.b16 %v1777, %v1776
      %v1783 = vsel %vm908, %v1765, 0
      %1785 = vmatprep.subr.bf16.mxu0 0
      %1786 = vmatpush1.bf16.msra.mxu0 %v1778
      %1787 = vmatprep.subr.bf16.mxu0 0
      %1788 = vmatpush1.bf16.msra.mxu0 %v1779
      %1789 = vmatprep.subr.bf16.mxu0 0
      %1790 = vmatpush1.bf16.msra.mxu0 0
      %1791 = vmatprep.subr.bf16.mxu0 0
      %1792 = vmatpush1.bf16.msra.mxu0 0
      %1793 = vmatprep.subr.bf16.mxu0 0
      %1794 = vmatpush1.bf16.msra.mxu0 0
      %1795 = vmatprep.subr.bf16.mxu0 0
      %1796 = vmatpush1.bf16.msra.mxu0 0
      %1797 = vmatprep.subr.bf16.mxu0 0
      %1798 = vmatpush1.bf16.msra.mxu0 0
      %1799 = vmatprep.subr.bf16.mxu0 0
      %1800 = vmatpush1.bf16.msra.mxu0 0
      %1801 = vmatprep.subr.bf16.mxu0 0
      %1802 = vmatpush1.bf16.msra.mxu0 0
      %1803 = vmatprep.subr.bf16.mxu0 0
      %1804 = vmatpush1.bf16.msra.mxu0 0
      %1805 = vmatprep.subr.bf16.mxu0 0
      %1806 = vmatpush1.bf16.msra.mxu0 0
      %1807 = vmatprep.subr.bf16.mxu0 0
      %1808 = vmatpush1.bf16.msra.mxu0 0
      %1809 = vmatprep.subr.bf16.mxu0 0
      %1810 = vmatpush1.bf16.msra.mxu0 0
      %1811 = vmatprep.subr.bf16.mxu0 0
      %1812 = vmatpush1.bf16.msra.mxu0 0
      %1813 = vmatprep.subr.bf16.mxu0 0
      %1814 = vmatpush1.bf16.msra.mxu0 0
      %1815 = vmatprep.subr.bf16.mxu0 0
      %1816 = vmatpush1.bf16.msra.mxu0 0
      %1817 = vmatprep.mubr.bf16.mxu0 0
      %1818 = vmatmul.mubr.bf16.gmra.mrb[0].mxu0 %v1783
      %v1819 = vpop.f32.mrb[0].mxu0
      %v1820 = vadd.f32 0.0, %v1819
      %v1821 = vpop.f32.mrb[0].mxu0
      %v1822 = vpop.f32.mrb[0].mxu0
      %v1823 = vpop.f32.mrb[0].mxu0
      %1824 = vdwg.mxu0
      %v1825 = vpack.c.bf16 %v906, %v906
      %v1826 = vld [vmem:[%s786] sm:$0xf]
      %v1827 = vld [vmem:[%s786 + $0x4] sm:$0xf]
      %v1828 = vld [vmem:[%s786 + $0x8] sm:$0xf]
      %v1829 = vld [vmem:[%s786 + $0xc] sm:$0xf]
      %v1834 = vunpack.c.l.b16 %v1826
      %v1835 = vunpack.c.l.b16 %v1827
      %v1836 = vunpack.c.l.b16 %v1828
      %v1837 = vunpack.c.l.b16 %v1829
      %v1838 = vpack.c.b16 %v1835, %v1834
      %v1839 = vpack.c.b16 %v1837, %v1836
      %v1843 = vsel %vm908, %v1825, 0
      %1845 = vmatprep.subr.bf16.mxu0 0
      %1846 = vmatpush1.bf16.msra.mxu0 %v1838
      %1847 = vmatprep.subr.bf16.mxu0 0
      %1848 = vmatpush1.bf16.msra.mxu0 %v1839
      %1849 = vmatprep.subr.bf16.mxu0 0
      %1850 = vmatpush1.bf16.msra.mxu0 0
      %1851 = vmatprep.subr.bf16.mxu0 0
      %1852 = vmatpush1.bf16.msra.mxu0 0
      %1853 = vmatprep.subr.bf16.mxu0 0
      %1854 = vmatpush1.bf16.msra.mxu0 0
      %1855 = vmatprep.subr.bf16.mxu0 0
      %1856 = vmatpush1.bf16.msra.mxu0 0
      %1857 = vmatprep.subr.bf16.mxu0 0
      %1858 = vmatpush1.bf16.msra.mxu0 0
      %1859 = vmatprep.subr.bf16.mxu0 0
      %1860 = vmatpush1.bf16.msra.mxu0 0
      %1861 = vmatprep.subr.bf16.mxu0 0
      %1862 = vmatpush1.bf16.msra.mxu0 0
      %1863 = vmatprep.subr.bf16.mxu0 0
      %1864 = vmatpush1.bf16.msra.mxu0 0
      %1865 = vmatprep.subr.bf16.mxu0 0
      %1866 = vmatpush1.bf16.msra.mxu0 0
      %1867 = vmatprep.subr.bf16.mxu0 0
      %1868 = vmatpush1.bf16.msra.mxu0 0
      %1869 = vmatprep.subr.bf16.mxu0 0
      %1870 = vmatpush1.bf16.msra.mxu0 0
      %1871 = vmatprep.subr.bf16.mxu0 0
      %1872 = vmatpush1.bf16.msra.mxu0 0
      %1873 = vmatprep.subr.bf16.mxu0 0
      %1874 = vmatpush1.bf16.msra.mxu0 0
      %1875 = vmatprep.subr.bf16.mxu0 0
      %1876 = vmatpush1.bf16.msra.mxu0 0
      %1877 = vmatprep.mubr.bf16.mxu0 0
      %1878 = vmatmul.mubr.bf16.gmra.mrb[0].mxu0 %v1843
      %v1879 = vpop.f32.mrb[0].mxu0
      %v1880 = vadd.f32 0.0, %v1879
      %v1881 = vpop.f32.mrb[0].mxu0
      %v1882 = vpop.f32.mrb[0].mxu0
      %v1883 = vpop.f32.mrb[0].mxu0
      %1884 = vdwg.mxu0
      %v1885 = vld [vmem:[%s791] sm:$0xf]
      %v1886 = vld [vmem:[%s791 + $0x4] sm:$0xf]
      %v1887 = vld [vmem:[%s791 + $0x8] sm:$0xf]
      %v1888 = vld [vmem:[%s791 + $0xc] sm:$0xf]
      %v1889 = vpack.c.bf16 %v1820, %v1820
      %v1890 = vpack.c.bf16 %v1880, %v1880
      %v1891 = vunpack.c.l.bf16 %v1885
      %v1892 = vunpack.c.l.bf16 %v1886
      %v1893 = vunpack.c.l.bf16 %v1887
      %v1894 = vunpack.c.l.bf16 %v1888
      %v1896 = vsel %vm1003, %v1889, 0
      %v1899 = vsel %vm1003, %v1890, 0
      %1901 = vmatprep.subr.bf16.mxu0 0
      %1902 = vmatpush1.bf16.xpose.msra.mxu0 %v1899
      %1903 = vmatprep.subr.bf16.mxu0 0
      %1904 = vmatpush1.bf16.xpose.msra.mxu0 0
      %1905 = vmatprep.subr.bf16.mxu0 0
      %1906 = vmatpush1.bf16.xpose.msra.mxu0 0
      %1907 = vmatprep.subr.bf16.mxu0 0
      %1908 = vmatpush1.bf16.xpose.msra.mxu0 0
      %1909 = vmatprep.subr.bf16.mxu0 0
      %1910 = vmatpush1.bf16.xpose.msra.mxu0 0
      %1911 = vmatprep.subr.bf16.mxu0 0
      %1912 = vmatpush1.bf16.xpose.msra.mxu0 0
      %1913 = vmatprep.subr.bf16.mxu0 0
      %1914 = vmatpush1.bf16.xpose.msra.mxu0 0
      %1915 = vmatprep.subr.bf16.mxu0 0
      %1916 = vmatpush1.bf16.xpose.msra.mxu0 0
      %1917 = vmatprep.subr.bf16.mxu0 0
      %1918 = vmatpush1.bf16.xpose.msra.mxu0 0
      %1919 = vmatprep.subr.bf16.mxu0 0
      %1920 = vmatpush1.bf16.xpose.msra.mxu0 0
      %1921 = vmatprep.subr.bf16.mxu0 0
      %1922 = vmatpush1.bf16.xpose.msra.mxu0 0
      %1923 = vmatprep.subr.bf16.mxu0 0
      %1924 = vmatpush1.bf16.xpose.msra.mxu0 0
      %1925 = vmatprep.subr.bf16.mxu0 0
      %1926 = vmatpush1.bf16.xpose.msra.mxu0 0
      %1927 = vmatprep.subr.bf16.mxu0 0
      %1928 = vmatpush1.bf16.xpose.msra.mxu0 0
      %1929 = vmatprep.subr.bf16.mxu0 0
      %1930 = vmatpush1.bf16.xpose.msra.mxu0 0
      %1931 = vmatprep.subr.bf16.mxu0 0
      %1932 = vmatpush1.bf16.xpose.msra.mxu0 0
      %1933 = vmatprep.mubr.bf16.mxu0 0
      %1934 = vmatmul.mubr.bf16.gmra.mrb[0].mxu0 %v1896
      %v1935 = vpop.f32.mrb[0].mxu0
      %v1936 = vadd.f32 0.0, %v1935
      %v1937 = vpop.f32.mrb[0].mxu0
      %v1938 = vpop.f32.mrb[0].mxu0
      %v1939 = vpop.f32.mrb[0].mxu0
      %1940 = vdwg.mxu0
      %v1941 = vmul.f32 %v1936, 0.35355338
      %v1942 = vsel %vm1003, %v1941, -inf
      %1943 = vmax.xlane.f32.xlu0 %v1942
      %v1944 = vpop.xlane.xlu0 %1943
      %v1945 = vsub.f32 %v1941, %v1944
      %v1946 = vmul.f32 %v1945, 1.442695
      %v1947 = vpow.pop %v1946
      %v1948 = vsel %vm1003, %v1947, 0.0
      %1949 = vadd.xlane.f32.xlu0 %v1948
      %v1950 = vpop.xlane.xlu0 %1949
      %v1951 = vrcp.pop %v1950
      %v1952 = vmul.f32 %v1947, %v1951
      %v1953 = vpack.c.bf16 %v1952, %v1952
      %1955 = vrot.lane.b32.xlu0 %v1890, 96
      %v1956 = vpop.permute.xlu0 %1955
      %v1958 = vsel %vm1003, %v1953, 0
      %v1961 = vsel %vm1069, %v1956, 0
      %1963 = vmatprep.subr.bf16.mxu0 0
      %1964 = vmatpush1.bf16.msra.mxu0 %v1961
      %1965 = vmatprep.subr.bf16.mxu0 0
      %1966 = vmatpush1.bf16.msra.mxu0 0
      %1967 = vmatprep.subr.bf16.mxu0 0
      %1968 = vmatpush1.bf16.msra.mxu0 0
      %1969 = vmatprep.subr.bf16.mxu0 0
      %1970 = vmatpush1.bf16.msra.mxu0 0
      %1971 = vmatprep.subr.bf16.mxu0 0
      %1972 = vmatpush1.bf16.msra.mxu0 0
      %1973 = vmatprep.subr.bf16.mxu0 0
      %1974 = vmatpush1.bf16.msra.mxu0 0
      %1975 = vmatprep.subr.bf16.mxu0 0
      %1976 = vmatpush1.bf16.msra.mxu0 0
      %1977 = vmatprep.subr.bf16.mxu0 0
      %1978 = vmatpush1.bf16.msra.mxu0 0
      %1979 = vmatprep.subr.bf16.mxu0 0
      %1980 = vmatpush1.bf16.msra.mxu0 0
      %1981 = vmatprep.subr.bf16.mxu0 0
      %1982 = vmatpush1.bf16.msra.mxu0 0
      %1983 = vmatprep.subr.bf16.mxu0 0
      %1984 = vmatpush1.bf16.msra.mxu0 0
      %1985 = vmatprep.subr.bf16.mxu0 0
      %1986 = vmatpush1.bf16.msra.mxu0 0
      %1987 = vmatprep.subr.bf16.mxu0 0
      %1988 = vmatpush1.bf16.msra.mxu0 0
      %1989 = vmatprep.subr.bf16.mxu0 0
      %1990 = vmatpush1.bf16.msra.mxu0 0
      %1991 = vmatprep.subr.bf16.mxu0 0
      %1992 = vmatpush1.bf16.msra.mxu0 0
      %1993 = vmatprep.subr.bf16.mxu0 0
      %1994 = vmatpush1.bf16.msra.mxu0 0
      %1995 = vmatprep.mubr.bf16.mxu0 0
      %1996 = vmatmul.mubr.bf16.gmra.mrb[0].mxu0 %v1958
      %v1997 = vpop.f32.mrb[0].mxu0
      %v1998 = vadd.f32 0.0, %v1997
      %v1999 = vpop.f32.mrb[0].mxu0
      %v2000 = vpop.f32.mrb[0].mxu0
      %v2001 = vpop.f32.mrb[0].mxu0
      %2002 = vdwg.mxu0
      %2004 = vrot.lane.b32.xlu0 %v1889, 120
      %v2005 = vpop.permute.xlu0 %2004
      %2006 = vrot.lane.b32.xlu0 %v1890, 120
      %v2007 = vpop.permute.xlu0 %2006
      %v2009 = vsel %vm1003, %v2005, 0
      %v2012 = vsel %vm1003, %v2007, 0
      %2014 = vmatprep.subr.bf16.mxu0 0
      %2015 = vmatpush1.bf16.xpose.msra.mxu0 %v2012
      %2016 = vmatprep.subr.bf16.mxu0 0
      %2017 = vmatpush1.bf16.xpose.msra.mxu0 0
      %2018 = vmatprep.subr.bf16.mxu0 0
      %2019 = vmatpush1.bf16.xpose.msra.mxu0 0
      %2020 = vmatprep.subr.bf16.mxu0 0
      %2021 = vmatpush1.bf16.xpose.msra.mxu0 0
      %2022 = vmatprep.subr.bf16.mxu0 0
      %2023 = vmatpush1.bf16.xpose.msra.mxu0 0
      %2024 = vmatprep.subr.bf16.mxu0 0
      %2025 = vmatpush1.bf16.xpose.msra.mxu0 0
      %2026 = vmatprep.subr.bf16.mxu0 0
      %2027 = vmatpush1.bf16.xpose.msra.mxu0 0
      %2028 = vmatprep.subr.bf16.mxu0 0
      %2029 = vmatpush1.bf16.xpose.msra.mxu0 0
      %2030 = vmatprep.subr.bf16.mxu0 0
      %2031 = vmatpush1.bf16.xpose.msra.mxu0 0
      %2032 = vmatprep.subr.bf16.mxu0 0
      %2033 = vmatpush1.bf16.xpose.msra.mxu0 0
      %2034 = vmatprep.subr.bf16.mxu0 0
      %2035 = vmatpush1.bf16.xpose.msra.mxu0 0
      %2036 = vmatprep.subr.bf16.mxu0 0
      %2037 = vmatpush1.bf16.xpose.msra.mxu0 0
      %2038 = vmatprep.subr.bf16.mxu0 0
      %2039 = vmatpush1.bf16.xpose.msra.mxu0 0
      %2040 = vmatprep.subr.bf16.mxu0 0
      %2041 = vmatpush1.bf16.xpose.msra.mxu0 0
      %2042 = vmatprep.subr.bf16.mxu0 0
      %2043 = vmatpush1.bf16.xpose.msra.mxu0 0
      %2044 = vmatprep.subr.bf16.mxu0 0
      %2045 = vmatpush1.bf16.xpose.msra.mxu0 0
      %2046 = vmatprep.mubr.bf16.mxu0 0
      %2047 = vmatmul.mubr.bf16.gmra.mrb[0].mxu0 %v2009
      %v2048 = vpop.f32.mrb[0].mxu0
      %v2049 = vadd.f32 0.0, %v2048
      %v2050 = vpop.f32.mrb[0].mxu0
      %v2051 = vpop.f32.mrb[0].mxu0
      %v2052 = vpop.f32.mrb[0].mxu0
      %2053 = vdwg.mxu0
      %v2054 = vmul.f32 %v2049, 0.35355338
      %v2055 = vsel %vm1003, %v2054, -inf
      %2056 = vmax.xlane.f32.xlu0 %v2055
      %v2057 = vpop.xlane.xlu0 %2056
      %v2058 = vsub.f32 %v2054, %v2057
      %v2059 = vmul.f32 %v2058, 1.442695
      %v2060 = vpow.pop %v2059
      %v2061 = vsel %vm1003, %v2060, 0.0
      %2062 = vadd.xlane.f32.xlu0 %v2061
      %v2063 = vpop.xlane.xlu0 %2062
      %v2064 = vrcp.pop %v2063
      %v2065 = vmul.f32 %v2060, %v2064
      %v2066 = vpack.c.bf16 %v2065, %v2065
      %2067 = vrot.lane.b32.xlu0 %v1890, 88
      %v2068 = vpop.permute.xlu0 %2067
      %v2070 = vsel %vm1003, %v2066, 0
      %v2073 = vsel %vm1069, %v2068, 0
      %2075 = vmatprep.subr.bf16.mxu0 0
      %2076 = vmatpush1.bf16.msra.mxu0 %v2073
      %2077 = vmatprep.subr.bf16.mxu0 0
      %2078 = vmatpush1.bf16.msra.mxu0 0
      %2079 = vmatprep.subr.bf16.mxu0 0
      %2080 = vmatpush1.bf16.msra.mxu0 0
      %2081 = vmatprep.subr.bf16.mxu0 0
      %2082 = vmatpush1.bf16.msra.mxu0 0
      %2083 = vmatprep.subr.bf16.mxu0 0
      %2084 = vmatpush1.bf16.msra.mxu0 0
      %2085 = vmatprep.subr.bf16.mxu0 0
      %2086 = vmatpush1.bf16.msra.mxu0 0
      %2087 = vmatprep.subr.bf16.mxu0 0
      %2088 = vmatpush1.bf16.msra.mxu0 0
      %2089 = vmatprep.subr.bf16.mxu0 0
      %2090 = vmatpush1.bf16.msra.mxu0 0
      %2091 = vmatprep.subr.bf16.mxu0 0
      %2092 = vmatpush1.bf16.msra.mxu0 0
      %2093 = vmatprep.subr.bf16.mxu0 0
      %2094 = vmatpush1.bf16.msra.mxu0 0
      %2095 = vmatprep.subr.bf16.mxu0 0
      %2096 = vmatpush1.bf16.msra.mxu0 0
      %2097 = vmatprep.subr.bf16.mxu0 0
      %2098 = vmatpush1.bf16.msra.mxu0 0
      %2099 = vmatprep.subr.bf16.mxu0 0
      %2100 = vmatpush1.bf16.msra.mxu0 0
      %2101 = vmatprep.subr.bf16.mxu0 0
      %2102 = vmatpush1.bf16.msra.mxu0 0
      %2103 = vmatprep.subr.bf16.mxu0 0
      %2104 = vmatpush1.bf16.msra.mxu0 0
      %2105 = vmatprep.subr.bf16.mxu0 0
      %2106 = vmatpush1.bf16.msra.mxu0 0
      %2107 = vmatprep.mubr.bf16.mxu0 0
      %2108 = vmatmul.mubr.bf16.gmra.mrb[0].mxu0 %v2070
      %v2109 = vpop.f32.mrb[0].mxu0
      %v2110 = vadd.f32 0.0, %v2109
      %v2111 = vpop.f32.mrb[0].mxu0
      %v2112 = vpop.f32.mrb[0].mxu0
      %v2113 = vpop.f32.mrb[0].mxu0
      %2114 = vdwg.mxu0
      %v2116 = vsel %vm1003, %v2110, 0
      %2118 = vmatprep.subr.mxu0 0.0
      %2119 = vmatpush1.msra.mxu0 %v1892
      %2120 = vmatprep.subr.mxu0 0.0
      %2121 = vmatpush1.msra.mxu0 0.0
      %2122 = vmatprep.subr.mxu0 0.0
      %2123 = vmatpush1.msra.mxu0 0.0
      %2124 = vmatprep.subr.mxu0 0.0
      %2125 = vmatpush1.msra.mxu0 0.0
      %2126 = vmatprep.subr.mxu0 0.0
      %2127 = vmatpush1.msra.mxu0 0.0
      %2128 = vmatprep.subr.mxu0 0.0
      %2129 = vmatpush1.msra.mxu0 0.0
      %2130 = vmatprep.subr.mxu0 0.0
      %2131 = vmatpush1.msra.mxu0 0.0
      %2132 = vmatprep.subr.mxu0 0.0
      %2133 = vmatpush1.msra.mxu0 0.0
      %2134 = vmatprep.subr.mxu0 0.0
      %2135 = vmatpush1.msra.mxu0 0.0
      %2136 = vmatprep.subr.mxu0 0.0
      %2137 = vmatpush1.msra.mxu0 0.0
      %2138 = vmatprep.subr.mxu0 0.0
      %2139 = vmatpush1.msra.mxu0 0.0
      %2140 = vmatprep.subr.mxu0 0.0
      %2141 = vmatpush1.msra.mxu0 0.0
      %2142 = vmatprep.subr.mxu0 0.0
      %2143 = vmatpush1.msra.mxu0 0.0
      %2144 = vmatprep.subr.mxu0 0.0
      %2145 = vmatpush1.msra.mxu0 0.0
      %2146 = vmatprep.subr.mxu0 0.0
      %2147 = vmatpush1.msra.mxu0 0.0
      %2148 = vmatprep.subr.mxu0 0.0
      %2149 = vmatpush1.msra.mxu0 0.0
      %2150 = vmatprep.subr.mxu0 0.0
      %2151 = vmatpush1.msra.mxu0 0.0
      %2152 = vmatprep.subr.mxu0 0.0
      %2153 = vmatpush1.msra.mxu0 0.0
      %2154 = vmatprep.subr.mxu0 0.0
      %2155 = vmatpush1.msra.mxu0 0.0
      %2156 = vmatprep.subr.mxu0 0.0
      %2157 = vmatpush1.msra.mxu0 0.0
      %2158 = vmatprep.subr.mxu0 0.0
      %2159 = vmatpush1.msra.mxu0 0.0
      %2160 = vmatprep.subr.mxu0 0.0
      %2161 = vmatpush1.msra.mxu0 0.0
      %2162 = vmatprep.subr.mxu0 0.0
      %2163 = vmatpush1.msra.mxu0 0.0
      %2164 = vmatprep.subr.mxu0 0.0
      %2165 = vmatpush1.msra.mxu0 0.0
      %2166 = vmatprep.subr.mxu0 0.0
      %2167 = vmatpush1.msra.mxu0 0.0
      %2168 = vmatprep.subr.mxu0 0.0
      %2169 = vmatpush1.msra.mxu0 0.0
      %2170 = vmatprep.subr.mxu0 0.0
      %2171 = vmatpush1.msra.mxu0 0.0
      %2172 = vmatprep.subr.mxu0 0.0
      %2173 = vmatpush1.msra.mxu0 0.0
      %2174 = vmatprep.subr.mxu0 0.0
      %2175 = vmatpush1.msra.mxu0 0.0
      %2176 = vmatprep.subr.mxu0 0.0
      %2177 = vmatpush1.msra.mxu0 0.0
      %2178 = vmatprep.subr.mxu0 0.0
      %2179 = vmatpush1.msra.mxu0 0.0
      %2180 = vmatprep.subr.mxu0 0.0
      %2181 = vmatpush1.msra.mxu0 0.0
      %2182 = vmatprep.mubr.f32.mxu0 0.0
      %2183 = vmatmul.mubr.f32.gmra.mrb[0].mxu0 %v2116
      %v2184 = vpop.f32.mrb[0].mxu0
      %v2185 = vadd.f32 0.0, %v2184
      %v2186 = vpop.f32.mrb[0].mxu0
      %2187 = vdwg.mxu0
      %v2189 = vsel %vm1003, %v1998, 0
      %2191 = vmatprep.subr.mxu0 0.0
      %2192 = vmatpush1.msra.mxu0 %v1891
      %2193 = vmatprep.subr.mxu0 0.0
      %2194 = vmatpush1.msra.mxu0 0.0
      %2195 = vmatprep.subr.mxu0 0.0
      %2196 = vmatpush1.msra.mxu0 0.0
      %2197 = vmatprep.subr.mxu0 0.0
      %2198 = vmatpush1.msra.mxu0 0.0
      %2199 = vmatprep.subr.mxu0 0.0
      %2200 = vmatpush1.msra.mxu0 0.0
      %2201 = vmatprep.subr.mxu0 0.0
      %2202 = vmatpush1.msra.mxu0 0.0
      %2203 = vmatprep.subr.mxu0 0.0
      %2204 = vmatpush1.msra.mxu0 0.0
      %2205 = vmatprep.subr.mxu0 0.0
      %2206 = vmatpush1.msra.mxu0 0.0
      %2207 = vmatprep.subr.mxu0 0.0
      %2208 = vmatpush1.msra.mxu0 0.0
      %2209 = vmatprep.subr.mxu0 0.0
      %2210 = vmatpush1.msra.mxu0 0.0
      %2211 = vmatprep.subr.mxu0 0.0
      %2212 = vmatpush1.msra.mxu0 0.0
      %2213 = vmatprep.subr.mxu0 0.0
      %2214 = vmatpush1.msra.mxu0 0.0
      %2215 = vmatprep.subr.mxu0 0.0
      %2216 = vmatpush1.msra.mxu0 0.0
      %2217 = vmatprep.subr.mxu0 0.0
      %2218 = vmatpush1.msra.mxu0 0.0
      %2219 = vmatprep.subr.mxu0 0.0
      %2220 = vmatpush1.msra.mxu0 0.0
      %2221 = vmatprep.subr.mxu0 0.0
      %2222 = vmatpush1.msra.mxu0 0.0
      %2223 = vmatprep.subr.mxu0 0.0
      %2224 = vmatpush1.msra.mxu0 0.0
      %2225 = vmatprep.subr.mxu0 0.0
      %2226 = vmatpush1.msra.mxu0 0.0
      %2227 = vmatprep.subr.mxu0 0.0
      %2228 = vmatpush1.msra.mxu0 0.0
      %2229 = vmatprep.subr.mxu0 0.0
      %2230 = vmatpush1.msra.mxu0 0.0
      %2231 = vmatprep.subr.mxu0 0.0
      %2232 = vmatpush1.msra.mxu0 0.0
      %2233 = vmatprep.subr.mxu0 0.0
      %2234 = vmatpush1.msra.mxu0 0.0
      %2235 = vmatprep.subr.mxu0 0.0
      %2236 = vmatpush1.msra.mxu0 0.0
      %2237 = vmatprep.subr.mxu0 0.0
      %2238 = vmatpush1.msra.mxu0 0.0
      %2239 = vmatprep.subr.mxu0 0.0
      %2240 = vmatpush1.msra.mxu0 0.0
      %2241 = vmatprep.subr.mxu0 0.0
      %2242 = vmatpush1.msra.mxu0 0.0
      %2243 = vmatprep.subr.mxu0 0.0
      %2244 = vmatpush1.msra.mxu0 0.0
      %2245 = vmatprep.subr.mxu0 0.0
      %2246 = vmatpush1.msra.mxu0 0.0
      %2247 = vmatprep.subr.mxu0 0.0
      %2248 = vmatpush1.msra.mxu0 0.0
      %2249 = vmatprep.subr.mxu0 0.0
      %2250 = vmatpush1.msra.mxu0 0.0
      %2251 = vmatprep.subr.mxu0 0.0
      %2252 = vmatpush1.msra.mxu0 0.0
      %2253 = vmatprep.subr.mxu0 0.0
      %2254 = vmatpush1.msra.mxu0 0.0
      %2255 = vmatprep.mubr.f32.mxu0 0.0
      %2256 = vmatmul.mubr.f32.gmra.mrb[0].mxu0 %v2189
      %v2257 = vpop.f32.mrb[0].mxu0
      %v2258 = vadd.f32 %v2185, %v2257
      %v2259 = vpop.f32.mrb[0].mxu0
      %2260 = vdwg.mxu0
      %2261 = vrot.lane.b32.xlu0 %v1889, 112
      %v2262 = vpop.permute.xlu0 %2261
      %2263 = vrot.lane.b32.xlu0 %v1890, 112
      %v2264 = vpop.permute.xlu0 %2263
      %v2266 = vsel %vm1003, %v2262, 0
      %v2269 = vsel %vm1003, %v2264, 0
      %2271 = vmatprep.subr.bf16.mxu0 0
      %2272 = vmatpush1.bf16.xpose.msra.mxu0 %v2269
      %2273 = vmatprep.subr.bf16.mxu0 0
      %2274 = vmatpush1.bf16.xpose.msra.mxu0 0
      %2275 = vmatprep.subr.bf16.mxu0 0
      %2276 = vmatpush1.bf16.xpose.msra.mxu0 0
      %2277 = vmatprep.subr.bf16.mxu0 0
      %2278 = vmatpush1.bf16.xpose.msra.mxu0 0
      %2279 = vmatprep.subr.bf16.mxu0 0
      %2280 = vmatpush1.bf16.xpose.msra.mxu0 0
      %2281 = vmatprep.subr.bf16.mxu0 0
      %2282 = vmatpush1.bf16.xpose.msra.mxu0 0
      %2283 = vmatprep.subr.bf16.mxu0 0
      %2284 = vmatpush1.bf16.xpose.msra.mxu0 0
      %2285 = vmatprep.subr.bf16.mxu0 0
      %2286 = vmatpush1.bf16.xpose.msra.mxu0 0
      %2287 = vmatprep.subr.bf16.mxu0 0
      %2288 = vmatpush1.bf16.xpose.msra.mxu0 0
      %2289 = vmatprep.subr.bf16.mxu0 0
      %2290 = vmatpush1.bf16.xpose.msra.mxu0 0
      %2291 = vmatprep.subr.bf16.mxu0 0
      %2292 = vmatpush1.bf16.xpose.msra.mxu0 0
      %2293 = vmatprep.subr.bf16.mxu0 0
      %2294 = vmatpush1.bf16.xpose.msra.mxu0 0
      %2295 = vmatprep.subr.bf16.mxu0 0
      %2296 = vmatpush1.bf16.xpose.msra.mxu0 0
      %2297 = vmatprep.subr.bf16.mxu0 0
      %2298 = vmatpush1.bf16.xpose.msra.mxu0 0
      %2299 = vmatprep.subr.bf16.mxu0 0
      %2300 = vmatpush1.bf16.xpose.msra.mxu0 0
      %2301 = vmatprep.subr.bf16.mxu0 0
      %2302 = vmatpush1.bf16.xpose.msra.mxu0 0
      %2303 = vmatprep.mubr.bf16.mxu0 0
      %2304 = vmatmul.mubr.bf16.gmra.mrb[0].mxu0 %v2266
      %v2305 = vpop.f32.mrb[0].mxu0
      %v2306 = vadd.f32 0.0, %v2305
      %v2307 = vpop.f32.mrb[0].mxu0
      %v2308 = vpop.f32.mrb[0].mxu0
      %v2309 = vpop.f32.mrb[0].mxu0
      %2310 = vdwg.mxu0
      %v2311 = vmul.f32 %v2306, 0.35355338
      %v2312 = vsel %vm1003, %v2311, -inf
      %2313 = vmax.xlane.f32.xlu0 %v2312
      %v2314 = vpop.xlane.xlu0 %2313
      %v2315 = vsub.f32 %v2311, %v2314
      %v2316 = vmul.f32 %v2315, 1.442695
      %v2317 = vpow.pop %v2316
      %v2318 = vsel %vm1003, %v2317, 0.0
      %2319 = vadd.xlane.f32.xlu0 %v2318
      %v2320 = vpop.xlane.xlu0 %2319
      %v2321 = vrcp.pop %v2320
      %v2322 = vmul.f32 %v2317, %v2321
      %v2323 = vpack.c.bf16 %v2322, %v2322
      %2324 = vrot.lane.b32.xlu0 %v1890, 80
      %v2325 = vpop.permute.xlu0 %2324
      %v2327 = vsel %vm1003, %v2323, 0
      %v2330 = vsel %vm1069, %v2325, 0
      %2332 = vmatprep.subr.bf16.mxu0 0
      %2333 = vmatpush1.bf16.msra.mxu0 %v2330
      %2334 = vmatprep.subr.bf16.mxu0 0
      %2335 = vmatpush1.bf16.msra.mxu0 0
      %2336 = vmatprep.subr.bf16.mxu0 0
      %2337 = vmatpush1.bf16.msra.mxu0 0
      %2338 = vmatprep.subr.bf16.mxu0 0
      %2339 = vmatpush1.bf16.msra.mxu0 0
      %2340 = vmatprep.subr.bf16.mxu0 0
      %2341 = vmatpush1.bf16.msra.mxu0 0
      %2342 = vmatprep.subr.bf16.mxu0 0
      %2343 = vmatpush1.bf16.msra.mxu0 0
      %2344 = vmatprep.subr.bf16.mxu0 0
      %2345 = vmatpush1.bf16.msra.mxu0 0
      %2346 = vmatprep.subr.bf16.mxu0 0
      %2347 = vmatpush1.bf16.msra.mxu0 0
      %2348 = vmatprep.subr.bf16.mxu0 0
      %2349 = vmatpush1.bf16.msra.mxu0 0
      %2350 = vmatprep.subr.bf16.mxu0 0
      %2351 = vmatpush1.bf16.msra.mxu0 0
      %2352 = vmatprep.subr.bf16.mxu0 0
      %2353 = vmatpush1.bf16.msra.mxu0 0
      %2354 = vmatprep.subr.bf16.mxu0 0
      %2355 = vmatpush1.bf16.msra.mxu0 0
      %2356 = vmatprep.subr.bf16.mxu0 0
      %2357 = vmatpush1.bf16.msra.mxu0 0
      %2358 = vmatprep.subr.bf16.mxu0 0
      %2359 = vmatpush1.bf16.msra.mxu0 0
      %2360 = vmatprep.subr.bf16.mxu0 0
      %2361 = vmatpush1.bf16.msra.mxu0 0
      %2362 = vmatprep.subr.bf16.mxu0 0
      %2363 = vmatpush1.bf16.msra.mxu0 0
      %2364 = vmatprep.mubr.bf16.mxu0 0
      %2365 = vmatmul.mubr.bf16.gmra.mrb[0].mxu0 %v2327
      %v2366 = vpop.f32.mrb[0].mxu0
      %v2367 = vadd.f32 0.0, %v2366
      %v2368 = vpop.f32.mrb[0].mxu0
      %v2369 = vpop.f32.mrb[0].mxu0
      %v2370 = vpop.f32.mrb[0].mxu0
      %2371 = vdwg.mxu0
      %v2373 = vsel %vm1003, %v2367, 0
      %2375 = vmatprep.subr.mxu0 0.0
      %2376 = vmatpush1.msra.mxu0 %v1893
      %2377 = vmatprep.subr.mxu0 0.0
      %2378 = vmatpush1.msra.mxu0 0.0
      %2379 = vmatprep.subr.mxu0 0.0
      %2380 = vmatpush1.msra.mxu0 0.0
      %2381 = vmatprep.subr.mxu0 0.0
      %2382 = vmatpush1.msra.mxu0 0.0
      %2383 = vmatprep.subr.mxu0 0.0
      %2384 = vmatpush1.msra.mxu0 0.0
      %2385 = vmatprep.subr.mxu0 0.0
      %2386 = vmatpush1.msra.mxu0 0.0
      %2387 = vmatprep.subr.mxu0 0.0
      %2388 = vmatpush1.msra.mxu0 0.0
      %2389 = vmatprep.subr.mxu0 0.0
      %2390 = vmatpush1.msra.mxu0 0.0
      %2391 = vmatprep.subr.mxu0 0.0
      %2392 = vmatpush1.msra.mxu0 0.0
      %2393 = vmatprep.subr.mxu0 0.0
      %2394 = vmatpush1.msra.mxu0 0.0
      %2395 = vmatprep.subr.mxu0 0.0
      %2396 = vmatpush1.msra.mxu0 0.0
      %2397 = vmatprep.subr.mxu0 0.0
      %2398 = vmatpush1.msra.mxu0 0.0
      %2399 = vmatprep.subr.mxu0 0.0
      %2400 = vmatpush1.msra.mxu0 0.0
      %2401 = vmatprep.subr.mxu0 0.0
      %2402 = vmatpush1.msra.mxu0 0.0
      %2403 = vmatprep.subr.mxu0 0.0
      %2404 = vmatpush1.msra.mxu0 0.0
      %2405 = vmatprep.subr.mxu0 0.0
      %2406 = vmatpush1.msra.mxu0 0.0
      %2407 = vmatprep.subr.mxu0 0.0
      %2408 = vmatpush1.msra.mxu0 0.0
      %2409 = vmatprep.subr.mxu0 0.0
      %2410 = vmatpush1.msra.mxu0 0.0
      %2411 = vmatprep.subr.mxu0 0.0
      %2412 = vmatpush1.msra.mxu0 0.0
      %2413 = vmatprep.subr.mxu0 0.0
      %2414 = vmatpush1.msra.mxu0 0.0
      %2415 = vmatprep.subr.mxu0 0.0
      %2416 = vmatpush1.msra.mxu0 0.0
      %2417 = vmatprep.subr.mxu0 0.0
      %2418 = vmatpush1.msra.mxu0 0.0
      %2419 = vmatprep.subr.mxu0 0.0
      %2420 = vmatpush1.msra.mxu0 0.0
      %2421 = vmatprep.subr.mxu0 0.0
      %2422 = vmatpush1.msra.mxu0 0.0
      %2423 = vmatprep.subr.mxu0 0.0
      %2424 = vmatpush1.msra.mxu0 0.0
      %2425 = vmatprep.subr.mxu0 0.0
      %2426 = vmatpush1.msra.mxu0 0.0
      %2427 = vmatprep.subr.mxu0 0.0
      %2428 = vmatpush1.msra.mxu0 0.0
      %2429 = vmatprep.subr.mxu0 0.0
      %2430 = vmatpush1.msra.mxu0 0.0
      %2431 = vmatprep.subr.mxu0 0.0
      %2432 = vmatpush1.msra.mxu0 0.0
      %2433 = vmatprep.subr.mxu0 0.0
      %2434 = vmatpush1.msra.mxu0 0.0
      %2435 = vmatprep.subr.mxu0 0.0
      %2436 = vmatpush1.msra.mxu0 0.0
      %2437 = vmatprep.subr.mxu0 0.0
      %2438 = vmatpush1.msra.mxu0 0.0
      %2439 = vmatprep.mubr.f32.mxu0 0.0
      %2440 = vmatmul.mubr.f32.gmra.mrb[0].mxu0 %v2373
      %v2441 = vpop.f32.mrb[0].mxu0
      %v2442 = vadd.f32 0.0, %v2441
      %v2443 = vpop.f32.mrb[0].mxu0
      %2444 = vdwg.mxu0
      %v2445 = vadd.f32 %v2258, %v2442
      %2446 = vrot.lane.b32.xlu0 %v1889, 104
      %v2447 = vpop.permute.xlu0 %2446
      %2448 = vrot.lane.b32.xlu0 %v1890, 104
      %v2449 = vpop.permute.xlu0 %2448
      %v2451 = vsel %vm1003, %v2447, 0
      %v2454 = vsel %vm1003, %v2449, 0
      %2456 = vmatprep.subr.bf16.mxu0 0
      %2457 = vmatpush1.bf16.xpose.msra.mxu0 %v2454
      %2458 = vmatprep.subr.bf16.mxu0 0
      %2459 = vmatpush1.bf16.xpose.msra.mxu0 0
      %2460 = vmatprep.subr.bf16.mxu0 0
      %2461 = vmatpush1.bf16.xpose.msra.mxu0 0
      %2462 = vmatprep.subr.bf16.mxu0 0
      %2463 = vmatpush1.bf16.xpose.msra.mxu0 0
      %2464 = vmatprep.subr.bf16.mxu0 0
      %2465 = vmatpush1.bf16.xpose.msra.mxu0 0
      %2466 = vmatprep.subr.bf16.mxu0 0
      %2467 = vmatpush1.bf16.xpose.msra.mxu0 0
      %2468 = vmatprep.subr.bf16.mxu0 0
      %2469 = vmatpush1.bf16.xpose.msra.mxu0 0
      %2470 = vmatprep.subr.bf16.mxu0 0
      %2471 = vmatpush1.bf16.xpose.msra.mxu0 0
      %2472 = vmatprep.subr.bf16.mxu0 0
      %2473 = vmatpush1.bf16.xpose.msra.mxu0 0
      %2474 = vmatprep.subr.bf16.mxu0 0
      %2475 = vmatpush1.bf16.xpose.msra.mxu0 0
      %2476 = vmatprep.subr.bf16.mxu0 0
      %2477 = vmatpush1.bf16.xpose.msra.mxu0 0
      %2478 = vmatprep.subr.bf16.mxu0 0
      %2479 = vmatpush1.bf16.xpose.msra.mxu0 0
      %2480 = vmatprep.subr.bf16.mxu0 0
      %2481 = vmatpush1.bf16.xpose.msra.mxu0 0
      %2482 = vmatprep.subr.bf16.mxu0 0
      %2483 = vmatpush1.bf16.xpose.msra.mxu0 0
      %2484 = vmatprep.subr.bf16.mxu0 0
      %2485 = vmatpush1.bf16.xpose.msra.mxu0 0
      %2486 = vmatprep.subr.bf16.mxu0 0
      %2487 = vmatpush1.bf16.xpose.msra.mxu0 0
      %2488 = vmatprep.mubr.bf16.mxu0 0
      %2489 = vmatmul.mubr.bf16.gmra.mrb[0].mxu0 %v2451
      %v2490 = vpop.f32.mrb[0].mxu0
      %v2491 = vadd.f32 0.0, %v2490
      %v2492 = vpop.f32.mrb[0].mxu0
      %v2493 = vpop.f32.mrb[0].mxu0
      %v2494 = vpop.f32.mrb[0].mxu0
      %2495 = vdwg.mxu0
      %v2496 = vmul.f32 %v2491, 0.35355338
      %v2497 = vsel %vm1003, %v2496, -inf
      %2498 = vmax.xlane.f32.xlu0 %v2497
      %v2499 = vpop.xlane.xlu0 %2498
      %v2500 = vsub.f32 %v2496, %v2499
      %v2501 = vmul.f32 %v2500, 1.442695
      %v2502 = vpow.pop %v2501
      %v2503 = vsel %vm1003, %v2502, 0.0
      %2504 = vadd.xlane.f32.xlu0 %v2503
      %v2505 = vpop.xlane.xlu0 %2504
      %v2506 = vrcp.pop %v2505
      %v2507 = vmul.f32 %v2502, %v2506
      %v2508 = vpack.c.bf16 %v2507, %v2507
      %2509 = vrot.lane.b32.xlu0 %v1890, 72
      %v2510 = vpop.permute.xlu0 %2509
      %v2512 = vsel %vm1003, %v2508, 0
      %v2515 = vsel %vm1069, %v2510, 0
      %2517 = vmatprep.subr.bf16.mxu0 0
      %2518 = vmatpush1.bf16.msra.mxu0 %v2515
      %2519 = vmatprep.subr.bf16.mxu0 0
      %2520 = vmatpush1.bf16.msra.mxu0 0
      %2521 = vmatprep.subr.bf16.mxu0 0
      %2522 = vmatpush1.bf16.msra.mxu0 0
      %2523 = vmatprep.subr.bf16.mxu0 0
      %2524 = vmatpush1.bf16.msra.mxu0 0
      %2525 = vmatprep.subr.bf16.mxu0 0
      %2526 = vmatpush1.bf16.msra.mxu0 0
      %2527 = vmatprep.subr.bf16.mxu0 0
      %2528 = vmatpush1.bf16.msra.mxu0 0
      %2529 = vmatprep.subr.bf16.mxu0 0
      %2530 = vmatpush1.bf16.msra.mxu0 0
      %2531 = vmatprep.subr.bf16.mxu0 0
      %2532 = vmatpush1.bf16.msra.mxu0 0
      %2533 = vmatprep.subr.bf16.mxu0 0
      %2534 = vmatpush1.bf16.msra.mxu0 0
      %2535 = vmatprep.subr.bf16.mxu0 0
      %2536 = vmatpush1.bf16.msra.mxu0 0
      %2537 = vmatprep.subr.bf16.mxu0 0
      %2538 = vmatpush1.bf16.msra.mxu0 0
      %2539 = vmatprep.subr.bf16.mxu0 0
      %2540 = vmatpush1.bf16.msra.mxu0 0
      %2541 = vmatprep.subr.bf16.mxu0 0
      %2542 = vmatpush1.bf16.msra.mxu0 0
      %2543 = vmatprep.subr.bf16.mxu0 0
      %2544 = vmatpush1.bf16.msra.mxu0 0
      %2545 = vmatprep.subr.bf16.mxu0 0
      %2546 = vmatpush1.bf16.msra.mxu0 0
      %2547 = vmatprep.subr.bf16.mxu0 0
      %2548 = vmatpush1.bf16.msra.mxu0 0
      %2549 = vmatprep.mubr.bf16.mxu0 0
      %2550 = vmatmul.mubr.bf16.gmra.mrb[0].mxu0 %v2512
      %v2551 = vpop.f32.mrb[0].mxu0
      %v2552 = vadd.f32 0.0, %v2551
      %v2553 = vpop.f32.mrb[0].mxu0
      %v2554 = vpop.f32.mrb[0].mxu0
      %v2555 = vpop.f32.mrb[0].mxu0
      %2556 = vdwg.mxu0
      %v2558 = vsel %vm1003, %v2552, 0
      %2560 = vmatprep.subr.mxu0 0.0
      %2561 = vmatpush1.msra.mxu0 %v1894
      %2562 = vmatprep.subr.mxu0 0.0
      %2563 = vmatpush1.msra.mxu0 0.0
      %2564 = vmatprep.subr.mxu0 0.0
      %2565 = vmatpush1.msra.mxu0 0.0
      %2566 = vmatprep.subr.mxu0 0.0
      %2567 = vmatpush1.msra.mxu0 0.0
      %2568 = vmatprep.subr.mxu0 0.0
      %2569 = vmatpush1.msra.mxu0 0.0
      %2570 = vmatprep.subr.mxu0 0.0
      %2571 = vmatpush1.msra.mxu0 0.0
      %2572 = vmatprep.subr.mxu0 0.0
      %2573 = vmatpush1.msra.mxu0 0.0
      %2574 = vmatprep.subr.mxu0 0.0
      %2575 = vmatpush1.msra.mxu0 0.0
      %2576 = vmatprep.subr.mxu0 0.0
      %2577 = vmatpush1.msra.mxu0 0.0
      %2578 = vmatprep.subr.mxu0 0.0
      %2579 = vmatpush1.msra.mxu0 0.0
      %2580 = vmatprep.subr.mxu0 0.0
      %2581 = vmatpush1.msra.mxu0 0.0
      %2582 = vmatprep.subr.mxu0 0.0
      %2583 = vmatpush1.msra.mxu0 0.0
      %2584 = vmatprep.subr.mxu0 0.0
      %2585 = vmatpush1.msra.mxu0 0.0
      %2586 = vmatprep.subr.mxu0 0.0
      %2587 = vmatpush1.msra.mxu0 0.0
      %2588 = vmatprep.subr.mxu0 0.0
      %2589 = vmatpush1.msra.mxu0 0.0
      %2590 = vmatprep.subr.mxu0 0.0
      %2591 = vmatpush1.msra.mxu0 0.0
      %2592 = vmatprep.subr.mxu0 0.0
      %2593 = vmatpush1.msra.mxu0 0.0
      %2594 = vmatprep.subr.mxu0 0.0
      %2595 = vmatpush1.msra.mxu0 0.0
      %2596 = vmatprep.subr.mxu0 0.0
      %2597 = vmatpush1.msra.mxu0 0.0
      %2598 = vmatprep.subr.mxu0 0.0
      %2599 = vmatpush1.msra.mxu0 0.0
      %2600 = vmatprep.subr.mxu0 0.0
      %2601 = vmatpush1.msra.mxu0 0.0
      %2602 = vmatprep.subr.mxu0 0.0
      %2603 = vmatpush1.msra.mxu0 0.0
      %2604 = vmatprep.subr.mxu0 0.0
      %2605 = vmatpush1.msra.mxu0 0.0
      %2606 = vmatprep.subr.mxu0 0.0
      %2607 = vmatpush1.msra.mxu0 0.0
      %2608 = vmatprep.subr.mxu0 0.0
      %2609 = vmatpush1.msra.mxu0 0.0
      %2610 = vmatprep.subr.mxu0 0.0
      %2611 = vmatpush1.msra.mxu0 0.0
      %2612 = vmatprep.subr.mxu0 0.0
      %2613 = vmatpush1.msra.mxu0 0.0
      %2614 = vmatprep.subr.mxu0 0.0
      %2615 = vmatpush1.msra.mxu0 0.0
      %2616 = vmatprep.subr.mxu0 0.0
      %2617 = vmatpush1.msra.mxu0 0.0
      %2618 = vmatprep.subr.mxu0 0.0
      %2619 = vmatpush1.msra.mxu0 0.0
      %2620 = vmatprep.subr.mxu0 0.0
      %2621 = vmatpush1.msra.mxu0 0.0
      %2622 = vmatprep.subr.mxu0 0.0
      %2623 = vmatpush1.msra.mxu0 0.0
      %2624 = vmatprep.mubr.f32.mxu0 0.0
      %2625 = vmatmul.mubr.f32.gmra.mrb[0].mxu0 %v2558
      %v2626 = vpop.f32.mrb[0].mxu0
      %v2627 = vadd.f32 0.0, %v2626
      %v2628 = vpop.f32.mrb[0].mxu0
      %2629 = vdwg.mxu0
      %v2630 = vadd.f32 %v2445, %v2627
      %v2631 = vadd.f32 %v1743, %v2630
      %v2632 = vld [vmem:[%s794] sm:$0x1]
      %v2633 = vsel %vm908, %v2631, 0.0
      %2634 = vadd.xlane.f32.xlu0 %v2633
      %v2635 = vpop.xlane.xlu0 %2634
      %v2636 = vmul.f32 %v2635, %v912
      %v2637 = vsub.f32 %v2631, %v2636
      %v2638 = vmul.f32 %v2637, %v2637
      %v2639 = vsel %vm908, %v2638, 0.0
      %2640 = vadd.xlane.f32.xlu0 %v2639
      %v2641 = vpop.xlane.xlu0 %2640
      %v2642 = vmul.f32 %v2641, %v912
      %v2643 = vadd.f32 %v2642, 1e-05
      %v2644 = vrsqrt.pop %v2643
      %v2645 = vmul.f32 %v2637, %v2644
      %v2647 = vlaneseq
      %v2648 = vshrl.u32 %v2647, 7
      %v2649 = vsub.s32 0, %v2648
      %v2650 = vrot.slane %v2632, %v2649
      %v2652 = vmul.f32 %v2645, %v2650
      %v2653 = vpack.c.bf16 %v2652, %v2652
      %v2654 = vld [vmem:[%s799] sm:$0xf]
      %v2655 = vld [vmem:[%s799 + $0x4] sm:$0xf]
      %v2656 = vld [vmem:[%s799 + $0x8] sm:$0xf]
      %v2657 = vld [vmem:[%s799 + $0xc] sm:$0xf]
      %v2662 = vunpack.c.l.b16 %v2654
      %v2663 = vunpack.c.l.b16 %v2655
      %v2664 = vunpack.c.l.b16 %v2656
      %v2665 = vunpack.c.l.b16 %v2657
      %v2666 = vpack.c.b16 %v2663, %v2662
      %v2667 = vpack.c.b16 %v2665, %v2664
      %v2671 = vsel %vm908, %v2653, 0
      %2673 = vmatprep.subr.bf16.mxu0 0
      %2674 = vmatpush1.bf16.msra.mxu0 %v2666
      %2675 = vmatprep.subr.bf16.mxu0 0
      %2676 = vmatpush1.bf16.msra.mxu0 %v2667
      %2677 = vmatprep.subr.bf16.mxu0 0
      %2678 = vmatpush1.bf16.msra.mxu0 0
      %2679 = vmatprep.subr.bf16.mxu0 0
      %2680 = vmatpush1.bf16.msra.mxu0 0
      %2681 = vmatprep.subr.bf16.mxu0 0
      %2682 = vmatpush1.bf16.msra.mxu0 0
      %2683 = vmatprep.subr.bf16.mxu0 0
      %2684 = vmatpush1.bf16.msra.mxu0 0
      %2685 = vmatprep.subr.bf16.mxu0 0
      %2686 = vmatpush1.bf16.msra.mxu0 0
      %2687 = vmatprep.subr.bf16.mxu0 0
      %2688 = vmatpush1.bf16.msra.mxu0 0
      %2689 = vmatprep.subr.bf16.mxu0 0
      %2690 = vmatpush1.bf16.msra.mxu0 0
      %2691 = vmatprep.subr.bf16.mxu0 0
      %2692 = vmatpush1.bf16.msra.mxu0 0
      %2693 = vmatprep.subr.bf16.mxu0 0
      %2694 = vmatpush1.bf16.msra.mxu0 0
      %2695 = vmatprep.subr.bf16.mxu0 0
      %2696 = vmatpush1.bf16.msra.mxu0 0
      %2697 = vmatprep.subr.bf16.mxu0 0
      %2698 = vmatpush1.bf16.msra.mxu0 0
      %2699 = vmatprep.subr.bf16.mxu0 0
      %2700 = vmatpush1.bf16.msra.mxu0 0
      %2701 = vmatprep.subr.bf16.mxu0 0
      %2702 = vmatpush1.bf16.msra.mxu0 0
      %2703 = vmatprep.subr.bf16.mxu0 0
      %2704 = vmatpush1.bf16.msra.mxu0 0
      %2705 = vmatprep.mubr.bf16.mxu0 0
      %2706 = vmatmul.mubr.bf16.gmra.mrb[0].mxu0 %v2671
      %v2707 = vpop.f32.mrb[0].mxu0
      %v2708 = vadd.f32 0.0, %v2707
      %v2709 = vpop.f32.mrb[0].mxu0
      %v2710 = vpop.f32.mrb[0].mxu0
      %v2711 = vpop.f32.mrb[0].mxu0
      %2712 = vdwg.mxu0
      %v2713 = vmul.f32 %v2708, 0.5
      %v2714 = vmul.f32 %v2708, 0.70710677
      %v2715 = verf.f32.pop %v2714
      %v2716 = vadd.f32 %v2715, 1.0
      %v2717 = vmul.f32 %v2713, %v2716
      %v2718 = vpack.c.bf16 %v2717, %v2717
      %v2719 = vld [vmem:[%s804] sm:$0xf]
      %v2720 = vld [vmem:[%s804 + $0x4] sm:$0xf]
      %v2721 = vld [vmem:[%s804 + $0x8] sm:$0xf]
      %v2722 = vld [vmem:[%s804 + $0xc] sm:$0xf]
      %v2723 = vld [vmem:[%s804 + $0x10] sm:$0xf]
      %v2724 = vld [vmem:[%s804 + $0x14] sm:$0xf]
      %v2725 = vld [vmem:[%s804 + $0x18] sm:$0xf]
      %v2726 = vld [vmem:[%s804 + $0x1c] sm:$0xf]
      %v2727 = vld [vmem:[%s804 + $0x20] sm:$0xf]
      %v2728 = vld [vmem:[%s804 + $0x24] sm:$0xf]
      %v2729 = vld [vmem:[%s804 + $0x28] sm:$0xf]
      %v2730 = vld [vmem:[%s804 + $0x2c] sm:$0xf]
      %v2731 = vld [vmem:[%s804 + $0x30] sm:$0xf]
      %v2732 = vld [vmem:[%s804 + $0x34] sm:$0xf]
      %v2733 = vld [vmem:[%s804 + $0x38] sm:$0xf]
      %v2734 = vld [vmem:[%s804 + $0x3c] sm:$0xf]
      %v2751 = vunpack.c.l.b16 %v2719
      %v2752 = vunpack.c.l.b16 %v2720
      %v2753 = vunpack.c.l.b16 %v2721
      %v2754 = vunpack.c.l.b16 %v2722
      %v2755 = vunpack.c.l.b16 %v2723
      %v2756 = vunpack.c.l.b16 %v2724
      %v2757 = vunpack.c.l.b16 %v2725
      %v2758 = vunpack.c.l.b16 %v2726
      %v2759 = vunpack.c.l.b16 %v2727
      %v2760 = vunpack.c.l.b16 %v2728
      %v2761 = vunpack.c.l.b16 %v2729
      %v2762 = vunpack.c.l.b16 %v2730
      %v2763 = vunpack.c.l.b16 %v2731
      %v2764 = vunpack.c.l.b16 %v2732
      %v2765 = vunpack.c.l.b16 %v2733
      %v2766 = vunpack.c.l.b16 %v2734
      %v2767 = vpack.c.b16 %v2752, %v2751
      %v2768 = vpack.c.b16 %v2754, %v2753
      %v2769 = vpack.c.b16 %v2756, %v2755
      %v2770 = vpack.c.b16 %v2758, %v2757
      %v2771 = vpack.c.b16 %v2760, %v2759
      %v2772 = vpack.c.b16 %v2762, %v2761
      %v2773 = vpack.c.b16 %v2764, %v2763
      %v2774 = vpack.c.b16 %v2766, %v2765
      %2783 = vmatprep.subr.bf16.mxu0 0
      %2784 = vmatpush1.bf16.msra.mxu0 %v2767
      %2785 = vmatprep.subr.bf16.mxu0 0
      %2786 = vmatpush1.bf16.msra.mxu0 %v2768
      %2787 = vmatprep.subr.bf16.mxu0 0
      %2788 = vmatpush1.bf16.msra.mxu0 %v2769
      %2789 = vmatprep.subr.bf16.mxu0 0
      %2790 = vmatpush1.bf16.msra.mxu0 %v2770
      %2791 = vmatprep.subr.bf16.mxu0 0
      %2792 = vmatpush1.bf16.msra.mxu0 %v2771
      %2793 = vmatprep.subr.bf16.mxu0 0
      %2794 = vmatpush1.bf16.msra.mxu0 %v2772
      %2795 = vmatprep.subr.bf16.mxu0 0
      %2796 = vmatpush1.bf16.msra.mxu0 %v2773
      %2797 = vmatprep.subr.bf16.mxu0 0
      %2798 = vmatpush1.bf16.msra.mxu0 %v2774
      %2799 = vmatprep.subr.bf16.mxu0 0
      %2800 = vmatpush1.bf16.msra.mxu0 0
      %2801 = vmatprep.subr.bf16.mxu0 0
      %2802 = vmatpush1.bf16.msra.mxu0 0
      %2803 = vmatprep.subr.bf16.mxu0 0
      %2804 = vmatpush1.bf16.msra.mxu0 0
      %2805 = vmatprep.subr.bf16.mxu0 0
      %2806 = vmatpush1.bf16.msra.mxu0 0
      %2807 = vmatprep.subr.bf16.mxu0 0
      %2808 = vmatpush1.bf16.msra.mxu0 0
      %2809 = vmatprep.subr.bf16.mxu0 0
      %2810 = vmatpush1.bf16.msra.mxu0 0
      %2811 = vmatprep.subr.bf16.mxu0 0
      %2812 = vmatpush1.bf16.msra.mxu0 0
      %2813 = vmatprep.subr.bf16.mxu0 0
      %2814 = vmatpush1.bf16.msra.mxu0 0
      %2815 = vmatprep.mubr.bf16.mxu0 0
      %2816 = vmatmul.mubr.bf16.gmra.mrb[0].mxu0 %v2718
      %v2817 = vpop.f32.mrb[0].mxu0
      %v2818 = vadd.f32 0.0, %v2817
      %v2819 = vpop.f32.mrb[0].mxu0
      %v2820 = vpop.f32.mrb[0].mxu0
      %v2821 = vpop.f32.mrb[0].mxu0
      %2822 = vdwg.mxu0
      %v2823 = vadd.f32 %v2631, %v2818
      %2824 = vst.msk [vmem:[#allocation2] sm:$0xff] %vm908, %v2823
      %p2825 = scmp.eq.s32.totalorder %s35, 1
      // Predicated region
      $region101: #{ts_transformer_forward.3} parent=95 // pred_check
        %p2826 = pneg %p2825
      $region102: #{ts_transformer_forward.3} parent=95 // pred_check_branch
        %2828 = sbr.rel (%p2826) target = $region104
      $region103: #{ts_transformer_forward.3} parent=95 // pred_region
        %v2829 = vld [vmem:[%s16] sm:$0x1]
        %v2830 = vsel %vm908, %v2823, 0.0
        %2831 = vadd.xlane.f32.xlu0 %v2830
        %v2832 = vpop.xlane.xlu0 %2831
        %v2833 = vmul.f32 %v2832, %v912
        %v2834 = vsub.f32 %v2823, %v2833
        %v2835 = vmul.f32 %v2834, %v2834
        %v2836 = vsel %vm908, %v2835, 0.0
        %2837 = vadd.xlane.f32.xlu0 %v2836
        %v2838 = vpop.xlane.xlu0 %2837
        %v2839 = vmul.f32 %v2838, %v912
        %v2840 = vadd.f32 %v2839, 1e-05
        %v2841 = vrsqrt.pop %v2840
        %v2842 = vmul.f32 %v2834, %v2841
        %v2844 = vlaneseq
        %v2845 = vshrl.u32 %v2844, 7
        %v2846 = vsub.s32 0, %v2845
        %v2847 = vrot.slane %v2829, %v2846
        %v2849 = vmul.f32 %v2842, %v2847
        %v2850 = vld [vmem:[%s17] sm:$0xff]
        %v2851 = vld [vmem:[%s17 + $0x8] sm:$0xff]
        %v2852 = vld [vmem:[%s17 + $0x10] sm:$0xff]
        %v2853 = vld [vmem:[%s17 + $0x18] sm:$0xff]
        %v2854 = vld [vmem:[%s18] sm:$0x1]
        %v2856 = vlaneseq
        %v2857 = vshrl.u32 %v2856, 7
        %v2858 = vsub.s32 0, %v2857
        %v2859 = vrot.slane %v2854, %v2858
        %v2862 = vsel %vm908, %v2849, 0
        %2864 = vmatprep.subr.mxu0 0.0
        %2865 = vmatpush1.msra.mxu0 %v2850
        %2866 = vmatprep.subr.mxu0 0.0
        %2867 = vmatpush1.msra.mxu0 %v2851
        %2868 = vmatprep.subr.mxu0 0.0
        %2869 = vmatpush1.msra.mxu0 %v2852
        %2870 = vmatprep.subr.mxu0 0.0
        %2871 = vmatpush1.msra.mxu0 %v2853
        %2872 = vmatprep.subr.mxu0 0.0
        %2873 = vmatpush1.msra.mxu0 0.0
        %2874 = vmatprep.subr.mxu0 0.0
        %2875 = vmatpush1.msra.mxu0 0.0
        %2876 = vmatprep.subr.mxu0 0.0
        %2877 = vmatpush1.msra.mxu0 0.0
        %2878 = vmatprep.subr.mxu0 0.0
        %2879 = vmatpush1.msra.mxu0 0.0
        %2880 = vmatprep.subr.mxu0 0.0
        %2881 = vmatpush1.msra.mxu0 0.0
        %2882 = vmatprep.subr.mxu0 0.0
        %2883 = vmatpush1.msra.mxu0 0.0
        %2884 = vmatprep.subr.mxu0 0.0
        %2885 = vmatpush1.msra.mxu0 0.0
        %2886 = vmatprep.subr.mxu0 0.0
        %2887 = vmatpush1.msra.mxu0 0.0
        %2888 = vmatprep.subr.mxu0 0.0
        %2889 = vmatpush1.msra.mxu0 0.0
        %2890 = vmatprep.subr.mxu0 0.0
        %2891 = vmatpush1.msra.mxu0 0.0
        %2892 = vmatprep.subr.mxu0 0.0
        %2893 = vmatpush1.msra.mxu0 0.0
        %2894 = vmatprep.subr.mxu0 0.0
        %2895 = vmatpush1.msra.mxu0 0.0
        %2896 = vmatprep.subr.mxu0 0.0
        %2897 = vmatpush1.msra.mxu0 0.0
        %2898 = vmatprep.subr.mxu0 0.0
        %2899 = vmatpush1.msra.mxu0 0.0
        %2900 = vmatprep.subr.mxu0 0.0
        %2901 = vmatpush1.msra.mxu0 0.0
        %2902 = vmatprep.subr.mxu0 0.0
        %2903 = vmatpush1.msra.mxu0 0.0
        %2904 = vmatprep.subr.mxu0 0.0
        %2905 = vmatpush1.msra.mxu0 0.0
        %2906 = vmatprep.subr.mxu0 0.0
        %2907 = vmatpush1.msra.mxu0 0.0
        %2908 = vmatprep.subr.mxu0 0.0
        %2909 = vmatpush1.msra.mxu0 0.0
        %2910 = vmatprep.subr.mxu0 0.0
        %2911 = vmatpush1.msra.mxu0 0.0
        %2912 = vmatprep.subr.mxu0 0.0
        %2913 = vmatpush1.msra.mxu0 0.0
        %2914 = vmatprep.subr.mxu0 0.0
        %2915 = vmatpush1.msra.mxu0 0.0
        %2916 = vmatprep.subr.mxu0 0.0
        %2917 = vmatpush1.msra.mxu0 0.0
        %2918 = vmatprep.subr.mxu0 0.0
        %2919 = vmatpush1.msra.mxu0 0.0
        %2920 = vmatprep.subr.mxu0 0.0
        %2921 = vmatpush1.msra.mxu0 0.0
        %2922 = vmatprep.subr.mxu0 0.0
        %2923 = vmatpush1.msra.mxu0 0.0
        %2924 = vmatprep.subr.mxu0 0.0
        %2925 = vmatpush1.msra.mxu0 0.0
        %2926 = vmatprep.subr.mxu0 0.0
        %2927 = vmatpush1.msra.mxu0 0.0
        %2928 = vmatprep.mubr.f32.mxu0 0.0
        %2929 = vmatmul.mubr.f32.gmra.mrb[0].mxu0 %v2862
        %v2930 = vpop.f32.mrb[0].mxu0
        %v2931 = vadd.f32 %v2859, %v2930
        %v2932 = vpop.f32.mrb[0].mxu0
        %2933 = vdwg.mxu0
        %2934 = vst [vmem:[%s808] sm:$0xff] %v2931
      $region104: #{ts_transformer_forward.3} parent=95 // pred_fallthru
        _
      %p2935 = scmp.lt.s32.totalorder %s34, 1
      %s2936 = scalar_select %p2935, %s34, 1
      %s2937 = smul.addr %s2936, 8
      %s2938 = scalar_lea.vmem %s19, %s2937
      // Predicated region
      $region105: #{ts_transformer_forward.3} parent=95 // pred_check
        %p2939 = pneg %p519
      $region106: #{ts_transformer_forward.3} parent=95 // pred_check_branch
        %2941 = sbr.rel (%p2939) target = $region108
      $region107: #{ts_transformer_forward.3} parent=95 // pred_region
        _
      $region108: #{ts_transformer_forward.3} parent=95 // pred_fallthru
        _
    $region96: #{ts_transformer_forward.3} parent=5 // pred_fallthru
      _
    %p2942 = scmp.le.s32.totalorder 2, %s25
    // Predicated region
    $region109: #{ts_transformer_forward.3} parent=5 // pred_check
      %p2943 = pneg %p2942
    $region110: #{ts_transformer_forward.3} parent=5 // pred_check_branch
      %2945 = sbr.rel (%p2943) target = $region112
    $region111: #{ts_transformer_forward.3} parent=5 // pred_region
      %s2946 = ssub.s32 %s25, 2
      // Predicated region
      $region113: #{ts_transformer_forward.3} parent=111 // pred_check
        %p2947 = pneg %p525
      $region114: #{ts_transformer_forward.3} parent=111 // pred_check_branch
        %2949 = sbr.rel (%p2947) target = $region116
      $region115: #{ts_transformer_forward.3} parent=111 // pred_region
        %p2950 = scmp.lt.s32.totalorder %s36, 1
        %s2951 = scalar_select %p2950, %s36, 1
        %s2952 = smul.addr %s2951, 8
        %s2953 = scalar_lea.vmem %s19, %s2952
      $region116: #{ts_transformer_forward.3} parent=111 // pred_fallthru
        _
    $region112: #{ts_transformer_forward.3} parent=5 // pred_fallthru
      _
  $region6: #{ts_transformer_forward.3} parent=0 // loop_footer
    %s29 = sadd.s32 1, %s25
  $region7: #{ts_transformer_forward.3} parent=0 // loop_footer_branch
    %24 = sbr.rel target = $region3
  $region8: #{ts_transformer_forward.3} parent=0 // loop_exit
    _

</llo_original>
